<compile_context>
chip_gen: v7x
topology: tpu7x:2x2x1
jax: 0.10.0
libtpu: 0.0.40
codegen_flags: <defaults>
</compile_context>

<pallas_src>
import jax
import jax.numpy as jnp
from jax import lax
from jax.experimental import pallas as pl
from jax.experimental.pallas import tpu as pltpu

# ---- small synthetic CLIP-text config (stand-in for pubmed-clip-vit-base-patch32) ----
VOCAB = 64
MAX_LEN = 8          # stands in for max_length=77
D_MODEL = 128        # lane-dense hidden size (real model: 512)
N_HEADS = 4
HEAD_DIM = D_MODEL // N_HEADS
D_MLP = 4 * D_MODEL
N_LAYERS = 2
BT = 2               # sequences (batch tile) processed per grid step
EPS = 1e-5

# TODO(synk): the HF AutoTokenizer (string -> input_ids) has no Pallas equivalent;
# this implementation consumes pre-tokenized, max_length-padded input_ids directly.


def _ln(x, g, b):
    """LayerNorm over the last axis, f32 math (CLIP uses eps=1e-5)."""
    mu = jnp.mean(x, axis=-1, keepdims=True)
    var = jnp.mean((x - mu) ** 2, axis=-1, keepdims=True)
    return (x - mu) * lax.rsqrt(var + EPS) * g + b


# --------------------------- fused Pallas kernel ---------------------------

def fused_clip_kernel(x_ref,
                      ln1_g, ln1_b,
                      wq, bq, wk, bk, wv, bv, wo, bo,
                      ln2_g, ln2_b,
                      w1, b1, w2, b2,
                      fln_g, fln_b,
                      o_ref,
                      x_acc, attn_acc):
    """One (batch-block, layer) grid step.

    x_ref    : [BT, S, D] token+position embeddings (consumed only at layer 0)
    weights  : current layer's stacked parameters (leading layer dim of size 1)
    o_ref    : [BT, S, D] output block, VMEM-resident across the layer axis
    x_acc    : [BT*S, D] f32 scratch -- layer-resident activation
    attn_acc : [BT, S, D] f32 scratch -- assembled per-head attention outputs
    """
    layer = pl.program_id(1)
    n_layers = pl.num_programs(1)

    bt, s, d = x_ref.shape
    m = bt * s
    dh = d // N_HEADS
    scale = dh ** -0.5

    @pl.when(layer == 0)
    def _():
        x_acc[...] = x_ref[...].reshape(m, d)

    x = x_acc[...]                                           # [M, D] f32

    # ---- self-attention sub-block ----
    h = _ln(x, ln1_g[0], ln1_b[0])
    hb = h.astype(jnp.bfloat16)
    q = jnp.dot(hb, wq[0], preferred_element_type=jnp.float32) + bq[0]
    k = jnp.dot(hb, wk[0], preferred_element_type=jnp.float32) + bk[0]
    v = jnp.dot(hb, wv[0], preferred_element_type=jnp.float32) + bv[0]

    q3 = (q * scale).reshape(bt, s, d).astype(jnp.bfloat16)  # [BT, S, D]
    k3 = k.reshape(bt, s, d).astype(jnp.bfloat16)
    v3 = v.reshape(bt, s, d).astype(jnp.bfloat16)

    # Causal mask only (the reference forward passes input_ids without an
    # attention_mask, so HF's CLIPTextModel also applies only the causal mask).
    # Computed once per grid step and shared by all heads.
    row = lax.broadcasted_iota(jnp.int32, (s, s), 0)
    col = lax.broadcasted_iota(jnp.int32, (s, s), 1)
    causal = (col <= row)[None, :, :]                        # [1, S, S] bool

    for hd in range(N_HEADS):
        lo = hd * dh
        qh = q3[:, :, lo:lo + dh]                            # [BT, S, Dh] bf16
        kh = k3[:, :, lo:lo + dh]
        vh = v3[:, :, lo:lo + dh]
        # scores batched over the BT sequences: [BT, S, S], f32 accumulation
        sc = lax.dot_general(qh, kh, (((2,), (2,)), ((0,), (0,))),
                             preferred_element_type=jnp.float32)
        sc = jnp.where(causal, sc, -1e9)
        sc = sc - jnp.max(sc, axis=-1, keepdims=True)
        p = jnp.exp(sc)
        p = p * pl.reciprocal(jnp.sum(p, axis=-1, keepdims=True), approx=True)
        oh = lax.dot_general(p.astype(jnp.bfloat16), vh,
                             (((2,), (1,)), ((0,), (0,))),
                             preferred_element_type=jnp.float32)   # [BT, S, Dh]
        attn_acc[:, :, lo:lo + dh] = oh                      # no concatenate

    attn = attn_acc[...].reshape(m, d).astype(jnp.bfloat16)
    attn = jnp.dot(attn, wo[0], preferred_element_type=jnp.float32) + bo[0]
    x = x + attn

    # ---- MLP sub-block (quick_gelu, as in CLIP) ----
    h2 = _ln(x, ln2_g[0], ln2_b[0])
    f = jnp.dot(h2.astype(jnp.bfloat16), w1[0],
                preferred_element_type=jnp.float32) + b1[0]
    f = f * jax.nn.sigmoid(1.702 * f)                        # quick_gelu (f32)
    mlp = jnp.dot(f.astype(jnp.bfloat16), w2[0],
                  preferred_element_type=jnp.float32) + b2[0]
    x = x + mlp

    x_acc[...] = x

    # Final LayerNorm fused into the last layer; the output block is written once
    # per batch block (it stays VMEM-resident across the "arbitrary" layer axis).
    @pl.when(layer == n_layers - 1)
    def _():
        y = _ln(x, fln_g[...], fln_b[...])
        o_ref[...] = y.reshape(bt, s, d).astype(o_ref.dtype)


# --------------------------- pallas_call wrapper ---------------------------

def clip_text_transformer(x_emb, params):
    """Run all encoder layers + final LN in a single fused pallas_call."""
    B, S, D = x_emb.shape
    assert B % BT == 0 and D == D_MODEL
    nb = B // BT

    layer_weights = [params[n] for n in (
        "ln1_g", "ln1_b",
        "wq", "bq", "wk", "bk", "wv", "bv", "wo", "bo",
        "ln2_g", "ln2_b",
        "w1", "b1", "w2", "b2")]
    final_ln = [params["final_ln_g"], params["final_ln_b"]]

    def x_map(b, l):
        return (b, 0, 0)

    def layer_map(b, l):
        return (l, 0, 0)

    def const_map(b, l):
        return (0, 0)

    in_specs = ([pl.BlockSpec((BT, S, D), x_map)]
                + [pl.BlockSpec((1,) + w.shape[1:], layer_map) for w in layer_weights]
                + [pl.BlockSpec(w.shape, const_map) for w in final_ln])

    return pl.pallas_call(
        fused_clip_kernel,
        out_shape=jax.ShapeDtypeStruct((B, S, D), jnp.float32),
        grid=(nb, N_LAYERS),
        in_specs=in_specs,
        out_specs=pl.BlockSpec((BT, S, D), x_map),
        scratch_shapes=[pltpu.VMEM((BT * S, D), jnp.float32),
                        pltpu.VMEM((BT, S, D), jnp.float32)],
        compiler_params=pltpu.CompilerParams(
            dimension_semantics=("parallel", "arbitrary"),
            # Raise the scoped VMEM limit so double-buffered per-layer weight
            # streaming still fits when scaled to real CLIP sizes (bf16 weights).
            vmem_limit_bytes=32 * 1024 * 1024),
    )(x_emb, *layer_weights, *final_ln)


# --------------------------- parameters & forward ---------------------------

def init_params(key):
    ks = jax.random.split(key, 14)

    def nrm(k, shape, dtype=jnp.float32):
        return (0.02 * jax.random.normal(k, shape, jnp.float32)).astype(dtype)

    return {
        # token / position embeddings (gathered in glue JAX; frozen parameters)
        "tok_emb": nrm(ks[0], (VOCAB, D_MODEL)),
        "pos_emb": nrm(ks[1], (MAX_LEN, D_MODEL)),
        # stacked per-layer parameters [L, ...]: matmul weights in bf16 (halved
        # weight DMA, 2x MXU throughput); biases / LayerNorm params stay f32.
        "ln1_g": jnp.ones((N_LAYERS, 1, D_MODEL), jnp.float32),
        "ln1_b": jnp.zeros((N_LAYERS, 1, D_MODEL), jnp.float32),
        "wq": nrm(ks[2], (N_LAYERS, D_MODEL, D_MODEL), jnp.bfloat16),
        "bq": nrm(ks[3], (N_LAYERS, 1, D_MODEL)),
        "wk": nrm(ks[4], (N_LAYERS, D_MODEL, D_MODEL), jnp.bfloat16),
        "bk": nrm(ks[5], (N_LAYERS, 1, D_MODEL)),
        "wv": nrm(ks[6], (N_LAYERS, D_MODEL, D_MODEL), jnp.bfloat16),
        "bv": nrm(ks[7], (N_LAYERS, 1, D_MODEL)),
        "wo": nrm(ks[8], (N_LAYERS, D_MODEL, D_MODEL), jnp.bfloat16),
        "bo": nrm(ks[9], (N_LAYERS, 1, D_MODEL)),
        "ln2_g": jnp.ones((N_LAYERS, 1, D_MODEL), jnp.float32),
        "ln2_b": jnp.zeros((N_LAYERS, 1, D_MODEL), jnp.float32),
        "w1": nrm(ks[10], (N_LAYERS, D_MODEL, D_MLP), jnp.bfloat16),
        "b1": nrm(ks[11], (N_LAYERS, 1, D_MLP)),
        "w2": nrm(ks[12], (N_LAYERS, D_MLP, D_MODEL), jnp.bfloat16),
        "b2": nrm(ks[13], (N_LAYERS, 1, D_MODEL)),
        "final_ln_g": jnp.ones((1, D_MODEL), jnp.float32),
        "final_ln_b": jnp.zeros((1, D_MODEL), jnp.float32),
    }


def pubmed_clip_embed(input_ids, params):
    """Equivalent of PubMedClipEmbedder.forward on pre-tokenized ids.

    Returns last_hidden_state z of shape [B, S, D_MODEL].
    """
    B, S = input_ids.shape
    # embedding gather + positional add (glue JAX; frozen parameters)
    x = params["tok_emb"][input_ids] + params["pos_emb"][None, :S, :]
    return clip_text_transformer(x.astype(jnp.float32), params)


if __name__ == "__main__":
    key = jax.random.PRNGKey(0)
    k_ids, k_params = jax.random.split(key)

    B = 4                    # multiple of BT (and even, so both v7x TCs get work)
    input_ids = jax.random.randint(k_ids, (B, MAX_LEN), 0, VOCAB, dtype=jnp.int32)
    params = init_params(k_params)

    z = jax.jit(pubmed_clip_embed)(input_ids, params)
    z = jax.block_until_ready(z)

    assert z.shape == (B, MAX_LEN, D_MODEL), z.shape
    assert z.dtype == jnp.float32
    assert bool(jnp.all(jnp.isfinite(z)))
    print("KERNEL_OK")
</pallas_src>

<mosaic_0001>
module attributes {stable_mosaic.version = 11 : i64} {
  func.func @fused_clip_kernel(%arg0: i32, %arg1: i32, %arg2: memref<2x8x128xf32, #tpu.memory_space<vmem>>, %arg3: memref<1x1x128xf32, #tpu.memory_space<vmem>>, %arg4: memref<1x1x128xf32, #tpu.memory_space<vmem>>, %arg5: memref<1x128x128xbf16, #tpu.memory_space<vmem>>, %arg6: memref<1x1x128xf32, #tpu.memory_space<vmem>>, %arg7: memref<1x128x128xbf16, #tpu.memory_space<vmem>>, %arg8: memref<1x1x128xf32, #tpu.memory_space<vmem>>, %arg9: memref<1x128x128xbf16, #tpu.memory_space<vmem>>, %arg10: memref<1x1x128xf32, #tpu.memory_space<vmem>>, %arg11: memref<1x128x128xbf16, #tpu.memory_space<vmem>>, %arg12: memref<1x1x128xf32, #tpu.memory_space<vmem>>, %arg13: memref<1x1x128xf32, #tpu.memory_space<vmem>>, %arg14: memref<1x1x128xf32, #tpu.memory_space<vmem>>, %arg15: memref<1x128x512xbf16, #tpu.memory_space<vmem>>, %arg16: memref<1x1x512xf32, #tpu.memory_space<vmem>>, %arg17: memref<1x512x128xbf16, #tpu.memory_space<vmem>>, %arg18: memref<1x1x128xf32, #tpu.memory_space<vmem>>, %arg19: memref<1x128xf32, #tpu.memory_space<vmem>>, %arg20: memref<1x128xf32, #tpu.memory_space<vmem>>, %arg21: memref<2x8x128xf32, #tpu.memory_space<vmem>>, %arg22: memref<16x128xf32, #tpu.memory_space<vmem>>, %arg23: memref<2x8x128xf32, #tpu.memory_space<vmem>>) attributes {dimension_semantics = [#tpu.dimension_semantics<parallel>, #tpu.dimension_semantics<arbitrary>], iteration_bounds = array<i64: 2, 2>, scalar_prefetch = 0 : i64, scratch_operands = 2 : i64, tpu.core_type = #tpu.core_type<tc>, window_params = [{transform_indices = @transform_0, window_bounds = array<i64: 2, 8, 128>}, {transform_indices = @transform_1, window_bounds = array<i64: 1, 1, 128>}, {transform_indices = @transform_2, window_bounds = array<i64: 1, 1, 128>}, {transform_indices = @transform_3, window_bounds = array<i64: 1, 128, 128>}, {transform_indices = @transform_4, window_bounds = array<i64: 1, 1, 128>}, {transform_indices = @transform_5, window_bounds = array<i64: 1, 128, 128>}, {transform_indices = @transform_6, window_bounds = array<i64: 1, 1, 128>}, {transform_indices = @transform_7, window_bounds = array<i64: 1, 128, 128>}, {transform_indices = @transform_8, window_bounds = array<i64: 1, 1, 128>}, {transform_indices = @transform_9, window_bounds = array<i64: 1, 128, 128>}, {transform_indices = @transform_10, window_bounds = array<i64: 1, 1, 128>}, {transform_indices = @transform_11, window_bounds = array<i64: 1, 1, 128>}, {transform_indices = @transform_12, window_bounds = array<i64: 1, 1, 128>}, {transform_indices = @transform_13, window_bounds = array<i64: 1, 128, 512>}, {transform_indices = @transform_14, window_bounds = array<i64: 1, 1, 512>}, {transform_indices = @transform_15, window_bounds = array<i64: 1, 512, 128>}, {transform_indices = @transform_16, window_bounds = array<i64: 1, 1, 128>}, {pipeline_mode = #tpu.pipeline_mode<synchronous>, transform_indices = @transform_17, window_bounds = array<i64: 1, 128>}, {pipeline_mode = #tpu.pipeline_mode<synchronous>, transform_indices = @transform_18, window_bounds = array<i64: 1, 128>}, {transform_indices = @transform_19, window_bounds = array<i64: 2, 8, 128>}]} {
    %c0_i32 = arith.constant 0 : i32
    %0 = arith.cmpi eq, %arg1, %c0_i32 : i32
    %1 = arith.extui %0 : i1 to i32
    %c0_i32_0 = arith.constant 0 : i32
    %2 = arith.cmpi ne, %1, %c0_i32_0 : i32
    scf.if %2 {
      %c0_103 = arith.constant 0 : index
      %c0_104 = arith.constant 0 : index
      %c0_105 = arith.constant 0 : index
      %214 = vector.load %arg2[%c0_103, %c0_104, %c0_105] : memref<2x8x128xf32, #tpu.memory_space<vmem>>, vector<2x8x128xf32>
      %215 = vector.shape_cast %214 : vector<2x8x128xf32> to vector<16x128xf32>
      %c0_106 = arith.constant 0 : index
      %c0_107 = arith.constant 0 : index
      %216 = vector.load %arg22[%c0_106, %c0_107] : memref<16x128xf32, #tpu.memory_space<vmem>>, vector<16x128xf32>
      tpu.vector_store %arg22[%c0_106, %c0_107], %215 {strides = array<i32>} : memref<16x128xf32, #tpu.memory_space<vmem>>, vector<16x128xf32>,
    } else {
    }
    %c0 = arith.constant 0 : index
    %c0_1 = arith.constant 0 : index
    %3 = vector.load %arg22[%c0, %c0_1] : memref<16x128xf32, #tpu.memory_space<vmem>>, vector<16x128xf32>
    %c0_2 = arith.constant 0 : index
    %c0_3 = arith.constant 0 : index
    %c0_4 = arith.constant 0 : index
    %4 = vector.load %arg3[%c0_2, %c0_3, %c0_4] : memref<1x1x128xf32, #tpu.memory_space<vmem>>, vector<1x1x128xf32>
    %5 = vector.shape_cast %4 : vector<1x1x128xf32> to vector<1x128xf32>
    %c0_5 = arith.constant 0 : index
    %c0_6 = arith.constant 0 : index
    %c0_7 = arith.constant 0 : index
    %6 = vector.load %arg4[%c0_5, %c0_6, %c0_7] : memref<1x1x128xf32, #tpu.memory_space<vmem>>, vector<1x1x128xf32>
    %7 = vector.shape_cast %6 : vector<1x1x128xf32> to vector<1x128xf32>
    %cst = arith.constant dense<0.000000e+00> : vector<16xf32>
    %8 = vector.multi_reduction <add>, %3, %cst [1] : vector<16x128xf32> to vector<16xf32>
    %9 = vector.shape_cast %8 : vector<16xf32> to vector<16x1xf32>
    %cst_8 = arith.constant 1.280000e+02 : f32
    %10 = vector.broadcast %cst_8 : f32 to vector<16x1xf32>
    %11 = arith.divf %9, %10 : vector<16x1xf32>
    %12 = vector.broadcast %11 : vector<16x1xf32> to vector<16x128xf32>
    %13 = arith.subf %3, %12 : vector<16x128xf32>
    %14 = arith.mulf %13, %13 : vector<16x128xf32>
    %cst_9 = arith.constant dense<0.000000e+00> : vector<16xf32>
    %15 = vector.multi_reduction <add>, %14, %cst_9 [1] : vector<16x128xf32> to vector<16xf32>
    %16 = vector.shape_cast %15 : vector<16xf32> to vector<16x1xf32>
    %cst_10 = arith.constant 1.280000e+02 : f32
    %17 = vector.broadcast %cst_10 : f32 to vector<16x1xf32>
    %18 = arith.divf %16, %17 : vector<16x1xf32>
    %19 = vector.broadcast %11 : vector<16x1xf32> to vector<16x128xf32>
    %20 = arith.subf %3, %19 : vector<16x128xf32>
    %cst_11 = arith.constant 9.99999974E-6 : f32
    %21 = vector.broadcast %cst_11 : f32 to vector<16x1xf32>
    %22 = arith.addf %18, %21 : vector<16x1xf32>
    %23 = math.rsqrt %22 : vector<16x1xf32>
    %24 = vector.broadcast %23 : vector<16x1xf32> to vector<16x128xf32>
    %25 = arith.mulf %20, %24 : vector<16x128xf32>
    %26 = vector.broadcast %5 : vector<1x128xf32> to vector<16x128xf32>
    %27 = arith.mulf %25, %26 : vector<16x128xf32>
    %28 = vector.broadcast %7 : vector<1x128xf32> to vector<16x128xf32>
    %29 = arith.addf %27, %28 : vector<16x128xf32>
    %30 = arith.truncf %29 : vector<16x128xf32> to vector<16x128xbf16>
    %c0_12 = arith.constant 0 : index
    %c0_13 = arith.constant 0 : index
    %c0_14 = arith.constant 0 : index
    %31 = vector.load %arg5[%c0_12, %c0_13, %c0_14] : memref<1x128x128xbf16, #tpu.memory_space<vmem>>, vector<1x128x128xbf16>
    %32 = vector.shape_cast %31 : vector<1x128x128xbf16> to vector<128x128xbf16>
    %cst_15 = arith.constant dense<0.000000e+00> : vector<16x128xf32>
    %33 = tpu.matmul %30, %32, %cst_15 {dimension_numbers = #tpu.dot_dimension_numbers<[1], [0], [0], [1], [0, 0, 1, 1], [], []>} : vector<16x128xbf16>, vector<128x128xbf16>, vector<16x128xf32> -> vector<16x128xf32>
    %c0_16 = arith.constant 0 : index
    %c0_17 = arith.constant 0 : index
    %c0_18 = arith.constant 0 : index
    %34 = vector.load %arg6[%c0_16, %c0_17, %c0_18] : memref<1x1x128xf32, #tpu.memory_space<vmem>>, vector<1x1x128xf32>
    %35 = vector.shape_cast %34 : vector<1x1x128xf32> to vector<1x128xf32>
    %36 = vector.broadcast %35 : vector<1x128xf32> to vector<16x128xf32>
    %37 = arith.addf %33, %36 : vector<16x128xf32>
    %c0_19 = arith.constant 0 : index
    %c0_20 = arith.constant 0 : index
    %c0_21 = arith.constant 0 : index
    %38 = vector.load %arg7[%c0_19, %c0_20, %c0_21] : memref<1x128x128xbf16, #tpu.memory_space<vmem>>, vector<1x128x128xbf16>
    %39 = vector.shape_cast %38 : vector<1x128x128xbf16> to vector<128x128xbf16>
    %cst_22 = arith.constant dense<0.000000e+00> : vector<16x128xf32>
    %40 = tpu.matmul %30, %39, %cst_22 {dimension_numbers = #tpu.dot_dimension_numbers<[1], [0], [0], [1], [0, 0, 1, 1], [], []>} : vector<16x128xbf16>, vector<128x128xbf16>, vector<16x128xf32> -> vector<16x128xf32>
    %c0_23 = arith.constant 0 : index
    %c0_24 = arith.constant 0 : index
    %c0_25 = arith.constant 0 : index
    %41 = vector.load %arg8[%c0_23, %c0_24, %c0_25] : memref<1x1x128xf32, #tpu.memory_space<vmem>>, vector<1x1x128xf32>
    %42 = vector.shape_cast %41 : vector<1x1x128xf32> to vector<1x128xf32>
    %43 = vector.broadcast %42 : vector<1x128xf32> to vector<16x128xf32>
    %44 = arith.addf %40, %43 : vector<16x128xf32>
    %c0_26 = arith.constant 0 : index
    %c0_27 = arith.constant 0 : index
    %c0_28 = arith.constant 0 : index
    %45 = vector.load %arg9[%c0_26, %c0_27, %c0_28] : memref<1x128x128xbf16, #tpu.memory_space<vmem>>, vector<1x128x128xbf16>
    %46 = vector.shape_cast %45 : vector<1x128x128xbf16> to vector<128x128xbf16>
    %cst_29 = arith.constant dense<0.000000e+00> : vector<16x128xf32>
    %47 = tpu.matmul %30, %46, %cst_29 {dimension_numbers = #tpu.dot_dimension_numbers<[1], [0], [0], [1], [0, 0, 1, 1], [], []>} : vector<16x128xbf16>, vector<128x128xbf16>, vector<16x128xf32> -> vector<16x128xf32>
    %c0_30 = arith.constant 0 : index
    %c0_31 = arith.constant 0 : index
    %c0_32 = arith.constant 0 : index
    %48 = vector.load %arg10[%c0_30, %c0_31, %c0_32] : memref<1x1x128xf32, #tpu.memory_space<vmem>>, vector<1x1x128xf32>
    %49 = vector.shape_cast %48 : vector<1x1x128xf32> to vector<1x128xf32>
    %50 = vector.broadcast %49 : vector<1x128xf32> to vector<16x128xf32>
    %51 = arith.addf %47, %50 : vector<16x128xf32>
    %cst_33 = arith.constant 0.176776692 : f32
    %52 = vector.broadcast %cst_33 : f32 to vector<16x128xf32>
    %53 = arith.mulf %37, %52 : vector<16x128xf32>
    %54 = vector.shape_cast %53 : vector<16x128xf32> to vector<2x8x128xf32>
    %55 = arith.truncf %54 : vector<2x8x128xf32> to vector<2x8x128xbf16>
    %56 = vector.shape_cast %44 : vector<16x128xf32> to vector<2x8x128xf32>
    %57 = arith.truncf %56 : vector<2x8x128xf32> to vector<2x8x128xbf16>
    %58 = vector.shape_cast %51 : vector<16x128xf32> to vector<2x8x128xf32>
    %59 = arith.truncf %58 : vector<2x8x128xf32> to vector<2x8x128xbf16>
    %60 = tpu.iota {dimensions = array<i32: 0>} : vector<8x8xi32>
    %61 = tpu.iota {dimensions = array<i32: 1>} : vector<8x8xi32>
    %62 = arith.cmpi sle, %61, %60 : vector<8x8xi32>
    %63 = vector.shape_cast %62 : vector<8x8xi1> to vector<1x8x8xi1>
    %64 = vector.extract_strided_slice %55 {offsets = [0, 0, 0], sizes = [2, 8, 32], strides = [1, 1, 1]} : vector<2x8x128xbf16> to vector<2x8x32xbf16>
    %65 = vector.extract_strided_slice %57 {offsets = [0, 0, 0], sizes = [2, 8, 32], strides = [1, 1, 1]} : vector<2x8x128xbf16> to vector<2x8x32xbf16>
    %66 = vector.extract_strided_slice %59 {offsets = [0, 0, 0], sizes = [2, 8, 32], strides = [1, 1, 1]} : vector<2x8x128xbf16> to vector<2x8x32xbf16>
    %cst_34 = arith.constant dense<0.000000e+00> : vector<2x8x8xf32>
    %67 = tpu.matmul %64, %65, %cst_34 {dimension_numbers = #tpu.dot_dimension_numbers<[2], [2], [1], [1], [0, 0, 0, 1, 1, 1], [0], [0]>} : vector<2x8x32xbf16>, vector<2x8x32xbf16>, vector<2x8x8xf32> -> vector<2x8x8xf32>
    %cst_35 = arith.constant -1.000000e+09 : f32
    %68 = vector.shape_cast %63 : vector<1x8x8xi1> to vector<1x8x8xi1>
    %69 = vector.broadcast %68 : vector<1x8x8xi1> to vector<2x8x8xi1>
    %70 = vector.broadcast %cst_35 : f32 to vector<2x8x8xf32>
    %71 = arith.select %69, %67, %70 : vector<2x8x8xi1>, vector<2x8x8xf32>
    %cst_36 = arith.constant dense<0xFF800000> : vector<2x8xf32>
    %72 = vector.multi_reduction <maximumf>, %71, %cst_36 [2] : vector<2x8x8xf32> to vector<2x8xf32>
    %73 = vector.shape_cast %72 : vector<2x8xf32> to vector<2x8x1xf32>
    %74 = vector.broadcast %73 : vector<2x8x1xf32> to vector<2x8x8xf32>
    %75 = arith.subf %71, %74 : vector<2x8x8xf32>
    %76 = math.exp %75 : vector<2x8x8xf32>
    %cst_37 = arith.constant dense<0.000000e+00> : vector<2x8xf32>
    %77 = vector.multi_reduction <add>, %76, %cst_37 [2] : vector<2x8x8xf32> to vector<2x8xf32>
    %78 = vector.shape_cast %77 : vector<2x8xf32> to vector<2x8x1xf32>
    %79 = tpu.reciprocal %78 {approx = true} : vector<2x8x1xf32> -> vector<2x8x1xf32>
    %80 = vector.broadcast %79 : vector<2x8x1xf32> to vector<2x8x8xf32>
    %81 = arith.mulf %76, %80 : vector<2x8x8xf32>
    %82 = arith.truncf %81 : vector<2x8x8xf32> to vector<2x8x8xbf16>
    %cst_38 = arith.constant dense<0.000000e+00> : vector<2x8x32xf32>
    %83 = tpu.matmul %82, %66, %cst_38 {dimension_numbers = #tpu.dot_dimension_numbers<[2], [1], [1], [2], [0, 0, 0, 1, 1, 2], [0], [0]>} : vector<2x8x8xbf16>, vector<2x8x32xbf16>, vector<2x8x32xf32> -> vector<2x8x32xf32>
    %c0_39 = arith.constant 0 : index
    %c0_40 = arith.constant 0 : index
    %c0_41 = arith.constant 0 : index
    %84 = vector.load %arg23[%c0_39, %c0_40, %c0_41] : memref<2x8x128xf32, #tpu.memory_space<vmem>>, vector<2x8x32xf32>
    tpu.vector_store %arg23[%c0_39, %c0_40, %c0_41], %83 {strides = array<i32>} : memref<2x8x128xf32, #tpu.memory_space<vmem>>, vector<2x8x32xf32>,
    %85 = vector.extract_strided_slice %55 {offsets = [0, 0, 32], sizes = [2, 8, 32], strides = [1, 1, 1]} : vector<2x8x128xbf16> to vector<2x8x32xbf16>
    %86 = vector.extract_strided_slice %57 {offsets = [0, 0, 32], sizes = [2, 8, 32], strides = [1, 1, 1]} : vector<2x8x128xbf16> to vector<2x8x32xbf16>
    %87 = vector.extract_strided_slice %59 {offsets = [0, 0, 32], sizes = [2, 8, 32], strides = [1, 1, 1]} : vector<2x8x128xbf16> to vector<2x8x32xbf16>
    %cst_42 = arith.constant dense<0.000000e+00> : vector<2x8x8xf32>
    %88 = tpu.matmul %85, %86, %cst_42 {dimension_numbers = #tpu.dot_dimension_numbers<[2], [2], [1], [1], [0, 0, 0, 1, 1, 1], [0], [0]>} : vector<2x8x32xbf16>, vector<2x8x32xbf16>, vector<2x8x8xf32> -> vector<2x8x8xf32>
    %cst_43 = arith.constant -1.000000e+09 : f32
    %89 = vector.shape_cast %63 : vector<1x8x8xi1> to vector<1x8x8xi1>
    %90 = vector.broadcast %89 : vector<1x8x8xi1> to vector<2x8x8xi1>
    %91 = vector.broadcast %cst_43 : f32 to vector<2x8x8xf32>
    %92 = arith.select %90, %88, %91 : vector<2x8x8xi1>, vector<2x8x8xf32>
    %cst_44 = arith.constant dense<0xFF800000> : vector<2x8xf32>
    %93 = vector.multi_reduction <maximumf>, %92, %cst_44 [2] : vector<2x8x8xf32> to vector<2x8xf32>
    %94 = vector.shape_cast %93 : vector<2x8xf32> to vector<2x8x1xf32>
    %95 = vector.broadcast %94 : vector<2x8x1xf32> to vector<2x8x8xf32>
    %96 = arith.subf %92, %95 : vector<2x8x8xf32>
    %97 = math.exp %96 : vector<2x8x8xf32>
    %cst_45 = arith.constant dense<0.000000e+00> : vector<2x8xf32>
    %98 = vector.multi_reduction <add>, %97, %cst_45 [2] : vector<2x8x8xf32> to vector<2x8xf32>
    %99 = vector.shape_cast %98 : vector<2x8xf32> to vector<2x8x1xf32>
    %100 = tpu.reciprocal %99 {approx = true} : vector<2x8x1xf32> -> vector<2x8x1xf32>
    %101 = vector.broadcast %100 : vector<2x8x1xf32> to vector<2x8x8xf32>
    %102 = arith.mulf %97, %101 : vector<2x8x8xf32>
    %103 = arith.truncf %102 : vector<2x8x8xf32> to vector<2x8x8xbf16>
    %cst_46 = arith.constant dense<0.000000e+00> : vector<2x8x32xf32>
    %104 = tpu.matmul %103, %87, %cst_46 {dimension_numbers = #tpu.dot_dimension_numbers<[2], [1], [1], [2], [0, 0, 0, 1, 1, 2], [0], [0]>} : vector<2x8x8xbf16>, vector<2x8x32xbf16>, vector<2x8x32xf32> -> vector<2x8x32xf32>
    %c0_47 = arith.constant 0 : index
    %c0_48 = arith.constant 0 : index
    %c32 = arith.constant 32 : index
    %105 = vector.load %arg23[%c0_47, %c0_48, %c32] : memref<2x8x128xf32, #tpu.memory_space<vmem>>, vector<2x8x32xf32>
    tpu.vector_store %arg23[%c0_47, %c0_48, %c32], %104 {strides = array<i32>} : memref<2x8x128xf32, #tpu.memory_space<vmem>>, vector<2x8x32xf32>,
    %106 = vector.extract_strided_slice %55 {offsets = [0, 0, 64], sizes = [2, 8, 32], strides = [1, 1, 1]} : vector<2x8x128xbf16> to vector<2x8x32xbf16>
    %107 = vector.extract_strided_slice %57 {offsets = [0, 0, 64], sizes = [2, 8, 32], strides = [1, 1, 1]} : vector<2x8x128xbf16> to vector<2x8x32xbf16>
    %108 = vector.extract_strided_slice %59 {offsets = [0, 0, 64], sizes = [2, 8, 32], strides = [1, 1, 1]} : vector<2x8x128xbf16> to vector<2x8x32xbf16>
    %cst_49 = arith.constant dense<0.000000e+00> : vector<2x8x8xf32>
    %109 = tpu.matmul %106, %107, %cst_49 {dimension_numbers = #tpu.dot_dimension_numbers<[2], [2], [1], [1], [0, 0, 0, 1, 1, 1], [0], [0]>} : vector<2x8x32xbf16>, vector<2x8x32xbf16>, vector<2x8x8xf32> -> vector<2x8x8xf32>
    %cst_50 = arith.constant -1.000000e+09 : f32
    %110 = vector.shape_cast %63 : vector<1x8x8xi1> to vector<1x8x8xi1>
    %111 = vector.broadcast %110 : vector<1x8x8xi1> to vector<2x8x8xi1>
    %112 = vector.broadcast %cst_50 : f32 to vector<2x8x8xf32>
    %113 = arith.select %111, %109, %112 : vector<2x8x8xi1>, vector<2x8x8xf32>
    %cst_51 = arith.constant dense<0xFF800000> : vector<2x8xf32>
    %114 = vector.multi_reduction <maximumf>, %113, %cst_51 [2] : vector<2x8x8xf32> to vector<2x8xf32>
    %115 = vector.shape_cast %114 : vector<2x8xf32> to vector<2x8x1xf32>
    %116 = vector.broadcast %115 : vector<2x8x1xf32> to vector<2x8x8xf32>
    %117 = arith.subf %113, %116 : vector<2x8x8xf32>
    %118 = math.exp %117 : vector<2x8x8xf32>
    %cst_52 = arith.constant dense<0.000000e+00> : vector<2x8xf32>
    %119 = vector.multi_reduction <add>, %118, %cst_52 [2] : vector<2x8x8xf32> to vector<2x8xf32>
    %120 = vector.shape_cast %119 : vector<2x8xf32> to vector<2x8x1xf32>
    %121 = tpu.reciprocal %120 {approx = true} : vector<2x8x1xf32> -> vector<2x8x1xf32>
    %122 = vector.broadcast %121 : vector<2x8x1xf32> to vector<2x8x8xf32>
    %123 = arith.mulf %118, %122 : vector<2x8x8xf32>
    %124 = arith.truncf %123 : vector<2x8x8xf32> to vector<2x8x8xbf16>
    %cst_53 = arith.constant dense<0.000000e+00> : vector<2x8x32xf32>
    %125 = tpu.matmul %124, %108, %cst_53 {dimension_numbers = #tpu.dot_dimension_numbers<[2], [1], [1], [2], [0, 0, 0, 1, 1, 2], [0], [0]>} : vector<2x8x8xbf16>, vector<2x8x32xbf16>, vector<2x8x32xf32> -> vector<2x8x32xf32>
    %c0_54 = arith.constant 0 : index
    %c0_55 = arith.constant 0 : index
    %c64 = arith.constant 64 : index
    %126 = vector.load %arg23[%c0_54, %c0_55, %c64] : memref<2x8x128xf32, #tpu.memory_space<vmem>>, vector<2x8x32xf32>
    tpu.vector_store %arg23[%c0_54, %c0_55, %c64], %125 {strides = array<i32>} : memref<2x8x128xf32, #tpu.memory_space<vmem>>, vector<2x8x32xf32>,
    %127 = vector.extract_strided_slice %55 {offsets = [0, 0, 96], sizes = [2, 8, 32], strides = [1, 1, 1]} : vector<2x8x128xbf16> to vector<2x8x32xbf16>
    %128 = vector.extract_strided_slice %57 {offsets = [0, 0, 96], sizes = [2, 8, 32], strides = [1, 1, 1]} : vector<2x8x128xbf16> to vector<2x8x32xbf16>
    %129 = vector.extract_strided_slice %59 {offsets = [0, 0, 96], sizes = [2, 8, 32], strides = [1, 1, 1]} : vector<2x8x128xbf16> to vector<2x8x32xbf16>
    %cst_56 = arith.constant dense<0.000000e+00> : vector<2x8x8xf32>
    %130 = tpu.matmul %127, %128, %cst_56 {dimension_numbers = #tpu.dot_dimension_numbers<[2], [2], [1], [1], [0, 0, 0, 1, 1, 1], [0], [0]>} : vector<2x8x32xbf16>, vector<2x8x32xbf16>, vector<2x8x8xf32> -> vector<2x8x8xf32>
    %cst_57 = arith.constant -1.000000e+09 : f32
    %131 = vector.shape_cast %63 : vector<1x8x8xi1> to vector<1x8x8xi1>
    %132 = vector.broadcast %131 : vector<1x8x8xi1> to vector<2x8x8xi1>
    %133 = vector.broadcast %cst_57 : f32 to vector<2x8x8xf32>
    %134 = arith.select %132, %130, %133 : vector<2x8x8xi1>, vector<2x8x8xf32>
    %cst_58 = arith.constant dense<0xFF800000> : vector<2x8xf32>
    %135 = vector.multi_reduction <maximumf>, %134, %cst_58 [2] : vector<2x8x8xf32> to vector<2x8xf32>
    %136 = vector.shape_cast %135 : vector<2x8xf32> to vector<2x8x1xf32>
    %137 = vector.broadcast %136 : vector<2x8x1xf32> to vector<2x8x8xf32>
    %138 = arith.subf %134, %137 : vector<2x8x8xf32>
    %139 = math.exp %138 : vector<2x8x8xf32>
    %cst_59 = arith.constant dense<0.000000e+00> : vector<2x8xf32>
    %140 = vector.multi_reduction <add>, %139, %cst_59 [2] : vector<2x8x8xf32> to vector<2x8xf32>
    %141 = vector.shape_cast %140 : vector<2x8xf32> to vector<2x8x1xf32>
    %142 = tpu.reciprocal %141 {approx = true} : vector<2x8x1xf32> -> vector<2x8x1xf32>
    %143 = vector.broadcast %142 : vector<2x8x1xf32> to vector<2x8x8xf32>
    %144 = arith.mulf %139, %143 : vector<2x8x8xf32>
    %145 = arith.truncf %144 : vector<2x8x8xf32> to vector<2x8x8xbf16>
    %cst_60 = arith.constant dense<0.000000e+00> : vector<2x8x32xf32>
    %146 = tpu.matmul %145, %129, %cst_60 {dimension_numbers = #tpu.dot_dimension_numbers<[2], [1], [1], [2], [0, 0, 0, 1, 1, 2], [0], [0]>} : vector<2x8x8xbf16>, vector<2x8x32xbf16>, vector<2x8x32xf32> -> vector<2x8x32xf32>
    %c0_61 = arith.constant 0 : index
    %c0_62 = arith.constant 0 : index
    %c96 = arith.constant 96 : index
    %147 = vector.load %arg23[%c0_61, %c0_62, %c96] : memref<2x8x128xf32, #tpu.memory_space<vmem>>, vector<2x8x32xf32>
    tpu.vector_store %arg23[%c0_61, %c0_62, %c96], %146 {strides = array<i32>} : memref<2x8x128xf32, #tpu.memory_space<vmem>>, vector<2x8x32xf32>,
    %c0_63 = arith.constant 0 : index
    %c0_64 = arith.constant 0 : index
    %c0_65 = arith.constant 0 : index
    %148 = vector.load %arg23[%c0_63, %c0_64, %c0_65] : memref<2x8x128xf32, #tpu.memory_space<vmem>>, vector<2x8x128xf32>
    %149 = vector.shape_cast %148 : vector<2x8x128xf32> to vector<16x128xf32>
    %150 = arith.truncf %149 : vector<16x128xf32> to vector<16x128xbf16>
    %c0_66 = arith.constant 0 : index
    %c0_67 = arith.constant 0 : index
    %c0_68 = arith.constant 0 : index
    %151 = vector.load %arg11[%c0_66, %c0_67, %c0_68] : memref<1x128x128xbf16, #tpu.memory_space<vmem>>, vector<1x128x128xbf16>
    %152 = vector.shape_cast %151 : vector<1x128x128xbf16> to vector<128x128xbf16>
    %cst_69 = arith.constant dense<0.000000e+00> : vector<16x128xf32>
    %153 = tpu.matmul %150, %152, %cst_69 {dimension_numbers = #tpu.dot_dimension_numbers<[1], [0], [0], [1], [0, 0, 1, 1], [], []>} : vector<16x128xbf16>, vector<128x128xbf16>, vector<16x128xf32> -> vector<16x128xf32>
    %c0_70 = arith.constant 0 : index
    %c0_71 = arith.constant 0 : index
    %c0_72 = arith.constant 0 : index
    %154 = vector.load %arg12[%c0_70, %c0_71, %c0_72] : memref<1x1x128xf32, #tpu.memory_space<vmem>>, vector<1x1x128xf32>
    %155 = vector.shape_cast %154 : vector<1x1x128xf32> to vector<1x128xf32>
    %156 = vector.broadcast %155 : vector<1x128xf32> to vector<16x128xf32>
    %157 = arith.addf %153, %156 : vector<16x128xf32>
    %158 = arith.addf %3, %157 : vector<16x128xf32>
    %c0_73 = arith.constant 0 : index
    %c0_74 = arith.constant 0 : index
    %c0_75 = arith.constant 0 : index
    %159 = vector.load %arg13[%c0_73, %c0_74, %c0_75] : memref<1x1x128xf32, #tpu.memory_space<vmem>>, vector<1x1x128xf32>
    %160 = vector.shape_cast %159 : vector<1x1x128xf32> to vector<1x128xf32>
    %c0_76 = arith.constant 0 : index
    %c0_77 = arith.constant 0 : index
    %c0_78 = arith.constant 0 : index
    %161 = vector.load %arg14[%c0_76, %c0_77, %c0_78] : memref<1x1x128xf32, #tpu.memory_space<vmem>>, vector<1x1x128xf32>
    %162 = vector.shape_cast %161 : vector<1x1x128xf32> to vector<1x128xf32>
    %cst_79 = arith.constant dense<0.000000e+00> : vector<16xf32>
    %163 = vector.multi_reduction <add>, %158, %cst_79 [1] : vector<16x128xf32> to vector<16xf32>
    %164 = vector.shape_cast %163 : vector<16xf32> to vector<16x1xf32>
    %cst_80 = arith.constant 1.280000e+02 : f32
    %165 = vector.broadcast %cst_80 : f32 to vector<16x1xf32>
    %166 = arith.divf %164, %165 : vector<16x1xf32>
    %167 = vector.broadcast %166 : vector<16x1xf32> to vector<16x128xf32>
    %168 = arith.subf %158, %167 : vector<16x128xf32>
    %169 = arith.mulf %168, %168 : vector<16x128xf32>
    %cst_81 = arith.constant dense<0.000000e+00> : vector<16xf32>
    %170 = vector.multi_reduction <add>, %169, %cst_81 [1] : vector<16x128xf32> to vector<16xf32>
    %171 = vector.shape_cast %170 : vector<16xf32> to vector<16x1xf32>
    %cst_82 = arith.constant 1.280000e+02 : f32
    %172 = vector.broadcast %cst_82 : f32 to vector<16x1xf32>
    %173 = arith.divf %171, %172 : vector<16x1xf32>
    %174 = vector.broadcast %166 : vector<16x1xf32> to vector<16x128xf32>
    %175 = arith.subf %158, %174 : vector<16x128xf32>
    %cst_83 = arith.constant 9.99999974E-6 : f32
    %176 = vector.broadcast %cst_83 : f32 to vector<16x1xf32>
    %177 = arith.addf %173, %176 : vector<16x1xf32>
    %178 = math.rsqrt %177 : vector<16x1xf32>
    %179 = vector.broadcast %178 : vector<16x1xf32> to vector<16x128xf32>
    %180 = arith.mulf %175, %179 : vector<16x128xf32>
    %181 = vector.broadcast %160 : vector<1x128xf32> to vector<16x128xf32>
    %182 = arith.mulf %180, %181 : vector<16x128xf32>
    %183 = vector.broadcast %162 : vector<1x128xf32> to vector<16x128xf32>
    %184 = arith.addf %182, %183 : vector<16x128xf32>
    %185 = arith.truncf %184 : vector<16x128xf32> to vector<16x128xbf16>
    %c0_84 = arith.constant 0 : index
    %c0_85 = arith.constant 0 : index
    %c0_86 = arith.constant 0 : index
    %186 = vector.load %arg15[%c0_84, %c0_85, %c0_86] : memref<1x128x512xbf16, #tpu.memory_space<vmem>>, vector<1x128x512xbf16>
    %187 = vector.shape_cast %186 : vector<1x128x512xbf16> to vector<128x512xbf16>
    %cst_87 = arith.constant dense<0.000000e+00> : vector<16x512xf32>
    %188 = tpu.matmul %185, %187, %cst_87 {dimension_numbers = #tpu.dot_dimension_numbers<[1], [0], [0], [1], [0, 0, 1, 1], [], []>} : vector<16x128xbf16>, vector<128x512xbf16>, vector<16x512xf32> -> vector<16x512xf32>
    %c0_88 = arith.constant 0 : index
    %c0_89 = arith.constant 0 : index
    %c0_90 = arith.constant 0 : index
    %189 = vector.load %arg16[%c0_88, %c0_89, %c0_90] : memref<1x1x512xf32, #tpu.memory_space<vmem>>, vector<1x1x512xf32>
    %190 = vector.shape_cast %189 : vector<1x1x512xf32> to vector<1x512xf32>
    %191 = vector.broadcast %190 : vector<1x512xf32> to vector<16x512xf32>
    %192 = arith.addf %188, %191 : vector<16x512xf32>
    %cst_91 = arith.constant 1.702000e+00 : f32
    %193 = vector.broadcast %cst_91 : f32 to vector<16x512xf32>
    %194 = arith.mulf %193, %192 : vector<16x512xf32>
    %195 = arith.negf %194 : vector<16x512xf32>
    %196 = math.exp %195 : vector<16x512xf32>
    %cst_92 = arith.constant 1.000000e+00 : f32
    %197 = vector.broadcast %cst_92 : f32 to vector<16x512xf32>
    %198 = arith.addf %197, %196 : vector<16x512xf32>
    %199 = arith.divf %197, %198 : vector<16x512xf32>
    %200 = arith.mulf %192, %199 : vector<16x512xf32>
    %201 = arith.truncf %200 : vector<16x512xf32> to vector<16x512xbf16>
    %c0_93 = arith.constant 0 : index
    %c0_94 = arith.constant 0 : index
    %c0_95 = arith.constant 0 : index
    %202 = vector.load %arg17[%c0_93, %c0_94, %c0_95] : memref<1x512x128xbf16, #tpu.memory_space<vmem>>, vector<1x512x128xbf16>
    %203 = vector.shape_cast %202 : vector<1x512x128xbf16> to vector<512x128xbf16>
    %cst_96 = arith.constant dense<0.000000e+00> : vector<16x128xf32>
    %204 = tpu.matmul %201, %203, %cst_96 {dimension_numbers = #tpu.dot_dimension_numbers<[1], [0], [0], [1], [0, 0, 1, 1], [], []>} : vector<16x512xbf16>, vector<512x128xbf16>, vector<16x128xf32> -> vector<16x128xf32>
    %c0_97 = arith.constant 0 : index
    %c0_98 = arith.constant 0 : index
    %c0_99 = arith.constant 0 : index
    %205 = vector.load %arg18[%c0_97, %c0_98, %c0_99] : memref<1x1x128xf32, #tpu.memory_space<vmem>>, vector<1x1x128xf32>
    %206 = vector.shape_cast %205 : vector<1x1x128xf32> to vector<1x128xf32>
    %207 = vector.broadcast %206 : vector<1x128xf32> to vector<16x128xf32>
    %208 = arith.addf %204, %207 : vector<16x128xf32>
    %209 = arith.addf %158, %208 : vector<16x128xf32>
    %c0_100 = arith.constant 0 : index
    %c0_101 = arith.constant 0 : index
    %210 = vector.load %arg22[%c0_100, %c0_101] : memref<16x128xf32, #tpu.memory_space<vmem>>, vector<16x128xf32>
    tpu.vector_store %arg22[%c0_100, %c0_101], %209 {strides = array<i32>} : memref<16x128xf32, #tpu.memory_space<vmem>>, vector<16x128xf32>,
    %c1_i32 = arith.constant 1 : i32
    %211 = arith.cmpi eq, %arg1, %c1_i32 : i32
    %212 = arith.extui %211 : i1 to i32
    %c0_i32_102 = arith.constant 0 : i32
    %213 = arith.cmpi ne, %212, %c0_i32_102 : i32
    scf.if %213 {
      %c0_103 = arith.constant 0 : index
      %c0_104 = arith.constant 0 : index
      %214 = vector.load %arg19[%c0_103, %c0_104] : memref<1x128xf32, #tpu.memory_space<vmem>>, vector<1x128xf32>
      %c0_105 = arith.constant 0 : index
      %c0_106 = arith.constant 0 : index
      %215 = vector.load %arg20[%c0_105, %c0_106] : memref<1x128xf32, #tpu.memory_space<vmem>>, vector<1x128xf32>
      %cst_107 = arith.constant dense<0.000000e+00> : vector<16xf32>
      %216 = vector.multi_reduction <add>, %209, %cst_107 [1] : vector<16x128xf32> to vector<16xf32>
      %217 = vector.shape_cast %216 : vector<16xf32> to vector<16x1xf32>
      %cst_108 = arith.constant 1.280000e+02 : f32
      %218 = vector.broadcast %cst_108 : f32 to vector<16x1xf32>
      %219 = arith.divf %217, %218 : vector<16x1xf32>
      %220 = vector.broadcast %219 : vector<16x1xf32> to vector<16x128xf32>
      %221 = arith.subf %209, %220 : vector<16x128xf32>
      %222 = arith.mulf %221, %221 : vector<16x128xf32>
      %cst_109 = arith.constant dense<0.000000e+00> : vector<16xf32>
      %223 = vector.multi_reduction <add>, %222, %cst_109 [1] : vector<16x128xf32> to vector<16xf32>
      %224 = vector.shape_cast %223 : vector<16xf32> to vector<16x1xf32>
      %cst_110 = arith.constant 1.280000e+02 : f32
      %225 = vector.broadcast %cst_110 : f32 to vector<16x1xf32>
      %226 = arith.divf %224, %225 : vector<16x1xf32>
      %227 = vector.broadcast %219 : vector<16x1xf32> to vector<16x128xf32>
      %228 = arith.subf %209, %227 : vector<16x128xf32>
      %cst_111 = arith.constant 9.99999974E-6 : f32
      %229 = vector.broadcast %cst_111 : f32 to vector<16x1xf32>
      %230 = arith.addf %226, %229 : vector<16x1xf32>
      %231 = math.rsqrt %230 : vector<16x1xf32>
      %232 = vector.broadcast %231 : vector<16x1xf32> to vector<16x128xf32>
      %233 = arith.mulf %228, %232 : vector<16x128xf32>
      %234 = vector.broadcast %214 : vector<1x128xf32> to vector<16x128xf32>
      %235 = arith.mulf %233, %234 : vector<16x128xf32>
      %236 = vector.broadcast %215 : vector<1x128xf32> to vector<16x128xf32>
      %237 = arith.addf %235, %236 : vector<16x128xf32>
      %238 = vector.shape_cast %237 : vector<16x128xf32> to vector<2x8x128xf32>
      %c0_112 = arith.constant 0 : index
      %c0_113 = arith.constant 0 : index
      %c0_114 = arith.constant 0 : index
      %239 = vector.load %arg21[%c0_112, %c0_113, %c0_114] : memref<2x8x128xf32, #tpu.memory_space<vmem>>, vector<2x8x128xf32>
      tpu.vector_store %arg21[%c0_112, %c0_113, %c0_114], %238 {strides = array<i32>} : memref<2x8x128xf32, #tpu.memory_space<vmem>>, vector<2x8x128xf32>,
    } else {
    }
    return
  }
  func.func @transform_0(%arg0: i32, %arg1: i32) -> (i32, i32, i32) {
    %c0_i32 = arith.constant 0 : i32
    %c0_i32_0 = arith.constant 0 : i32
    %c0_i32_1 = arith.constant 0 : i32
    return %arg0, %c0_i32, %c0_i32_0 : i32, i32, i32
  }
  func.func @transform_1(%arg0: i32, %arg1: i32) -> (i32, i32, i32) {
    %c0_i32 = arith.constant 0 : i32
    %c0_i32_0 = arith.constant 0 : i32
    %c0_i32_1 = arith.constant 0 : i32
    return %arg1, %c0_i32, %c0_i32_0 : i32, i32, i32
  }
  func.func @transform_2(%arg0: i32, %arg1: i32) -> (i32, i32, i32) {
    %c0_i32 = arith.constant 0 : i32
    %c0_i32_0 = arith.constant 0 : i32
    %c0_i32_1 = arith.constant 0 : i32
    return %arg1, %c0_i32, %c0_i32_0 : i32, i32, i32
  }
  func.func @transform_3(%arg0: i32, %arg1: i32) -> (i32, i32, i32) {
    %c0_i32 = arith.constant 0 : i32
    %c0_i32_0 = arith.constant 0 : i32
    %c0_i32_1 = arith.constant 0 : i32
    return %arg1, %c0_i32, %c0_i32_0 : i32, i32, i32
  }
  func.func @transform_4(%arg0: i32, %arg1: i32) -> (i32, i32, i32) {
    %c0_i32 = arith.constant 0 : i32
    %c0_i32_0 = arith.constant 0 : i32
    %c0_i32_1 = arith.constant 0 : i32
    return %arg1, %c0_i32, %c0_i32_0 : i32, i32, i32
  }
  func.func @transform_5(%arg0: i32, %arg1: i32) -> (i32, i32, i32) {
    %c0_i32 = arith.constant 0 : i32
    %c0_i32_0 = arith.constant 0 : i32
    %c0_i32_1 = arith.constant 0 : i32
    return %arg1, %c0_i32, %c0_i32_0 : i32, i32, i32
  }
  func.func @transform_6(%arg0: i32, %arg1: i32) -> (i32, i32, i32) {
    %c0_i32 = arith.constant 0 : i32
    %c0_i32_0 = arith.constant 0 : i32
    %c0_i32_1 = arith.constant 0 : i32
    return %arg1, %c0_i32, %c0_i32_0 : i32, i32, i32
  }
  func.func @transform_7(%arg0: i32, %arg1: i32) -> (i32, i32, i32) {
    %c0_i32 = arith.constant 0 : i32
    %c0_i32_0 = arith.constant 0 : i32
    %c0_i32_1 = arith.constant 0 : i32
    return %arg1, %c0_i32, %c0_i32_0 : i32, i32, i32
  }
  func.func @transform_8(%arg0: i32, %arg1: i32) -> (i32, i32, i32) {
    %c0_i32 = arith.constant 0 : i32
    %c0_i32_0 = arith.constant 0 : i32
    %c0_i32_1 = arith.constant 0 : i32
    return %arg1, %c0_i32, %c0_i32_0 : i32, i32, i32
  }
  func.func @transform_9(%arg0: i32, %arg1: i32) -> (i32, i32, i32) {
    %c0_i32 = arith.constant 0 : i32
    %c0_i32_0 = arith.constant 0 : i32
    %c0_i32_1 = arith.constant 0 : i32
    return %arg1, %c0_i32, %c0_i32_0 : i32, i32, i32
  }
  func.func @transform_10(%arg0: i32, %arg1: i32) -> (i32, i32, i32) {
    %c0_i32 = arith.constant 0 : i32
    %c0_i32_0 = arith.constant 0 : i32
    %c0_i32_1 = arith.constant 0 : i32
    return %arg1, %c0_i32, %c0_i32_0 : i32, i32, i32
  }
  func.func @transform_11(%arg0: i32, %arg1: i32) -> (i32, i32, i32) {
    %c0_i32 = arith.constant 0 : i32
    %c0_i32_0 = arith.constant 0 : i32
    %c0_i32_1 = arith.constant 0 : i32
    return %arg1, %c0_i32, %c0_i32_0 : i32, i32, i32
  }
  func.func @transform_12(%arg0: i32, %arg1: i32) -> (i32, i32, i32) {
    %c0_i32 = arith.constant 0 : i32
    %c0_i32_0 = arith.constant 0 : i32
    %c0_i32_1 = arith.constant 0 : i32
    return %arg1, %c0_i32, %c0_i32_0 : i32, i32, i32
  }
  func.func @transform_13(%arg0: i32, %arg1: i32) -> (i32, i32, i32) {
    %c0_i32 = arith.constant 0 : i32
    %c0_i32_0 = arith.constant 0 : i32
    %c0_i32_1 = arith.constant 0 : i32
    return %arg1, %c0_i32, %c0_i32_0 : i32, i32, i32
  }
  func.func @transform_14(%arg0: i32, %arg1: i32) -> (i32, i32, i32) {
    %c0_i32 = arith.constant 0 : i32
    %c0_i32_0 = arith.constant 0 : i32
    %c0_i32_1 = arith.constant 0 : i32
    return %arg1, %c0_i32, %c0_i32_0 : i32, i32, i32
  }
  func.func @transform_15(%arg0: i32, %arg1: i32) -> (i32, i32, i32) {
    %c0_i32 = arith.constant 0 : i32
    %c0_i32_0 = arith.constant 0 : i32
    %c0_i32_1 = arith.constant 0 : i32
    return %arg1, %c0_i32, %c0_i32_0 : i32, i32, i32
  }
  func.func @transform_16(%arg0: i32, %arg1: i32) -> (i32, i32, i32) {
    %c0_i32 = arith.constant 0 : i32
    %c0_i32_0 = arith.constant 0 : i32
    %c0_i32_1 = arith.constant 0 : i32
    return %arg1, %c0_i32, %c0_i32_0 : i32, i32, i32
  }
  func.func @transform_17(%arg0: i32, %arg1: i32) -> (i32, i32) {
    %c0_i32 = arith.constant 0 : i32
    %c0_i32_0 = arith.constant 0 : i32
    %c0_i32_1 = arith.constant 0 : i32
    return %c0_i32, %c0_i32_0 : i32, i32
  }
  func.func @transform_18(%arg0: i32, %arg1: i32) -> (i32, i32) {
    %c0_i32 = arith.constant 0 : i32
    %c0_i32_0 = arith.constant 0 : i32
    %c0_i32_1 = arith.constant 0 : i32
    return %c0_i32, %c0_i32_0 : i32, i32
  }
  func.func @transform_19(%arg0: i32, %arg1: i32) -> (i32, i32, i32) {
    %c0_i32 = arith.constant 0 : i32
    %c0_i32_0 = arith.constant 0 : i32
    %c0_i32_1 = arith.constant 0 : i32
    return %arg0, %c0_i32, %c0_i32_0 : i32, i32, i32
  }
}

</mosaic_0001>

<llo_original>
// kernel: pubmed_clip_embed.1
$region0: #{pubmed_clip_embed.1}
  #allocation0 [shape = 'u32[]', space=smem, size = 0x4, offset = 0x4, fixed_abs, tag = 'smem constant byte address 0x4 - core index']
  #allocation1 [shape = 'u32[144,128]{1,0:T(1,128)}', space=vmem, size = 0x12000, scoped, tag = 'internal scratch']
  #allocation2 [shape = 'f32[16,128]{1,0:T(8,128)}', space=vmem, size = 0x2000, scoped, tag = 'scratch operand']
  #allocation3 [shape = 'f32[2,8,128]{2,1,0:T(8,128)}', space=vmem, size = 0x2000, scoped, tag = 'scratch operand']
  %s0 = inlined_call_operand.vmem [shape: f32[4,8,128], index: 0, kind: input, shape index: {}]
  %s1 = inlined_call_operand.vmem [shape: f32[2,1,128], index: 1, kind: input, shape index: {}]
  %s2 = inlined_call_operand.vmem [shape: f32[2,1,128], index: 2, kind: input, shape index: {}]
  %s3 = inlined_call_operand.vmem [shape: bf16[2,128,128], index: 3, kind: input, shape index: {}]
  %s4 = inlined_call_operand.vmem [shape: f32[2,1,128], index: 4, kind: input, shape index: {}]
  %s5 = inlined_call_operand.vmem [shape: bf16[2,128,128], index: 5, kind: input, shape index: {}]
  %s6 = inlined_call_operand.hbm [shape: f32[2,1,128], index: 6, kind: input, shape index: {}]
  %s7 = inlined_call_operand.vmem [shape: bf16[2,128,128], index: 7, kind: input, shape index: {}]
  %s8 = inlined_call_operand.vmem [shape: f32[2,1,128], index: 8, kind: input, shape index: {}]
  %s9 = inlined_call_operand.hbm [shape: bf16[2,128,128], index: 9, kind: input, shape index: {}]
  %s10 = inlined_call_operand.hbm [shape: f32[2,1,128], index: 10, kind: input, shape index: {}]
  %s11 = inlined_call_operand.vmem [shape: f32[2,1,128], index: 11, kind: input, shape index: {}]
  %s12 = inlined_call_operand.vmem [shape: f32[2,1,128], index: 12, kind: input, shape index: {}]
  %s13 = inlined_call_operand.hbm [shape: bf16[2,128,512], index: 13, kind: input, shape index: {}]
  %s14 = inlined_call_operand.hbm [shape: f32[2,1,512], index: 14, kind: input, shape index: {}]
  %s15 = inlined_call_operand.hbm [shape: bf16[2,512,128], index: 15, kind: input, shape index: {}]
  %s16 = inlined_call_operand.hbm [shape: f32[2,1,128], index: 16, kind: input, shape index: {}]
  %s17 = inlined_call_operand.vmem [shape: f32[1,128], index: 17, kind: input, shape index: {}]
  %s18 = inlined_call_operand.vmem [shape: f32[1,128], index: 18, kind: input, shape index: {}]
  %s19 = inlined_call_operand.hbm [shape: f32[4,8,128], index: 19, kind: output, shape index: {}]
  %s20 = sld [smem:[#allocation0]]
  $region145: #{pubmed_clip_embed.1} parent=0
    _
  %s22 = ssub.s32 1, %s20
  %s23 = scalar_select 0, %s22, %s20
  $region1: #{pubmed_clip_embed.1} parent=0
    #allocation4 [shape = 'u8[1024]{0}', space=vmem, size = 0x400, scoped, tag = 'input window, operand 6']
    #allocation5 [shape = 's32[2]{0}', space=sflag, size = 0x8, scoped, tag = 'scoped memory for pubmed_clip_embed.1']
    #allocation6 [shape = 's32[2]{0}', space=sflag, size = 0x8, scoped, tag = 'scoped memory for pubmed_clip_embed.1']
    #allocation7 [shape = 'u8[65536]{0}', space=vmem, size = 0x10000, scoped, tag = 'input window, operand 9']
    #allocation8 [shape = 's32[2]{0}', space=sflag, size = 0x8, scoped, tag = 'scoped memory for pubmed_clip_embed.1']
    #allocation9 [shape = 'u8[1024]{0}', space=vmem, size = 0x400, scoped, tag = 'input window, operand 10']
    #allocation10 [shape = 'u8[262144]{0}', space=vmem, size = 0x40000, scoped, tag = 'input window, operand 13']
    #allocation11 [shape = 's32[2]{0}', space=sflag, size = 0x8, scoped, tag = 'scoped memory for pubmed_clip_embed.1']
    #allocation12 [shape = 'u8[4096]{0}', space=vmem, size = 0x1000, scoped, tag = 'input window, operand 14']
    #allocation13 [shape = 'u8[262144]{0}', space=vmem, size = 0x40000, scoped, tag = 'input window, operand 15']
    #allocation14 [shape = 's32[2]{0}', space=sflag, size = 0x8, scoped, tag = 'scoped memory for pubmed_clip_embed.1']
    #allocation15 [shape = 'u8[1024]{0}', space=vmem, size = 0x400, scoped, tag = 'input window, operand 16']
    #allocation16 [shape = 'u8[16384]{0}', space=vmem, size = 0x4000, scoped, tag = 'output window, operand 0']
    %24 = vsyncpa [#allocation5], 0
    %s25 = scalar_lea.sflag [#allocation5], 1
    %26 = vsyncpa %s25, 0
    %27 = vsyncpa [#allocation8], 0
    %s28 = scalar_lea.sflag [#allocation8], 1
    %29 = vsyncpa %s28, 0
    %30 = vsyncpa [#allocation11], 0
    %s31 = scalar_lea.sflag [#allocation11], 1
    %32 = vsyncpa %s31, 0
    %33 = vsyncpa [#allocation14], 0
    %s34 = scalar_lea.sflag [#allocation14], 1
    %35 = vsyncpa %s34, 0
    %36 = vsyncpa [#allocation6], 0
    %s37 = scalar_lea.sflag [#allocation6], 1
    %38 = vsyncpa %s37, 0
    loop: start=0, step=1, limit=6
    $region2: #{pubmed_clip_embed.1} parent=1 // loop_pre_header
      _
    $region3: #{pubmed_clip_embed.1} parent=1 // loop_header
      %s40 = sphi 0, %s44
      %p41 = scmp.ge.s32.totalorder %s40, 6
      %s47 = sphi 0, %s59
      %s48 = sphi 0, %s55
      %s49 = sphi 0, %s47
      %s50 = sphi 0, %s48
      %s51 = sphi 0, %s49
      %s52 = sphi 0, %s50
      %s62 = sphi 0, %s64
      %s65 = sphi 0, %s62
      %s66 = sphi 0, %s65
      %s82 = sphi 0, %s66
      %s88 = sphi 0, %s90
      %s91 = sphi 0, %s88
      %s92 = sphi 0, %s91
      %s108 = sphi 0, %s92
      %s114 = sphi 0, %s116
      %s117 = sphi 0, %s114
      %s118 = sphi 0, %s117
      %s134 = sphi 0, %s118
      %s140 = sphi 0, %s142
      %s143 = sphi 0, %s140
      %s144 = sphi 0, %s143
      %s160 = sphi 0, %s144
      %s166 = sphi 0, %s168
      %s169 = sphi 0, %s166
      %s170 = sphi 0, %s169
      %s186 = sphi 0, %s170
      %s192 = sphi 0, %s194
      %s195 = sphi 0, %s192
      %s196 = sphi 0, %s195
      %s212 = sphi 0, %s196
      %s218 = sphi 0, %s220
      %s221 = sphi 0, %s218
      %s222 = sphi 0, %s221
      %s238 = sphi 0, %s222
      %s244 = sphi 0, %s246
      %s247 = sphi 0, %s244
      %s248 = sphi 0, %s247
      %s264 = sphi 0, %s248
      %s270 = sphi 0, %s272
      %s273 = sphi 0, %s270
      %s274 = sphi 0, %s273
      %s290 = sphi 0, %s274
      %s296 = sphi 0, %s298
      %s299 = sphi 0, %s296
      %s300 = sphi 0, %s299
      %s316 = sphi 0, %s300
      %s322 = sphi 0, %s324
      %s325 = sphi 0, %s322
      %s326 = sphi 0, %s325
      %s342 = sphi 0, %s326
      %s348 = sphi 0, %s350
      %s351 = sphi 0, %s348
      %s352 = sphi 0, %s351
      %s368 = sphi 0, %s352
      %s374 = sphi 0, %s376
      %s377 = sphi 0, %s374
      %s378 = sphi 0, %s377
      %s394 = sphi 0, %s378
      %s400 = sphi 0, %s402
      %s403 = sphi 0, %s400
      %s404 = sphi 0, %s403
      %s420 = sphi 0, %s404
      %s426 = sphi 0, %s428
      %s429 = sphi 0, %s426
      %s430 = sphi 0, %s429
      %s446 = sphi 0, %s430
      %s452 = sphi 0, %s454
      %s455 = sphi 0, %s452
      %s456 = sphi 0, %s455
      %s472 = sphi 0, %s456
      %s478 = sphi 0, %s480
      %s481 = sphi 0, %s478
      %s482 = sphi 0, %s481
      %s498 = sphi 0, %s482
      %s502 = sphi 0, %s502
      %s504 = sphi 0, %s502
      %s505 = sphi 0, %s504
      %s519 = sphi 0, %s505
      %s523 = sphi 0, %s523
      %s525 = sphi 0, %s523
      %s526 = sphi 0, %s525
      %s540 = sphi 0, %s526
      %s546 = sphi 0, %s548
      %s549 = sphi 0, %s546
      %s550 = sphi 0, %s549
      %s566 = sphi 0, %s550
    $region4: #{pubmed_clip_embed.1} parent=1 // loop_header_branch
      %43 = sbr.rel (%p41) target = $region8
    $region5: #{pubmed_clip_embed.1} parent=1 // loop_body
      %s45 = ssub.s32 %s40, 1
      %s46 = ssub.s32 %s40, 2
      %s53 = sadd.s32 1, %s48
      %p54 = scmp.ge.s32.totalorder %s53, 2
      %s55 = scalar_select %p54, 0, %s53
      %s56 = sadd.s32 1, %s47
      %s57 = scalar_select %p54, %s56, %s47
      %p58 = scmp.ge.s32.totalorder %s57, 2
      %s59 = scalar_select %p58, 0, %s57
      %s60 = ssub.s32 %s47, %s59
      %p61 = scmp.eq.s32.totalorder %s60, 0
      %s63 = sadd.s32 %s62, 1
      %s64 = scalar_select %p61, %s62, %s63
      %p67 = pneg %p61
      %p68 = scmp.eq.s32.totalorder %s40, 3
      %p69 = por %p67, %p68
      %p70 = scmp.ne.s32.totalorder %s62, %s65
      %p71 = scmp.eq.s32.totalorder %s40, 0
      %p72 = por %p70, %p71
      %p73 = scmp.ne.s32.totalorder %s62, %s65
      %p74 = scmp.eq.s32.totalorder %s45, 3
      %p75 = por %p73, %p74
      %p76 = scmp.ne.s32.totalorder %s65, %s66
      %p77 = scmp.eq.s32.totalorder %s45, 0
      %p78 = por %p76, %p77
      %p79 = scmp.ne.s32.totalorder %s65, %s66
      %p80 = scmp.eq.s32.totalorder %s46, 3
      %p81 = por %p79, %p80
      %p83 = scmp.ne.s32.totalorder %s66, %s82
      %p84 = scmp.eq.s32.totalorder %s46, 0
      %p85 = por %p83, %p84
      %s86 = ssub.s32 %s48, %s55
      %p87 = scmp.eq.s32.totalorder %s86, 0
      %s89 = sadd.s32 %s88, 1
      %s90 = scalar_select %p87, %s88, %s89
      %p93 = pneg %p87
      %p94 = scmp.eq.s32.totalorder %s40, 3
      %p95 = por %p93, %p94
      %p96 = scmp.ne.s32.totalorder %s88, %s91
      %p97 = scmp.eq.s32.totalorder %s40, 0
      %p98 = por %p96, %p97
      %p99 = scmp.ne.s32.totalorder %s88, %s91
      %p100 = scmp.eq.s32.totalorder %s45, 3
      %p101 = por %p99, %p100
      %p102 = scmp.ne.s32.totalorder %s91, %s92
      %p103 = scmp.eq.s32.totalorder %s45, 0
      %p104 = por %p102, %p103
      %p105 = scmp.ne.s32.totalorder %s91, %s92
      %p106 = scmp.eq.s32.totalorder %s46, 3
      %p107 = por %p105, %p106
      %p109 = scmp.ne.s32.totalorder %s92, %s108
      %p110 = scmp.eq.s32.totalorder %s46, 0
      %p111 = por %p109, %p110
      %s112 = ssub.s32 %s48, %s55
      %p113 = scmp.eq.s32.totalorder %s112, 0
      %s115 = sadd.s32 %s114, 1
      %s116 = scalar_select %p113, %s114, %s115
      %p119 = pneg %p113
      %p120 = scmp.eq.s32.totalorder %s40, 3
      %p121 = por %p119, %p120
      %p122 = scmp.ne.s32.totalorder %s114, %s117
      %p123 = scmp.eq.s32.totalorder %s40, 0
      %p124 = por %p122, %p123
      %p125 = scmp.ne.s32.totalorder %s114, %s117
      %p126 = scmp.eq.s32.totalorder %s45, 3
      %p127 = por %p125, %p126
      %p128 = scmp.ne.s32.totalorder %s117, %s118
      %p129 = scmp.eq.s32.totalorder %s45, 0
      %p130 = por %p128, %p129
      %p131 = scmp.ne.s32.totalorder %s117, %s118
      %p132 = scmp.eq.s32.totalorder %s46, 3
      %p133 = por %p131, %p132
      %p135 = scmp.ne.s32.totalorder %s118, %s134
      %p136 = scmp.eq.s32.totalorder %s46, 0
      %p137 = por %p135, %p136
      %s138 = ssub.s32 %s48, %s55
      %p139 = scmp.eq.s32.totalorder %s138, 0
      %s141 = sadd.s32 %s140, 1
      %s142 = scalar_select %p139, %s140, %s141
      %p145 = pneg %p139
      %p146 = scmp.eq.s32.totalorder %s40, 3
      %p147 = por %p145, %p146
      %p148 = scmp.ne.s32.totalorder %s140, %s143
      %p149 = scmp.eq.s32.totalorder %s40, 0
      %p150 = por %p148, %p149
      %p151 = scmp.ne.s32.totalorder %s140, %s143
      %p152 = scmp.eq.s32.totalorder %s45, 3
      %p153 = por %p151, %p152
      %p154 = scmp.ne.s32.totalorder %s143, %s144
      %p155 = scmp.eq.s32.totalorder %s45, 0
      %p156 = por %p154, %p155
      %p157 = scmp.ne.s32.totalorder %s143, %s144
      %p158 = scmp.eq.s32.totalorder %s46, 3
      %p159 = por %p157, %p158
      %p161 = scmp.ne.s32.totalorder %s144, %s160
      %p162 = scmp.eq.s32.totalorder %s46, 0
      %p163 = por %p161, %p162
      %s164 = ssub.s32 %s48, %s55
      %p165 = scmp.eq.s32.totalorder %s164, 0
      %s167 = sadd.s32 %s166, 1
      %s168 = scalar_select %p165, %s166, %s167
      %p171 = pneg %p165
      %p172 = scmp.eq.s32.totalorder %s40, 3
      %p173 = por %p171, %p172
      %p174 = scmp.ne.s32.totalorder %s166, %s169
      %p175 = scmp.eq.s32.totalorder %s40, 0
      %p176 = por %p174, %p175
      %p177 = scmp.ne.s32.totalorder %s166, %s169
      %p178 = scmp.eq.s32.totalorder %s45, 3
      %p179 = por %p177, %p178
      %p180 = scmp.ne.s32.totalorder %s169, %s170
      %p181 = scmp.eq.s32.totalorder %s45, 0
      %p182 = por %p180, %p181
      %p183 = scmp.ne.s32.totalorder %s169, %s170
      %p184 = scmp.eq.s32.totalorder %s46, 3
      %p185 = por %p183, %p184
      %p187 = scmp.ne.s32.totalorder %s170, %s186
      %p188 = scmp.eq.s32.totalorder %s46, 0
      %p189 = por %p187, %p188
      %s190 = ssub.s32 %s48, %s55
      %p191 = scmp.eq.s32.totalorder %s190, 0
      %s193 = sadd.s32 %s192, 1
      %s194 = scalar_select %p191, %s192, %s193
      %p197 = pneg %p191
      %p198 = scmp.eq.s32.totalorder %s40, 3
      %p199 = por %p197, %p198
      %p200 = scmp.ne.s32.totalorder %s192, %s195
      %p201 = scmp.eq.s32.totalorder %s40, 0
      %p202 = por %p200, %p201
      %p203 = scmp.ne.s32.totalorder %s192, %s195
      %p204 = scmp.eq.s32.totalorder %s45, 3
      %p205 = por %p203, %p204
      %p206 = scmp.ne.s32.totalorder %s195, %s196
      %p207 = scmp.eq.s32.totalorder %s45, 0
      %p208 = por %p206, %p207
      %p209 = scmp.ne.s32.totalorder %s195, %s196
      %p210 = scmp.eq.s32.totalorder %s46, 3
      %p211 = por %p209, %p210
      %p213 = scmp.ne.s32.totalorder %s196, %s212
      %p214 = scmp.eq.s32.totalorder %s46, 0
      %p215 = por %p213, %p214
      %s216 = ssub.s32 %s48, %s55
      %p217 = scmp.eq.s32.totalorder %s216, 0
      %s219 = sadd.s32 %s218, 1
      %s220 = scalar_select %p217, %s218, %s219
      %p223 = pneg %p217
      %p224 = scmp.eq.s32.totalorder %s40, 3
      %p225 = por %p223, %p224
      %p226 = scmp.ne.s32.totalorder %s218, %s221
      %p227 = scmp.eq.s32.totalorder %s40, 0
      %p228 = por %p226, %p227
      %p229 = scmp.ne.s32.totalorder %s218, %s221
      %p230 = scmp.eq.s32.totalorder %s45, 3
      %p231 = por %p229, %p230
      %p232 = scmp.ne.s32.totalorder %s221, %s222
      %p233 = scmp.eq.s32.totalorder %s45, 0
      %p234 = por %p232, %p233
      %p235 = scmp.ne.s32.totalorder %s221, %s222
      %p236 = scmp.eq.s32.totalorder %s46, 3
      %p237 = por %p235, %p236
      %p239 = scmp.ne.s32.totalorder %s222, %s238
      %p240 = scmp.eq.s32.totalorder %s46, 0
      %p241 = por %p239, %p240
      %s242 = ssub.s32 %s48, %s55
      %p243 = scmp.eq.s32.totalorder %s242, 0
      %s245 = sadd.s32 %s244, 1
      %s246 = scalar_select %p243, %s244, %s245
      %p249 = pneg %p243
      %p250 = scmp.eq.s32.totalorder %s40, 3
      %p251 = por %p249, %p250
      %p252 = scmp.ne.s32.totalorder %s244, %s247
      %p253 = scmp.eq.s32.totalorder %s40, 0
      %p254 = por %p252, %p253
      %p255 = scmp.ne.s32.totalorder %s244, %s247
      %p256 = scmp.eq.s32.totalorder %s45, 3
      %p257 = por %p255, %p256
      %p258 = scmp.ne.s32.totalorder %s247, %s248
      %p259 = scmp.eq.s32.totalorder %s45, 0
      %p260 = por %p258, %p259
      %p261 = scmp.ne.s32.totalorder %s247, %s248
      %p262 = scmp.eq.s32.totalorder %s46, 3
      %p263 = por %p261, %p262
      %p265 = scmp.ne.s32.totalorder %s248, %s264
      %p266 = scmp.eq.s32.totalorder %s46, 0
      %p267 = por %p265, %p266
      %s268 = ssub.s32 %s48, %s55
      %p269 = scmp.eq.s32.totalorder %s268, 0
      %s271 = sadd.s32 %s270, 1
      %s272 = scalar_select %p269, %s270, %s271
      %p275 = pneg %p269
      %p276 = scmp.eq.s32.totalorder %s40, 3
      %p277 = por %p275, %p276
      %p278 = scmp.ne.s32.totalorder %s270, %s273
      %p279 = scmp.eq.s32.totalorder %s40, 0
      %p280 = por %p278, %p279
      %p281 = scmp.ne.s32.totalorder %s270, %s273
      %p282 = scmp.eq.s32.totalorder %s45, 3
      %p283 = por %p281, %p282
      %p284 = scmp.ne.s32.totalorder %s273, %s274
      %p285 = scmp.eq.s32.totalorder %s45, 0
      %p286 = por %p284, %p285
      %p287 = scmp.ne.s32.totalorder %s273, %s274
      %p288 = scmp.eq.s32.totalorder %s46, 3
      %p289 = por %p287, %p288
      %p291 = scmp.ne.s32.totalorder %s274, %s290
      %p292 = scmp.eq.s32.totalorder %s46, 0
      %p293 = por %p291, %p292
      %s294 = ssub.s32 %s48, %s55
      %p295 = scmp.eq.s32.totalorder %s294, 0
      %s297 = sadd.s32 %s296, 1
      %s298 = scalar_select %p295, %s296, %s297
      %p301 = pneg %p295
      %p302 = scmp.eq.s32.totalorder %s40, 3
      %p303 = por %p301, %p302
      %p304 = scmp.ne.s32.totalorder %s296, %s299
      %p305 = scmp.eq.s32.totalorder %s40, 0
      %p306 = por %p304, %p305
      %p307 = scmp.ne.s32.totalorder %s296, %s299
      %p308 = scmp.eq.s32.totalorder %s45, 3
      %p309 = por %p307, %p308
      %p310 = scmp.ne.s32.totalorder %s299, %s300
      %p311 = scmp.eq.s32.totalorder %s45, 0
      %p312 = por %p310, %p311
      %p313 = scmp.ne.s32.totalorder %s299, %s300
      %p314 = scmp.eq.s32.totalorder %s46, 3
      %p315 = por %p313, %p314
      %p317 = scmp.ne.s32.totalorder %s300, %s316
      %p318 = scmp.eq.s32.totalorder %s46, 0
      %p319 = por %p317, %p318
      %s320 = ssub.s32 %s48, %s55
      %p321 = scmp.eq.s32.totalorder %s320, 0
      %s323 = sadd.s32 %s322, 1
      %s324 = scalar_select %p321, %s322, %s323
      %p327 = pneg %p321
      %p328 = scmp.eq.s32.totalorder %s40, 3
      %p329 = por %p327, %p328
      %p330 = scmp.ne.s32.totalorder %s322, %s325
      %p331 = scmp.eq.s32.totalorder %s40, 0
      %p332 = por %p330, %p331
      %p333 = scmp.ne.s32.totalorder %s322, %s325
      %p334 = scmp.eq.s32.totalorder %s45, 3
      %p335 = por %p333, %p334
      %p336 = scmp.ne.s32.totalorder %s325, %s326
      %p337 = scmp.eq.s32.totalorder %s45, 0
      %p338 = por %p336, %p337
      %p339 = scmp.ne.s32.totalorder %s325, %s326
      %p340 = scmp.eq.s32.totalorder %s46, 3
      %p341 = por %p339, %p340
      %p343 = scmp.ne.s32.totalorder %s326, %s342
      %p344 = scmp.eq.s32.totalorder %s46, 0
      %p345 = por %p343, %p344
      %s346 = ssub.s32 %s48, %s55
      %p347 = scmp.eq.s32.totalorder %s346, 0
      %s349 = sadd.s32 %s348, 1
      %s350 = scalar_select %p347, %s348, %s349
      %p353 = pneg %p347
      %p354 = scmp.eq.s32.totalorder %s40, 3
      %p355 = por %p353, %p354
      %p356 = scmp.ne.s32.totalorder %s348, %s351
      %p357 = scmp.eq.s32.totalorder %s40, 0
      %p358 = por %p356, %p357
      %p359 = scmp.ne.s32.totalorder %s348, %s351
      %p360 = scmp.eq.s32.totalorder %s45, 3
      %p361 = por %p359, %p360
      %p362 = scmp.ne.s32.totalorder %s351, %s352
      %p363 = scmp.eq.s32.totalorder %s45, 0
      %p364 = por %p362, %p363
      %p365 = scmp.ne.s32.totalorder %s351, %s352
      %p366 = scmp.eq.s32.totalorder %s46, 3
      %p367 = por %p365, %p366
      %p369 = scmp.ne.s32.totalorder %s352, %s368
      %p370 = scmp.eq.s32.totalorder %s46, 0
      %p371 = por %p369, %p370
      %s372 = ssub.s32 %s48, %s55
      %p373 = scmp.eq.s32.totalorder %s372, 0
      %s375 = sadd.s32 %s374, 1
      %s376 = scalar_select %p373, %s374, %s375
      %p379 = pneg %p373
      %p380 = scmp.eq.s32.totalorder %s40, 3
      %p381 = por %p379, %p380
      %p382 = scmp.ne.s32.totalorder %s374, %s377
      %p383 = scmp.eq.s32.totalorder %s40, 0
      %p384 = por %p382, %p383
      %p385 = scmp.ne.s32.totalorder %s374, %s377
      %p386 = scmp.eq.s32.totalorder %s45, 3
      %p387 = por %p385, %p386
      %p388 = scmp.ne.s32.totalorder %s377, %s378
      %p389 = scmp.eq.s32.totalorder %s45, 0
      %p390 = por %p388, %p389
      %p391 = scmp.ne.s32.totalorder %s377, %s378
      %p392 = scmp.eq.s32.totalorder %s46, 3
      %p393 = por %p391, %p392
      %p395 = scmp.ne.s32.totalorder %s378, %s394
      %p396 = scmp.eq.s32.totalorder %s46, 0
      %p397 = por %p395, %p396
      %s398 = ssub.s32 %s48, %s55
      %p399 = scmp.eq.s32.totalorder %s398, 0
      %s401 = sadd.s32 %s400, 1
      %s402 = scalar_select %p399, %s400, %s401
      %p405 = pneg %p399
      %p406 = scmp.eq.s32.totalorder %s40, 3
      %p407 = por %p405, %p406
      %p408 = scmp.ne.s32.totalorder %s400, %s403
      %p409 = scmp.eq.s32.totalorder %s40, 0
      %p410 = por %p408, %p409
      %p411 = scmp.ne.s32.totalorder %s400, %s403
      %p412 = scmp.eq.s32.totalorder %s45, 3
      %p413 = por %p411, %p412
      %p414 = scmp.ne.s32.totalorder %s403, %s404
      %p415 = scmp.eq.s32.totalorder %s45, 0
      %p416 = por %p414, %p415
      %p417 = scmp.ne.s32.totalorder %s403, %s404
      %p418 = scmp.eq.s32.totalorder %s46, 3
      %p419 = por %p417, %p418
      %p421 = scmp.ne.s32.totalorder %s404, %s420
      %p422 = scmp.eq.s32.totalorder %s46, 0
      %p423 = por %p421, %p422
      %s424 = ssub.s32 %s48, %s55
      %p425 = scmp.eq.s32.totalorder %s424, 0
      %s427 = sadd.s32 %s426, 1
      %s428 = scalar_select %p425, %s426, %s427
      %p431 = pneg %p425
      %p432 = scmp.eq.s32.totalorder %s40, 3
      %p433 = por %p431, %p432
      %p434 = scmp.ne.s32.totalorder %s426, %s429
      %p435 = scmp.eq.s32.totalorder %s40, 0
      %p436 = por %p434, %p435
      %p437 = scmp.ne.s32.totalorder %s426, %s429
      %p438 = scmp.eq.s32.totalorder %s45, 3
      %p439 = por %p437, %p438
      %p440 = scmp.ne.s32.totalorder %s429, %s430
      %p441 = scmp.eq.s32.totalorder %s45, 0
      %p442 = por %p440, %p441
      %p443 = scmp.ne.s32.totalorder %s429, %s430
      %p444 = scmp.eq.s32.totalorder %s46, 3
      %p445 = por %p443, %p444
      %p447 = scmp.ne.s32.totalorder %s430, %s446
      %p448 = scmp.eq.s32.totalorder %s46, 0
      %p449 = por %p447, %p448
      %s450 = ssub.s32 %s48, %s55
      %p451 = scmp.eq.s32.totalorder %s450, 0
      %s453 = sadd.s32 %s452, 1
      %s454 = scalar_select %p451, %s452, %s453
      %p457 = pneg %p451
      %p458 = scmp.eq.s32.totalorder %s40, 3
      %p459 = por %p457, %p458
      %p460 = scmp.ne.s32.totalorder %s452, %s455
      %p461 = scmp.eq.s32.totalorder %s40, 0
      %p462 = por %p460, %p461
      %p463 = scmp.ne.s32.totalorder %s452, %s455
      %p464 = scmp.eq.s32.totalorder %s45, 3
      %p465 = por %p463, %p464
      %p466 = scmp.ne.s32.totalorder %s455, %s456
      %p467 = scmp.eq.s32.totalorder %s45, 0
      %p468 = por %p466, %p467
      %p469 = scmp.ne.s32.totalorder %s455, %s456
      %p470 = scmp.eq.s32.totalorder %s46, 3
      %p471 = por %p469, %p470
      %p473 = scmp.ne.s32.totalorder %s456, %s472
      %p474 = scmp.eq.s32.totalorder %s46, 0
      %p475 = por %p473, %p474
      %s476 = ssub.s32 %s48, %s55
      %p477 = scmp.eq.s32.totalorder %s476, 0
      %s479 = sadd.s32 %s478, 1
      %s480 = scalar_select %p477, %s478, %s479
      %p483 = pneg %p477
      %p484 = scmp.eq.s32.totalorder %s40, 3
      %p485 = por %p483, %p484
      %p486 = scmp.ne.s32.totalorder %s478, %s481
      %p487 = scmp.eq.s32.totalorder %s40, 0
      %p488 = por %p486, %p487
      %p489 = scmp.ne.s32.totalorder %s478, %s481
      %p490 = scmp.eq.s32.totalorder %s45, 3
      %p491 = por %p489, %p490
      %p492 = scmp.ne.s32.totalorder %s481, %s482
      %p493 = scmp.eq.s32.totalorder %s45, 0
      %p494 = por %p492, %p493
      %p495 = scmp.ne.s32.totalorder %s481, %s482
      %p496 = scmp.eq.s32.totalorder %s46, 3
      %p497 = por %p495, %p496
      %p499 = scmp.ne.s32.totalorder %s482, %s498
      %p500 = scmp.eq.s32.totalorder %s46, 0
      %p501 = por %p499, %p500
      %s503 = sadd.s32 %s502, 1
      %p506 = scmp.eq.s32.totalorder %s40, 3
      %p507 = scmp.ne.s32.totalorder %s502, %s504
      %p508 = scmp.eq.s32.totalorder %s40, 0
      %p509 = por %p507, %p508
      %p510 = scmp.ne.s32.totalorder %s502, %s504
      %p511 = scmp.eq.s32.totalorder %s45, 3
      %p512 = por %p510, %p511
      %p513 = scmp.ne.s32.totalorder %s504, %s505
      %p514 = scmp.eq.s32.totalorder %s45, 0
      %p515 = por %p513, %p514
      %p516 = scmp.ne.s32.totalorder %s504, %s505
      %p517 = scmp.eq.s32.totalorder %s46, 3
      %p518 = por %p516, %p517
      %p520 = scmp.ne.s32.totalorder %s505, %s519
      %p521 = scmp.eq.s32.totalorder %s46, 0
      %p522 = por %p520, %p521
      %s524 = sadd.s32 %s523, 1
      %p527 = scmp.eq.s32.totalorder %s40, 3
      %p528 = scmp.ne.s32.totalorder %s523, %s525
      %p529 = scmp.eq.s32.totalorder %s40, 0
      %p530 = por %p528, %p529
      %p531 = scmp.ne.s32.totalorder %s523, %s525
      %p532 = scmp.eq.s32.totalorder %s45, 3
      %p533 = por %p531, %p532
      %p534 = scmp.ne.s32.totalorder %s525, %s526
      %p535 = scmp.eq.s32.totalorder %s45, 0
      %p536 = por %p534, %p535
      %p537 = scmp.ne.s32.totalorder %s525, %s526
      %p538 = scmp.eq.s32.totalorder %s46, 3
      %p539 = por %p537, %p538
      %p541 = scmp.ne.s32.totalorder %s526, %s540
      %p542 = scmp.eq.s32.totalorder %s46, 0
      %p543 = por %p541, %p542
      %s544 = ssub.s32 %s47, %s59
      %p545 = scmp.eq.s32.totalorder %s544, 0
      %s547 = sadd.s32 %s546, 1
      %s548 = scalar_select %p545, %s546, %s547
      %p551 = pneg %p545
      %p552 = scmp.eq.s32.totalorder %s40, 3
      %p553 = por %p551, %p552
      %p554 = scmp.ne.s32.totalorder %s546, %s549
      %p555 = scmp.eq.s32.totalorder %s40, 0
      %p556 = por %p554, %p555
      %p557 = scmp.ne.s32.totalorder %s546, %s549
      %p558 = scmp.eq.s32.totalorder %s45, 3
      %p559 = por %p557, %p558
      %p560 = scmp.ne.s32.totalorder %s549, %s550
      %p561 = scmp.eq.s32.totalorder %s45, 0
      %p562 = por %p560, %p561
      %p563 = scmp.ne.s32.totalorder %s549, %s550
      %p564 = scmp.eq.s32.totalorder %s46, 3
      %p565 = por %p563, %p564
      %p567 = scmp.ne.s32.totalorder %s550, %s566
      %p568 = scmp.eq.s32.totalorder %s46, 0
      %p569 = por %p567, %p568
      %p570 = scmp.le.s32.totalorder 1, %s40
      %p571 = scmp.lt.s32.totalorder %s40, 5
      %p572 = pnand %p570, %p571
      %p573 = pneg %p572
      // Predicated region
      $region9: #{pubmed_clip_embed.1} parent=5 // pred_check
        _
      $region10: #{pubmed_clip_embed.1} parent=5 // pred_check_branch
        %575 = sbr.rel (%p572) target = $region12
      $region11: #{pubmed_clip_embed.1} parent=5 // pred_region
        %s576 = ssub.s32 %s40, 1
        // Predicated region
        $region13: #{pubmed_clip_embed.1} parent=11 // pred_check
          %p577 = pneg %p515
        $region14: #{pubmed_clip_embed.1} parent=11 // pred_check_branch
          %579 = sbr.rel (%p577) target = $region16
        $region15: #{pubmed_clip_embed.1} parent=11 // pred_region
          _
        $region16: #{pubmed_clip_embed.1} parent=11 // pred_fallthru
          _
        // Predicated region
        $region17: #{pubmed_clip_embed.1} parent=11 // pred_check
          %p580 = pneg %p536
        $region18: #{pubmed_clip_embed.1} parent=11 // pred_check_branch
          %582 = sbr.rel (%p580) target = $region20
        $region19: #{pubmed_clip_embed.1} parent=11 // pred_region
          _
        $region20: #{pubmed_clip_embed.1} parent=11 // pred_fallthru
          _
      $region12: #{pubmed_clip_embed.1} parent=5 // pred_fallthru
        _
      %p583 = scmp.lt.s32.totalorder %s40, 4
      // Predicated region
      $region21: #{pubmed_clip_embed.1} parent=5 // pred_check
        %p584 = pneg %p583
      $region22: #{pubmed_clip_embed.1} parent=5 // pred_check_branch
        %586 = sbr.rel (%p584) target = $region24
      $region23: #{pubmed_clip_embed.1} parent=5 // pred_region
        // Predicated region
        $region25: #{pubmed_clip_embed.1} parent=23 // pred_check
          %p587 = pneg %p72
        $region26: #{pubmed_clip_embed.1} parent=23 // pred_check_branch
          %589 = sbr.rel (%p587) target = $region28
        $region27: #{pubmed_clip_embed.1} parent=23 // pred_region
          %s590 = smul.u32 2, %s47
          %p591 = scmp.lt.s32.totalorder %s590, 3
          %s592 = scalar_select %p591, %s590, 3
          %s593 = smul.addr %s592, 8
          %s594 = scalar_lea.vmem %s0, %s593
          %s595 = smul.u32 2, %s47
        $region28: #{pubmed_clip_embed.1} parent=23 // pred_fallthru
          _
        // Predicated region
        $region29: #{pubmed_clip_embed.1} parent=23 // pred_check
          %p596 = pneg %p98
        $region30: #{pubmed_clip_embed.1} parent=23 // pred_check_branch
          %598 = sbr.rel (%p596) target = $region32
        $region31: #{pubmed_clip_embed.1} parent=23 // pred_region
          %p599 = scmp.lt.s32.totalorder %s48, 1
          %s600 = scalar_select %p599, %s48, 1
          %s601 = scalar_lea.vmem %s1, %s600
        $region32: #{pubmed_clip_embed.1} parent=23 // pred_fallthru
          _
        // Predicated region
        $region33: #{pubmed_clip_embed.1} parent=23 // pred_check
          %p602 = pneg %p124
        $region34: #{pubmed_clip_embed.1} parent=23 // pred_check_branch
          %604 = sbr.rel (%p602) target = $region36
        $region35: #{pubmed_clip_embed.1} parent=23 // pred_region
          %p605 = scmp.lt.s32.totalorder %s48, 1
          %s606 = scalar_select %p605, %s48, 1
          %s607 = scalar_lea.vmem %s2, %s606
        $region36: #{pubmed_clip_embed.1} parent=23 // pred_fallthru
          _
        // Predicated region
        $region37: #{pubmed_clip_embed.1} parent=23 // pred_check
          %p608 = pneg %p150
        $region38: #{pubmed_clip_embed.1} parent=23 // pred_check_branch
          %610 = sbr.rel (%p608) target = $region40
        $region39: #{pubmed_clip_embed.1} parent=23 // pred_region
          %p611 = scmp.lt.s32.totalorder %s48, 1
          %s612 = scalar_select %p611, %s48, 1
          %s613 = smul.addr %s612, 16
          %s614 = smul.addr %s613, 4
          %s615 = scalar_lea.vmem %s3, %s614
        $region40: #{pubmed_clip_embed.1} parent=23 // pred_fallthru
          _
        // Predicated region
        $region41: #{pubmed_clip_embed.1} parent=23 // pred_check
          %p616 = pneg %p176
        $region42: #{pubmed_clip_embed.1} parent=23 // pred_check_branch
          %618 = sbr.rel (%p616) target = $region44
        $region43: #{pubmed_clip_embed.1} parent=23 // pred_region
          %p619 = scmp.lt.s32.totalorder %s48, 1
          %s620 = scalar_select %p619, %s48, 1
          %s621 = scalar_lea.vmem %s4, %s620
        $region44: #{pubmed_clip_embed.1} parent=23 // pred_fallthru
          _
        // Predicated region
        $region45: #{pubmed_clip_embed.1} parent=23 // pred_check
          %p622 = pneg %p202
        $region46: #{pubmed_clip_embed.1} parent=23 // pred_check_branch
          %624 = sbr.rel (%p622) target = $region48
        $region47: #{pubmed_clip_embed.1} parent=23 // pred_region
          %p625 = scmp.lt.s32.totalorder %s48, 1
          %s626 = scalar_select %p625, %s48, 1
          %s627 = smul.addr %s626, 16
          %s628 = smul.addr %s627, 4
          %s629 = scalar_lea.vmem %s5, %s628
        $region48: #{pubmed_clip_embed.1} parent=23 // pred_fallthru
          _
        // Predicated region
        $region49: #{pubmed_clip_embed.1} parent=23 // pred_check
          %p630 = pneg %p228
        $region50: #{pubmed_clip_embed.1} parent=23 // pred_check_branch
          %632 = sbr.rel (%p630) target = $region52
        $region51: #{pubmed_clip_embed.1} parent=23 // pred_region
          %s633 = sand.u32 %s218, 1
          %s634 = scalar_lea.sflag [#allocation5], %s633
          %s635 = sand.u32 %s218, 1
          %s636 = scalar_lea.vmem [#allocation4], %s635
          %s638 = ssub.s32 16, 16
          %639 = vsyncadd %s634, %s638
          %s640 = smul.addr %s48, 16
          %s641 = scalar_lea.hbm %s6, %s640
          %s643 = sshll.u32 %s636, 4
          %s644 = int_to_ptr.vmem [resolvable:$true] %s643
          %646 = dma.hbm_to_vmem [thread:$0]  %s641, 16, %s644, %s634
        $region52: #{pubmed_clip_embed.1} parent=23 // pred_fallthru
          _
        // Predicated region
        $region53: #{pubmed_clip_embed.1} parent=23 // pred_check
          %p647 = pneg %p254
        $region54: #{pubmed_clip_embed.1} parent=23 // pred_check_branch
          %649 = sbr.rel (%p647) target = $region56
        $region55: #{pubmed_clip_embed.1} parent=23 // pred_region
          %p650 = scmp.lt.s32.totalorder %s48, 1
          %s651 = scalar_select %p650, %s48, 1
          %s652 = smul.addr %s651, 16
          %s653 = smul.addr %s652, 4
          %s654 = scalar_lea.vmem %s7, %s653
        $region56: #{pubmed_clip_embed.1} parent=23 // pred_fallthru
          _
        // Predicated region
        $region57: #{pubmed_clip_embed.1} parent=23 // pred_check
          %p655 = pneg %p280
        $region58: #{pubmed_clip_embed.1} parent=23 // pred_check_branch
          %657 = sbr.rel (%p655) target = $region60
        $region59: #{pubmed_clip_embed.1} parent=23 // pred_region
          %p658 = scmp.lt.s32.totalorder %s48, 1
          %s659 = scalar_select %p658, %s48, 1
          %s660 = scalar_lea.vmem %s8, %s659
        $region60: #{pubmed_clip_embed.1} parent=23 // pred_fallthru
          _
        // Predicated region
        $region61: #{pubmed_clip_embed.1} parent=23 // pred_check
          %p661 = pneg %p306
        $region62: #{pubmed_clip_embed.1} parent=23 // pred_check_branch
          %663 = sbr.rel (%p661) target = $region64
        $region63: #{pubmed_clip_embed.1} parent=23 // pred_region
          %s664 = sand.u32 %s40, 1
          %s665 = scalar_lea.sflag [#allocation8], %s664
          %s666 = sand.u32 %s296, 1
          %s667 = smul.addr %s666, 64
          %s668 = scalar_lea.vmem [#allocation7], %s667
          %s670 = ssub.s32 1024, 1024
          %671 = vsyncadd %s665, %s670
          %s672 = smul.addr %s48, 16
          %s673 = smul.addr %s672, 64
          %s674 = scalar_lea.hbm %s9, %s673
          %s675 = sshll.u32 %s668, 4
          %s676 = int_to_ptr.vmem [resolvable:$true] %s675
          %681 = dma.hbm_to_vmem [thread:$0]  %s674, 1024, %s676, %s665, 64, 64, 4
        $region64: #{pubmed_clip_embed.1} parent=23 // pred_fallthru
          _
        // Predicated region
        $region65: #{pubmed_clip_embed.1} parent=23 // pred_check
          %p682 = pneg %p332
        $region66: #{pubmed_clip_embed.1} parent=23 // pred_check_branch
          %684 = sbr.rel (%p682) target = $region68
        $region67: #{pubmed_clip_embed.1} parent=23 // pred_region
          %s685 = sand.u32 %s40, 1
          %s686 = scalar_lea.sflag [#allocation8], %s685
          %s687 = sand.u32 %s322, 1
          %s688 = scalar_lea.vmem [#allocation9], %s687
          %s690 = ssub.s32 16, 16
          %691 = vsyncadd %s686, %s690
          %s692 = smul.addr %s48, 16
          %s693 = scalar_lea.hbm %s10, %s692
          %s695 = sshll.u32 %s688, 4
          %s696 = int_to_ptr.vmem [resolvable:$true] %s695
          %698 = dma.hbm_to_vmem [thread:$0]  %s693, 16, %s696, %s686
        $region68: #{pubmed_clip_embed.1} parent=23 // pred_fallthru
          _
        // Predicated region
        $region69: #{pubmed_clip_embed.1} parent=23 // pred_check
          %p699 = pneg %p358
        $region70: #{pubmed_clip_embed.1} parent=23 // pred_check_branch
          %701 = sbr.rel (%p699) target = $region72
        $region71: #{pubmed_clip_embed.1} parent=23 // pred_region
          %p702 = scmp.lt.s32.totalorder %s48, 1
          %s703 = scalar_select %p702, %s48, 1
          %s704 = scalar_lea.vmem %s11, %s703
        $region72: #{pubmed_clip_embed.1} parent=23 // pred_fallthru
          _
        // Predicated region
        $region73: #{pubmed_clip_embed.1} parent=23 // pred_check
          %p705 = pneg %p384
        $region74: #{pubmed_clip_embed.1} parent=23 // pred_check_branch
          %707 = sbr.rel (%p705) target = $region76
        $region75: #{pubmed_clip_embed.1} parent=23 // pred_region
          %p708 = scmp.lt.s32.totalorder %s48, 1
          %s709 = scalar_select %p708, %s48, 1
          %s710 = scalar_lea.vmem %s12, %s709
        $region76: #{pubmed_clip_embed.1} parent=23 // pred_fallthru
          _
        // Predicated region
        $region77: #{pubmed_clip_embed.1} parent=23 // pred_check
          %p711 = pneg %p410
        $region78: #{pubmed_clip_embed.1} parent=23 // pred_check_branch
          %713 = sbr.rel (%p711) target = $region80
        $region79: #{pubmed_clip_embed.1} parent=23 // pred_region
          %s714 = sand.u32 %s40, 1
          %s715 = scalar_lea.sflag [#allocation11], %s714
          %s716 = sand.u32 %s400, 1
          %s717 = smul.addr %s716, 256
          %s718 = scalar_lea.vmem [#allocation10], %s717
          %s720 = ssub.s32 4096, 4096
          %721 = vsyncadd %s715, %s720
          %s722 = smul.addr %s48, 64
          %s723 = smul.addr %s722, 64
          %s724 = scalar_lea.hbm %s13, %s723
          %s725 = sshll.u32 %s718, 4
          %s726 = int_to_ptr.vmem [resolvable:$true] %s725
          %731 = dma.hbm_to_vmem [thread:$0]  %s724, 4096, %s726, %s715, 256, 256, 16
        $region80: #{pubmed_clip_embed.1} parent=23 // pred_fallthru
          _
        // Predicated region
        $region81: #{pubmed_clip_embed.1} parent=23 // pred_check
          %p732 = pneg %p436
        $region82: #{pubmed_clip_embed.1} parent=23 // pred_check_branch
          %734 = sbr.rel (%p732) target = $region84
        $region83: #{pubmed_clip_embed.1} parent=23 // pred_region
          %s735 = sand.u32 %s40, 1
          %s736 = scalar_lea.sflag [#allocation11], %s735
          %s737 = sand.u32 %s426, 1
          %s738 = smul.addr %s737, 4
          %s739 = scalar_lea.vmem [#allocation12], %s738
          %s741 = ssub.s32 64, 64
          %742 = vsyncadd %s736, %s741
          %s743 = smul.addr %s48, 4
          %s744 = smul.addr %s743, 16
          %s745 = scalar_lea.hbm %s14, %s744
          %s747 = sshll.u32 %s739, 4
          %s748 = int_to_ptr.vmem [resolvable:$true] %s747
          %750 = dma.hbm_to_vmem [thread:$0]  %s745, 64, %s748, %s736
        $region84: #{pubmed_clip_embed.1} parent=23 // pred_fallthru
          _
        // Predicated region
        $region85: #{pubmed_clip_embed.1} parent=23 // pred_check
          %p751 = pneg %p462
        $region86: #{pubmed_clip_embed.1} parent=23 // pred_check_branch
          %753 = sbr.rel (%p751) target = $region88
        $region87: #{pubmed_clip_embed.1} parent=23 // pred_region
          %s754 = sand.u32 %s40, 1
          %s755 = scalar_lea.sflag [#allocation14], %s754
          %s756 = sand.u32 %s452, 1
          %s757 = smul.addr %s756, 256
          %s758 = scalar_lea.vmem [#allocation13], %s757
          %s760 = ssub.s32 4096, 4096
          %761 = vsyncadd %s755, %s760
          %s762 = smul.addr %s48, 64
          %s763 = smul.addr %s762, 64
          %s764 = scalar_lea.hbm %s15, %s763
          %s765 = sshll.u32 %s758, 4
          %s766 = int_to_ptr.vmem [resolvable:$true] %s765
          %771 = dma.hbm_to_vmem [thread:$0]  %s764, 4096, %s766, %s755, 64, 64, 4
        $region88: #{pubmed_clip_embed.1} parent=23 // pred_fallthru
          _
        // Predicated region
        $region89: #{pubmed_clip_embed.1} parent=23 // pred_check
          %p772 = pneg %p488
        $region90: #{pubmed_clip_embed.1} parent=23 // pred_check_branch
          %774 = sbr.rel (%p772) target = $region92
        $region91: #{pubmed_clip_embed.1} parent=23 // pred_region
          %s775 = sand.u32 %s40, 1
          %s776 = scalar_lea.sflag [#allocation14], %s775
          %s777 = sand.u32 %s478, 1
          %s778 = scalar_lea.vmem [#allocation15], %s777
          %s780 = ssub.s32 16, 16
          %781 = vsyncadd %s776, %s780
          %s782 = smul.addr %s48, 16
          %s783 = scalar_lea.hbm %s16, %s782
          %s785 = sshll.u32 %s778, 4
          %s786 = int_to_ptr.vmem [resolvable:$true] %s785
          %788 = dma.hbm_to_vmem [thread:$0]  %s783, 16, %s786, %s776
        $region92: #{pubmed_clip_embed.1} parent=23 // pred_fallthru
          _
      $region24: #{pubmed_clip_embed.1} parent=5 // pred_fallthru
        _
      %p789 = scmp.le.s32.totalorder 1, %s40
      %p790 = scmp.lt.s32.totalorder %s40, 5
      %p791 = pnand %p789, %p790
      %p792 = pneg %p791
      // Predicated region
      $region93: #{pubmed_clip_embed.1} parent=5 // pred_check
        _
      $region94: #{pubmed_clip_embed.1} parent=5 // pred_check_branch
        %794 = sbr.rel (%p791) target = $region96
      $region95: #{pubmed_clip_embed.1} parent=5 // pred_region
        %s795 = ssub.s32 %s40, 1
        %s796 = sand.u32 %s221, 1
        %s797 = scalar_lea.sflag [#allocation5], %s796
        %s798 = sand.u32 %s221, 1
        %s799 = scalar_lea.vmem [#allocation4], %s798
        // Predicated region
        $region97: #{pubmed_clip_embed.1} parent=95 // pred_check
          %p800 = pneg %p234
        $region98: #{pubmed_clip_embed.1} parent=95 // pred_check_branch
          %802 = sbr.rel (%p800) target = $region100
        $region99: #{pubmed_clip_embed.1} parent=95 // pred_region
          %803 = dma.done %s797, 16
        $region100: #{pubmed_clip_embed.1} parent=95 // pred_fallthru
          _
        %s804 = sand.u32 %s45, 1
        %s805 = scalar_lea.sflag [#allocation8], %s804
        %s806 = sand.u32 %s299, 1
        %s807 = smul.addr %s806, 64
        %s808 = scalar_lea.vmem [#allocation7], %s807
        // Predicated region
        $region101: #{pubmed_clip_embed.1} parent=95 // pred_check
          %p809 = pneg %p312
        $region102: #{pubmed_clip_embed.1} parent=95 // pred_check_branch
          %811 = sbr.rel (%p809) target = $region104
        $region103: #{pubmed_clip_embed.1} parent=95 // pred_region
          %812 = dma.done %s805, 1024
        $region104: #{pubmed_clip_embed.1} parent=95 // pred_fallthru
          _
        %s813 = sand.u32 %s45, 1
        %s814 = scalar_lea.sflag [#allocation8], %s813
        %s815 = sand.u32 %s325, 1
        %s816 = scalar_lea.vmem [#allocation9], %s815
        // Predicated region
        $region105: #{pubmed_clip_embed.1} parent=95 // pred_check
          %p817 = pneg %p338
        $region106: #{pubmed_clip_embed.1} parent=95 // pred_check_branch
          %819 = sbr.rel (%p817) target = $region108
        $region107: #{pubmed_clip_embed.1} parent=95 // pred_region
          %820 = dma.done %s814, 16
        $region108: #{pubmed_clip_embed.1} parent=95 // pred_fallthru
          _
        %s821 = sand.u32 %s45, 1
        %s822 = scalar_lea.sflag [#allocation11], %s821
        %s823 = sand.u32 %s403, 1
        %s824 = smul.addr %s823, 256
        %s825 = scalar_lea.vmem [#allocation10], %s824
        // Predicated region
        $region109: #{pubmed_clip_embed.1} parent=95 // pred_check
          %p826 = pneg %p416
        $region110: #{pubmed_clip_embed.1} parent=95 // pred_check_branch
          %828 = sbr.rel (%p826) target = $region112
        $region111: #{pubmed_clip_embed.1} parent=95 // pred_region
          %829 = dma.done %s822, 4096
        $region112: #{pubmed_clip_embed.1} parent=95 // pred_fallthru
          _
        %s830 = sand.u32 %s45, 1
        %s831 = scalar_lea.sflag [#allocation11], %s830
        %s832 = sand.u32 %s429, 1
        %s833 = smul.addr %s832, 4
        %s834 = scalar_lea.vmem [#allocation12], %s833
        // Predicated region
        $region113: #{pubmed_clip_embed.1} parent=95 // pred_check
          %p835 = pneg %p442
        $region114: #{pubmed_clip_embed.1} parent=95 // pred_check_branch
          %837 = sbr.rel (%p835) target = $region116
        $region115: #{pubmed_clip_embed.1} parent=95 // pred_region
          %838 = dma.done %s831, 64
        $region116: #{pubmed_clip_embed.1} parent=95 // pred_fallthru
          _
        %s839 = sand.u32 %s45, 1
        %s840 = scalar_lea.sflag [#allocation14], %s839
        %s841 = sand.u32 %s455, 1
        %s842 = smul.addr %s841, 256
        %s843 = scalar_lea.vmem [#allocation13], %s842
        // Predicated region
        $region117: #{pubmed_clip_embed.1} parent=95 // pred_check
          %p844 = pneg %p468
        $region118: #{pubmed_clip_embed.1} parent=95 // pred_check_branch
          %846 = sbr.rel (%p844) target = $region120
        $region119: #{pubmed_clip_embed.1} parent=95 // pred_region
          %847 = dma.done %s840, 4096
        $region120: #{pubmed_clip_embed.1} parent=95 // pred_fallthru
          _
        %s848 = sand.u32 %s45, 1
        %s849 = scalar_lea.sflag [#allocation14], %s848
        %s850 = sand.u32 %s481, 1
        %s851 = scalar_lea.vmem [#allocation15], %s850
        // Predicated region
        $region121: #{pubmed_clip_embed.1} parent=95 // pred_check
          %p852 = pneg %p494
        $region122: #{pubmed_clip_embed.1} parent=95 // pred_check_branch
          %854 = sbr.rel (%p852) target = $region124
        $region123: #{pubmed_clip_embed.1} parent=95 // pred_region
          %855 = dma.done %s849, 16
        $region124: #{pubmed_clip_embed.1} parent=95 // pred_fallthru
          _
        %s856 = smul.u32 2, %s49
        %p857 = scmp.lt.s32.totalorder %s856, 3
        %s858 = scalar_select %p857, %s856, 3
        %s859 = smul.addr %s858, 8
        %s860 = scalar_lea.vmem %s0, %s859
        %p861 = pneg %p78
        %p862 = pneg %p75
        %p863 = scmp.lt.s32.totalorder %s50, 1
        %s864 = scalar_select %p863, %s50, 1
        %s865 = scalar_lea.vmem %s1, %s864
        %p866 = pneg %p104
        %p867 = pneg %p101
        %p868 = scmp.lt.s32.totalorder %s50, 1
        %s869 = scalar_select %p868, %s50, 1
        %s870 = scalar_lea.vmem %s2, %s869
        %p871 = pneg %p130
        %p872 = pneg %p127
        %p873 = scmp.lt.s32.totalorder %s50, 1
        %s874 = scalar_select %p873, %s50, 1
        %s875 = smul.addr %s874, 16
        %s876 = smul.addr %s875, 4
        %s877 = scalar_lea.vmem %s3, %s876
        %p878 = pneg %p156
        %p879 = pneg %p153
        %p880 = scmp.lt.s32.totalorder %s50, 1
        %s881 = scalar_select %p880, %s50, 1
        %s882 = scalar_lea.vmem %s4, %s881
        %p883 = pneg %p182
        %p884 = pneg %p179
        %p885 = scmp.lt.s32.totalorder %s50, 1
        %s886 = scalar_select %p885, %s50, 1
        %s887 = smul.addr %s886, 16
        %s888 = smul.addr %s887, 4
        %s889 = scalar_lea.vmem %s5, %s888
        %p890 = pneg %p208
        %p891 = pneg %p205
        %s892 = sand.u32 %s221, 1
        %s893 = scalar_lea.sflag [#allocation5], %s892
        %s894 = sand.u32 %s221, 1
        %s895 = scalar_lea.vmem [#allocation4], %s894
        %p896 = pneg %p234
        %p897 = pneg %p231
        %p898 = scmp.lt.s32.totalorder %s50, 1
        %s899 = scalar_select %p898, %s50, 1
        %s900 = smul.addr %s899, 16
        %s901 = smul.addr %s900, 4
        %s902 = scalar_lea.vmem %s7, %s901
        %p903 = pneg %p260
        %p904 = pneg %p257
        %p905 = scmp.lt.s32.totalorder %s50, 1
        %s906 = scalar_select %p905, %s50, 1
        %s907 = scalar_lea.vmem %s8, %s906
        %p908 = pneg %p286
        %p909 = pneg %p283
        %s910 = sand.u32 %s45, 1
        %s911 = scalar_lea.sflag [#allocation8], %s910
        %s912 = sand.u32 %s299, 1
        %s913 = smul.addr %s912, 64
        %s914 = scalar_lea.vmem [#allocation7], %s913
        %p915 = pneg %p312
        %p916 = pneg %p309
        %s917 = sand.u32 %s45, 1
        %s918 = scalar_lea.sflag [#allocation8], %s917
        %s919 = sand.u32 %s325, 1
        %s920 = scalar_lea.vmem [#allocation9], %s919
        %p921 = pneg %p338
        %p922 = pneg %p335
        %p923 = scmp.lt.s32.totalorder %s50, 1
        %s924 = scalar_select %p923, %s50, 1
        %s925 = scalar_lea.vmem %s11, %s924
        %p926 = pneg %p364
        %p927 = pneg %p361
        %p928 = scmp.lt.s32.totalorder %s50, 1
        %s929 = scalar_select %p928, %s50, 1
        %s930 = scalar_lea.vmem %s12, %s929
        %p931 = pneg %p390
        %p932 = pneg %p387
        %s933 = sand.u32 %s45, 1
        %s934 = scalar_lea.sflag [#allocation11], %s933
        %s935 = sand.u32 %s403, 1
        %s936 = smul.addr %s935, 256
        %s937 = scalar_lea.vmem [#allocation10], %s936
        %p938 = pneg %p416
        %p939 = pneg %p413
        %s940 = sand.u32 %s45, 1
        %s941 = scalar_lea.sflag [#allocation11], %s940
        %s942 = sand.u32 %s429, 1
        %s943 = smul.addr %s942, 4
        %s944 = scalar_lea.vmem [#allocation12], %s943
        %p945 = pneg %p442
        %p946 = pneg %p439
        %s947 = sand.u32 %s45, 1
        %s948 = scalar_lea.sflag [#allocation14], %s947
        %s949 = sand.u32 %s455, 1
        %s950 = smul.addr %s949, 256
        %s951 = scalar_lea.vmem [#allocation13], %s950
        %p952 = pneg %p468
        %p953 = pneg %p465
        %s954 = sand.u32 %s45, 1
        %s955 = scalar_lea.sflag [#allocation14], %s954
        %s956 = sand.u32 %s481, 1
        %s957 = scalar_lea.vmem [#allocation15], %s956
        %p958 = pneg %p494
        %p959 = pneg %p491
        %p960 = pneg %p515
        %p961 = pneg %p512
        %p962 = pneg %p536
        %p963 = pneg %p533
        %p964 = pneg %p562
        %p965 = pneg %p559
        %s966 = sand.u32 %s549, 1
        %s967 = scalar_lea.sflag [#allocation6], %s966
        %s968 = sand.u32 %s549, 1
        %s969 = smul.addr %s968, 16
        %s970 = scalar_lea.vmem [#allocation16], %s969
        %s971 = smul.u32 2, %s49
        %p972 = scmp.lt.s32.totalorder %s971, 3
        %s973 = scalar_select %p972, %s971, 3
        %s974 = smul.addr %s973, 8
        %s975 = scalar_lea.vmem %s0, %s974
        %s976 = smul.u32 2, %s49
        %p977 = scmp.lt.s32.totalorder %s50, 1
        %s978 = scalar_select %p977, %s50, 1
        %s979 = scalar_lea.vmem %s1, %s978
        %p980 = scmp.lt.s32.totalorder %s50, 1
        %s981 = scalar_select %p980, %s50, 1
        %s982 = scalar_lea.vmem %s2, %s981
        %p983 = scmp.lt.s32.totalorder %s50, 1
        %s984 = scalar_select %p983, %s50, 1
        %s985 = smul.addr %s984, 16
        %s986 = smul.addr %s985, 4
        %s987 = scalar_lea.vmem %s3, %s986
        %p988 = scmp.lt.s32.totalorder %s50, 1
        %s989 = scalar_select %p988, %s50, 1
        %s990 = scalar_lea.vmem %s4, %s989
        %p991 = scmp.lt.s32.totalorder %s50, 1
        %s992 = scalar_select %p991, %s50, 1
        %s993 = smul.addr %s992, 16
        %s994 = smul.addr %s993, 4
        %s995 = scalar_lea.vmem %s5, %s994
        %p996 = scmp.lt.s32.totalorder %s50, 1
        %s997 = scalar_select %p996, %s50, 1
        %s998 = smul.addr %s997, 16
        %s999 = smul.addr %s998, 4
        %s1000 = scalar_lea.vmem %s7, %s999
        %p1001 = scmp.lt.s32.totalorder %s50, 1
        %s1002 = scalar_select %p1001, %s50, 1
        %s1003 = scalar_lea.vmem %s8, %s1002
        %p1004 = scmp.lt.s32.totalorder %s50, 1
        %s1005 = scalar_select %p1004, %s50, 1
        %s1006 = scalar_lea.vmem %s11, %s1005
        %p1007 = scmp.lt.s32.totalorder %s50, 1
        %s1008 = scalar_select %p1007, %s50, 1
        %s1009 = scalar_lea.vmem %s12, %s1008
        %s1010 = smul.u32 2, %s49
        %p1012 = scmp.eq.s32.totalorder %s50, 0
        // Predicated region
        $region125: #{pubmed_clip_embed.1} parent=95 // pred_check
          %p1013 = pneg %p1012
        $region126: #{pubmed_clip_embed.1} parent=95 // pred_check_branch
          %1015 = sbr.rel (%p1013) target = $region128
        $region127: #{pubmed_clip_embed.1} parent=95 // pred_region
          %v1016 = vld [vmem:[%s975] sm:$0xff]
          %v1017 = vld [vmem:[%s975 + $0x8] sm:$0xff]
          %1018 = vst [vmem:[#allocation2] sm:$0xff] %v1016
          %1019 = vst [vmem:[#allocation2 + $0x8] sm:$0xff] %v1017
        $region128: #{pubmed_clip_embed.1} parent=95 // pred_fallthru
          _
        %v1020 = vld [vmem:[#allocation2] sm:$0xff]
        %v1021 = vld [vmem:[#allocation2 + $0x8] sm:$0xff]
        %v1022 = vld [vmem:[%s979] sm:$0x1]
        %v1023 = vld [vmem:[%s982] sm:$0x1]
        %1024 = vadd.xlane.f32.xlu0 %v1020
        %v1025 = vpop.xlane.xlu0 %1024
        %1026 = vadd.xlane.f32.xlu0 %v1021
        %v1027 = vpop.xlane.xlu0 %1026
        %v1028 = vrcp.pop 128.0
        %v1029 = vmul.f32 %v1025, %v1028
        %v1030 = vmul.f32 %v1027, %v1028
        %v1031 = vsub.f32 %v1020, %v1029
        %v1032 = vsub.f32 %v1021, %v1030
        %v1033 = vmul.f32 %v1031, %v1031
        %v1034 = vmul.f32 %v1032, %v1032
        %1035 = vadd.xlane.f32.xlu0 %v1033
        %v1036 = vpop.xlane.xlu0 %1035
        %1037 = vadd.xlane.f32.xlu0 %v1034
        %v1038 = vpop.xlane.xlu0 %1037
        %v1039 = vmul.f32 %v1036, %v1028
        %v1040 = vmul.f32 %v1038, %v1028
        %v1041 = vadd.f32 %v1039, 1e-05
        %v1042 = vadd.f32 %v1040, 1e-05
        %v1043 = vrsqrt.pop %v1041
        %v1044 = vrsqrt.pop %v1042
        %v1045 = vmul.f32 %v1031, %v1043
        %v1046 = vmul.f32 %v1032, %v1044
        %v1048 = vlaneseq
        %v1049 = vshrl.u32 %v1048, 7
        %v1050 = vsub.s32 0, %v1049
        %v1051 = vrot.slane %v1022, %v1050
        %v1053 = vmul.f32 %v1045, %v1051
        %v1054 = vmul.f32 %v1046, %v1051
        %v1056 = vlaneseq
        %v1057 = vshrl.u32 %v1056, 7
        %v1058 = vsub.s32 0, %v1057
        %v1059 = vrot.slane %v1023, %v1058
        %v1061 = vadd.f32 %v1053, %v1059
        %v1062 = vadd.f32 %v1054, %v1059
        %v1063 = vpack.c.bf16 %v1062, %v1061
        %v1064 = vld [vmem:[%s987] sm:$0xf]
        %v1065 = vld [vmem:[%s987 + $0x4] sm:$0xf]
        %v1066 = vld [vmem:[%s987 + $0x8] sm:$0xf]
        %v1067 = vld [vmem:[%s987 + $0xc] sm:$0xf]
        %v1068 = vld [vmem:[%s987 + $0x10] sm:$0xf]
        %v1069 = vld [vmem:[%s987 + $0x14] sm:$0xf]
        %v1070 = vld [vmem:[%s987 + $0x18] sm:$0xf]
        %v1071 = vld [vmem:[%s987 + $0x1c] sm:$0xf]
        %v1072 = vld [vmem:[%s987 + $0x20] sm:$0xf]
        %v1073 = vld [vmem:[%s987 + $0x24] sm:$0xf]
        %v1074 = vld [vmem:[%s987 + $0x28] sm:$0xf]
        %v1075 = vld [vmem:[%s987 + $0x2c] sm:$0xf]
        %v1076 = vld [vmem:[%s987 + $0x30] sm:$0xf]
        %v1077 = vld [vmem:[%s987 + $0x34] sm:$0xf]
        %v1078 = vld [vmem:[%s987 + $0x38] sm:$0xf]
        %v1079 = vld [vmem:[%s987 + $0x3c] sm:$0xf]
        %v1080 = vld [vmem:[%s990] sm:$0x1]
        %v1082 = vlaneseq
        %v1083 = vshrl.u32 %v1082, 7
        %v1084 = vsub.s32 0, %v1083
        %v1085 = vrot.slane %v1080, %v1084
        %v1103 = vunpack.c.l.b16 %v1064
        %v1104 = vunpack.c.l.b16 %v1065
        %v1105 = vunpack.c.l.b16 %v1066
        %v1106 = vunpack.c.l.b16 %v1067
        %v1107 = vunpack.c.l.b16 %v1068
        %v1108 = vunpack.c.l.b16 %v1069
        %v1109 = vunpack.c.l.b16 %v1070
        %v1110 = vunpack.c.l.b16 %v1071
        %v1111 = vunpack.c.l.b16 %v1072
        %v1112 = vunpack.c.l.b16 %v1073
        %v1113 = vunpack.c.l.b16 %v1074
        %v1114 = vunpack.c.l.b16 %v1075
        %v1115 = vunpack.c.l.b16 %v1076
        %v1116 = vunpack.c.l.b16 %v1077
        %v1117 = vunpack.c.l.b16 %v1078
        %v1118 = vunpack.c.l.b16 %v1079
        %v1119 = vpack.c.b16 %v1104, %v1103
        %v1120 = vpack.c.b16 %v1106, %v1105
        %v1121 = vpack.c.b16 %v1108, %v1107
        %v1122 = vpack.c.b16 %v1110, %v1109
        %v1123 = vpack.c.b16 %v1112, %v1111
        %v1124 = vpack.c.b16 %v1114, %v1113
        %v1125 = vpack.c.b16 %v1116, %v1115
        %v1126 = vpack.c.b16 %v1118, %v1117
        %1135 = vmatprep.subr.bf16.mxu0 0
        %1136 = vmatpush1.bf16.msra.mxu0 %v1119
        %1137 = vmatprep.subr.bf16.mxu0 0
        %1138 = vmatpush1.bf16.msra.mxu0 %v1120
        %1139 = vmatprep.subr.bf16.mxu0 0
        %1140 = vmatpush1.bf16.msra.mxu0 %v1121
        %1141 = vmatprep.subr.bf16.mxu0 0
        %1142 = vmatpush1.bf16.msra.mxu0 %v1122
        %1143 = vmatprep.subr.bf16.mxu0 0
        %1144 = vmatpush1.bf16.msra.mxu0 %v1123
        %1145 = vmatprep.subr.bf16.mxu0 0
        %1146 = vmatpush1.bf16.msra.mxu0 %v1124
        %1147 = vmatprep.subr.bf16.mxu0 0
        %1148 = vmatpush1.bf16.msra.mxu0 %v1125
        %1149 = vmatprep.subr.bf16.mxu0 0
        %1150 = vmatpush1.bf16.msra.mxu0 %v1126
        %1151 = vmatprep.subr.bf16.mxu0 0
        %1152 = vmatpush1.bf16.msra.mxu0 0
        %1153 = vmatprep.subr.bf16.mxu0 0
        %1154 = vmatpush1.bf16.msra.mxu0 0
        %1155 = vmatprep.subr.bf16.mxu0 0
        %1156 = vmatpush1.bf16.msra.mxu0 0
        %1157 = vmatprep.subr.bf16.mxu0 0
        %1158 = vmatpush1.bf16.msra.mxu0 0
        %1159 = vmatprep.subr.bf16.mxu0 0
        %1160 = vmatpush1.bf16.msra.mxu0 0
        %1161 = vmatprep.subr.bf16.mxu0 0
        %1162 = vmatpush1.bf16.msra.mxu0 0
        %1163 = vmatprep.subr.bf16.mxu0 0
        %1164 = vmatpush1.bf16.msra.mxu0 0
        %1165 = vmatprep.subr.bf16.mxu0 0
        %1166 = vmatpush1.bf16.msra.mxu0 0
        %1167 = vmatprep.mubr.bf16.mxu0 0
        %1168 = vmatmul.mubr.bf16.gmra.mrb[0].mxu0 %v1063
        %v1169 = vpop.f32.mrb[0].mxu0
        %v1170 = vadd.f32 %v1085, %v1169
        %v1171 = vpop.f32.mrb[0].mxu0
        %v1172 = vpop.f32.mrb[0].mxu0
        %v1173 = vadd.f32 %v1085, %v1172
        %v1174 = vpop.f32.mrb[0].mxu0
        %1175 = vdwg.mxu0
        %v1176 = vld [vmem:[%s995] sm:$0xf]
        %v1177 = vld [vmem:[%s995 + $0x4] sm:$0xf]
        %v1178 = vld [vmem:[%s995 + $0x8] sm:$0xf]
        %v1179 = vld [vmem:[%s995 + $0xc] sm:$0xf]
        %v1180 = vld [vmem:[%s995 + $0x10] sm:$0xf]
        %v1181 = vld [vmem:[%s995 + $0x14] sm:$0xf]
        %v1182 = vld [vmem:[%s995 + $0x18] sm:$0xf]
        %v1183 = vld [vmem:[%s995 + $0x1c] sm:$0xf]
        %v1184 = vld [vmem:[%s995 + $0x20] sm:$0xf]
        %v1185 = vld [vmem:[%s995 + $0x24] sm:$0xf]
        %v1186 = vld [vmem:[%s995 + $0x28] sm:$0xf]
        %v1187 = vld [vmem:[%s995 + $0x2c] sm:$0xf]
        %v1188 = vld [vmem:[%s995 + $0x30] sm:$0xf]
        %v1189 = vld [vmem:[%s995 + $0x34] sm:$0xf]
        %v1190 = vld [vmem:[%s995 + $0x38] sm:$0xf]
        %v1191 = vld [vmem:[%s995 + $0x3c] sm:$0xf]
        %v1192 = vld [vmem:[%s799] sm:$0x1]
        %v1194 = vlaneseq
        %v1195 = vshrl.u32 %v1194, 7
        %v1196 = vsub.s32 0, %v1195
        %v1197 = vrot.slane %v1192, %v1196
        %v1215 = vunpack.c.l.b16 %v1176
        %v1216 = vunpack.c.l.b16 %v1177
        %v1217 = vunpack.c.l.b16 %v1178
        %v1218 = vunpack.c.l.b16 %v1179
        %v1219 = vunpack.c.l.b16 %v1180
        %v1220 = vunpack.c.l.b16 %v1181
        %v1221 = vunpack.c.l.b16 %v1182
        %v1222 = vunpack.c.l.b16 %v1183
        %v1223 = vunpack.c.l.b16 %v1184
        %v1224 = vunpack.c.l.b16 %v1185
        %v1225 = vunpack.c.l.b16 %v1186
        %v1226 = vunpack.c.l.b16 %v1187
        %v1227 = vunpack.c.l.b16 %v1188
        %v1228 = vunpack.c.l.b16 %v1189
        %v1229 = vunpack.c.l.b16 %v1190
        %v1230 = vunpack.c.l.b16 %v1191
        %v1231 = vpack.c.b16 %v1216, %v1215
        %v1232 = vpack.c.b16 %v1218, %v1217
        %v1233 = vpack.c.b16 %v1220, %v1219
        %v1234 = vpack.c.b16 %v1222, %v1221
        %v1235 = vpack.c.b16 %v1224, %v1223
        %v1236 = vpack.c.b16 %v1226, %v1225
        %v1237 = vpack.c.b16 %v1228, %v1227
        %v1238 = vpack.c.b16 %v1230, %v1229
        %1247 = vmatprep.subr.bf16.mxu0 0
        %1248 = vmatpush1.bf16.msra.mxu0 %v1231
        %1249 = vmatprep.subr.bf16.mxu0 0
        %1250 = vmatpush1.bf16.msra.mxu0 %v1232
        %1251 = vmatprep.subr.bf16.mxu0 0
        %1252 = vmatpush1.bf16.msra.mxu0 %v1233
        %1253 = vmatprep.subr.bf16.mxu0 0
        %1254 = vmatpush1.bf16.msra.mxu0 %v1234
        %1255 = vmatprep.subr.bf16.mxu0 0
        %1256 = vmatpush1.bf16.msra.mxu0 %v1235
        %1257 = vmatprep.subr.bf16.mxu0 0
        %1258 = vmatpush1.bf16.msra.mxu0 %v1236
        %1259 = vmatprep.subr.bf16.mxu0 0
        %1260 = vmatpush1.bf16.msra.mxu0 %v1237
        %1261 = vmatprep.subr.bf16.mxu0 0
        %1262 = vmatpush1.bf16.msra.mxu0 %v1238
        %1263 = vmatprep.subr.bf16.mxu0 0
        %1264 = vmatpush1.bf16.msra.mxu0 0
        %1265 = vmatprep.subr.bf16.mxu0 0
        %1266 = vmatpush1.bf16.msra.mxu0 0
        %1267 = vmatprep.subr.bf16.mxu0 0
        %1268 = vmatpush1.bf16.msra.mxu0 0
        %1269 = vmatprep.subr.bf16.mxu0 0
        %1270 = vmatpush1.bf16.msra.mxu0 0
        %1271 = vmatprep.subr.bf16.mxu0 0
        %1272 = vmatpush1.bf16.msra.mxu0 0
        %1273 = vmatprep.subr.bf16.mxu0 0
        %1274 = vmatpush1.bf16.msra.mxu0 0
        %1275 = vmatprep.subr.bf16.mxu0 0
        %1276 = vmatpush1.bf16.msra.mxu0 0
        %1277 = vmatprep.subr.bf16.mxu0 0
        %1278 = vmatpush1.bf16.msra.mxu0 0
        %1279 = vmatprep.mubr.bf16.mxu0 0
        %1280 = vmatmul.mubr.bf16.gmra.mrb[0].mxu0 %v1063
        %v1281 = vpop.f32.mrb[0].mxu0
        %v1282 = vadd.f32 %v1197, %v1281
        %v1283 = vpop.f32.mrb[0].mxu0
        %v1284 = vpop.f32.mrb[0].mxu0
        %v1285 = vadd.f32 %v1197, %v1284
        %v1286 = vpop.f32.mrb[0].mxu0
        %1287 = vdwg.mxu0
        %v1288 = vld [vmem:[%s1000] sm:$0xf]
        %v1289 = vld [vmem:[%s1000 + $0x4] sm:$0xf]
        %v1290 = vld [vmem:[%s1000 + $0x8] sm:$0xf]
        %v1291 = vld [vmem:[%s1000 + $0xc] sm:$0xf]
        %v1292 = vld [vmem:[%s1000 + $0x10] sm:$0xf]
        %v1293 = vld [vmem:[%s1000 + $0x14] sm:$0xf]
        %v1294 = vld [vmem:[%s1000 + $0x18] sm:$0xf]
        %v1295 = vld [vmem:[%s1000 + $0x1c] sm:$0xf]
        %v1296 = vld [vmem:[%s1000 + $0x20] sm:$0xf]
        %v1297 = vld [vmem:[%s1000 + $0x24] sm:$0xf]
        %v1298 = vld [vmem:[%s1000 + $0x28] sm:$0xf]
        %v1299 = vld [vmem:[%s1000 + $0x2c] sm:$0xf]
        %v1300 = vld [vmem:[%s1000 + $0x30] sm:$0xf]
        %v1301 = vld [vmem:[%s1000 + $0x34] sm:$0xf]
        %v1302 = vld [vmem:[%s1000 + $0x38] sm:$0xf]
        %v1303 = vld [vmem:[%s1000 + $0x3c] sm:$0xf]
        %v1304 = vld [vmem:[%s1003] sm:$0x1]
        %v1306 = vlaneseq
        %v1307 = vshrl.u32 %v1306, 7
        %v1308 = vsub.s32 0, %v1307
        %v1309 = vrot.slane %v1304, %v1308
        %v1327 = vunpack.c.l.b16 %v1288
        %v1328 = vunpack.c.l.b16 %v1289
        %v1329 = vunpack.c.l.b16 %v1290
        %v1330 = vunpack.c.l.b16 %v1291
        %v1331 = vunpack.c.l.b16 %v1292
        %v1332 = vunpack.c.l.b16 %v1293
        %v1333 = vunpack.c.l.b16 %v1294
        %v1334 = vunpack.c.l.b16 %v1295
        %v1335 = vunpack.c.l.b16 %v1296
        %v1336 = vunpack.c.l.b16 %v1297
        %v1337 = vunpack.c.l.b16 %v1298
        %v1338 = vunpack.c.l.b16 %v1299
        %v1339 = vunpack.c.l.b16 %v1300
        %v1340 = vunpack.c.l.b16 %v1301
        %v1341 = vunpack.c.l.b16 %v1302
        %v1342 = vunpack.c.l.b16 %v1303
        %v1343 = vpack.c.b16 %v1328, %v1327
        %v1344 = vpack.c.b16 %v1330, %v1329
        %v1345 = vpack.c.b16 %v1332, %v1331
        %v1346 = vpack.c.b16 %v1334, %v1333
        %v1347 = vpack.c.b16 %v1336, %v1335
        %v1348 = vpack.c.b16 %v1338, %v1337
        %v1349 = vpack.c.b16 %v1340, %v1339
        %v1350 = vpack.c.b16 %v1342, %v1341
        %1359 = vmatprep.subr.bf16.mxu0 0
        %1360 = vmatpush1.bf16.msra.mxu0 %v1343
        %1361 = vmatprep.subr.bf16.mxu0 0
        %1362 = vmatpush1.bf16.msra.mxu0 %v1344
        %1363 = vmatprep.subr.bf16.mxu0 0
        %1364 = vmatpush1.bf16.msra.mxu0 %v1345
        %1365 = vmatprep.subr.bf16.mxu0 0
        %1366 = vmatpush1.bf16.msra.mxu0 %v1346
        %1367 = vmatprep.subr.bf16.mxu0 0
        %1368 = vmatpush1.bf16.msra.mxu0 %v1347
        %1369 = vmatprep.subr.bf16.mxu0 0
        %1370 = vmatpush1.bf16.msra.mxu0 %v1348
        %1371 = vmatprep.subr.bf16.mxu0 0
        %1372 = vmatpush1.bf16.msra.mxu0 %v1349
        %1373 = vmatprep.subr.bf16.mxu0 0
        %1374 = vmatpush1.bf16.msra.mxu0 %v1350
        %1375 = vmatprep.subr.bf16.mxu0 0
        %1376 = vmatpush1.bf16.msra.mxu0 0
        %1377 = vmatprep.subr.bf16.mxu0 0
        %1378 = vmatpush1.bf16.msra.mxu0 0
        %1379 = vmatprep.subr.bf16.mxu0 0
        %1380 = vmatpush1.bf16.msra.mxu0 0
        %1381 = vmatprep.subr.bf16.mxu0 0
        %1382 = vmatpush1.bf16.msra.mxu0 0
        %1383 = vmatprep.subr.bf16.mxu0 0
        %1384 = vmatpush1.bf16.msra.mxu0 0
        %1385 = vmatprep.subr.bf16.mxu0 0
        %1386 = vmatpush1.bf16.msra.mxu0 0
        %1387 = vmatprep.subr.bf16.mxu0 0
        %1388 = vmatpush1.bf16.msra.mxu0 0
        %1389 = vmatprep.subr.bf16.mxu0 0
        %1390 = vmatpush1.bf16.msra.mxu0 0
        %1391 = vmatprep.mubr.bf16.mxu0 0
        %1392 = vmatmul.mubr.bf16.gmra.mrb[0].mxu0 %v1063
        %v1393 = vpop.f32.mrb[0].mxu0
        %v1394 = vadd.f32 %v1309, %v1393
        %v1395 = vpop.f32.mrb[0].mxu0
        %v1396 = vpop.f32.mrb[0].mxu0
        %v1397 = vadd.f32 %v1309, %v1396
        %v1398 = vpop.f32.mrb[0].mxu0
        %1399 = vdwg.mxu0
        %v1400 = vmul.f32 %v1170, 0.17677669
        %v1401 = vmul.f32 %v1173, 0.17677669
        %v1402 = vpack.c.bf16 %v1400, %v1400
        %v1403 = vpack.c.bf16 %v1401, %v1401
        %v1404 = vpack.c.bf16 %v1282, %v1282
        %v1405 = vpack.c.bf16 %v1285, %v1285
        %v1406 = vpack.c.bf16 %v1394, %v1394
        %v1407 = vpack.c.bf16 %v1397, %v1397
        %v1408 = vlaneseq
        %v1409 = vshrl.u32 %v1408, 7
        %v1410 = vlaneseq
        %v1411 = vand.u32 %v1410, 127
        %vm1412 = vcmp.le.s32.totalorder %v1411, %v1409
        %vm1413 = vcmask 261120
        %v1415 = vsel %vm1413, %v1402, 0
        %v1418 = vsel %vm1413, %v1404, 0
        %1420 = vmatprep.subr.bf16.mxu0 0
        %1421 = vmatpush1.bf16.xpose.msra.mxu0 %v1418
        %1422 = vmatprep.subr.bf16.mxu0 0
        %1423 = vmatpush1.bf16.xpose.msra.mxu0 0
        %1424 = vmatprep.subr.bf16.mxu0 0
        %1425 = vmatpush1.bf16.xpose.msra.mxu0 0
        %1426 = vmatprep.subr.bf16.mxu0 0
        %1427 = vmatpush1.bf16.xpose.msra.mxu0 0
        %1428 = vmatprep.subr.bf16.mxu0 0
        %1429 = vmatpush1.bf16.xpose.msra.mxu0 0
        %1430 = vmatprep.subr.bf16.mxu0 0
        %1431 = vmatpush1.bf16.xpose.msra.mxu0 0
        %1432 = vmatprep.subr.bf16.mxu0 0
        %1433 = vmatpush1.bf16.xpose.msra.mxu0 0
        %1434 = vmatprep.subr.bf16.mxu0 0
        %1435 = vmatpush1.bf16.xpose.msra.mxu0 0
        %1436 = vmatprep.subr.bf16.mxu0 0
        %1437 = vmatpush1.bf16.xpose.msra.mxu0 0
        %1438 = vmatprep.subr.bf16.mxu0 0
        %1439 = vmatpush1.bf16.xpose.msra.mxu0 0
        %1440 = vmatprep.subr.bf16.mxu0 0
        %1441 = vmatpush1.bf16.xpose.msra.mxu0 0
        %1442 = vmatprep.subr.bf16.mxu0 0
        %1443 = vmatpush1.bf16.xpose.msra.mxu0 0
        %1444 = vmatprep.subr.bf16.mxu0 0
        %1445 = vmatpush1.bf16.xpose.msra.mxu0 0
        %1446 = vmatprep.subr.bf16.mxu0 0
        %1447 = vmatpush1.bf16.xpose.msra.mxu0 0
        %1448 = vmatprep.subr.bf16.mxu0 0
        %1449 = vmatpush1.bf16.xpose.msra.mxu0 0
        %1450 = vmatprep.subr.bf16.mxu0 0
        %1451 = vmatpush1.bf16.xpose.msra.mxu0 0
        %1452 = vmatprep.mubr.bf16.mxu0 0
        %1453 = vmatmul.mubr.bf16.gmra.mrb[0].mxu0 %v1415
        %v1454 = vpop.f32.mrb[0].mxu0
        %v1455 = vadd.f32 0.0, %v1454
        %v1456 = vpop.f32.mrb[0].mxu0
        %v1457 = vpop.f32.mrb[0].mxu0
        %v1458 = vpop.f32.mrb[0].mxu0
        %1459 = vdwg.mxu0
        %v1461 = vsel %vm1413, %v1403, 0
        %v1464 = vsel %vm1413, %v1405, 0
        %1466 = vmatprep.subr.bf16.mxu0 0
        %1467 = vmatpush1.bf16.xpose.msra.mxu0 %v1464
        %1468 = vmatprep.subr.bf16.mxu0 0
        %1469 = vmatpush1.bf16.xpose.msra.mxu0 0
        %1470 = vmatprep.subr.bf16.mxu0 0
        %1471 = vmatpush1.bf16.xpose.msra.mxu0 0
        %1472 = vmatprep.subr.bf16.mxu0 0
        %1473 = vmatpush1.bf16.xpose.msra.mxu0 0
        %1474 = vmatprep.subr.bf16.mxu0 0
        %1475 = vmatpush1.bf16.xpose.msra.mxu0 0
        %1476 = vmatprep.subr.bf16.mxu0 0
        %1477 = vmatpush1.bf16.xpose.msra.mxu0 0
        %1478 = vmatprep.subr.bf16.mxu0 0
        %1479 = vmatpush1.bf16.xpose.msra.mxu0 0
        %1480 = vmatprep.subr.bf16.mxu0 0
        %1481 = vmatpush1.bf16.xpose.msra.mxu0 0
        %1482 = vmatprep.subr.bf16.mxu0 0
        %1483 = vmatpush1.bf16.xpose.msra.mxu0 0
        %1484 = vmatprep.subr.bf16.mxu0 0
        %1485 = vmatpush1.bf16.xpose.msra.mxu0 0
        %1486 = vmatprep.subr.bf16.mxu0 0
        %1487 = vmatpush1.bf16.xpose.msra.mxu0 0
        %1488 = vmatprep.subr.bf16.mxu0 0
        %1489 = vmatpush1.bf16.xpose.msra.mxu0 0
        %1490 = vmatprep.subr.bf16.mxu0 0
        %1491 = vmatpush1.bf16.xpose.msra.mxu0 0
        %1492 = vmatprep.subr.bf16.mxu0 0
        %1493 = vmatpush1.bf16.xpose.msra.mxu0 0
        %1494 = vmatprep.subr.bf16.mxu0 0
        %1495 = vmatpush1.bf16.xpose.msra.mxu0 0
        %1496 = vmatprep.subr.bf16.mxu0 0
        %1497 = vmatpush1.bf16.xpose.msra.mxu0 0
        %1498 = vmatprep.mubr.bf16.mxu0 0
        %1499 = vmatmul.mubr.bf16.gmra.mrb[0].mxu0 %v1461
        %v1500 = vpop.f32.mrb[0].mxu0
        %v1501 = vadd.f32 0.0, %v1500
        %v1502 = vpop.f32.mrb[0].mxu0
        %v1503 = vpop.f32.mrb[0].mxu0
        %v1504 = vpop.f32.mrb[0].mxu0
        %1505 = vdwg.mxu0
        %v1506 = vsel %vm1412, 1, 0
        %vm1507 = vcmp.eq.s32.totalorder %v1506, 1
        %v1508 = vsel %vm1507, %v1455, -1e+09
        %v1509 = vsel %vm1507, %v1501, -1e+09
        %vm1510 = vcmask 64512
        %v1511 = vsel %vm1510, %v1508, -inf
        %1512 = vmax.xlane.f32.xlu0 %v1511
        %v1513 = vpop.xlane.xlu0 %1512
        %v1514 = vsel %vm1510, %v1509, -inf
        %1515 = vmax.xlane.f32.xlu0 %v1514
        %v1516 = vpop.xlane.xlu0 %1515
        %v1517 = vsub.f32 %v1508, %v1513
        %v1518 = vsub.f32 %v1509, %v1516
        %v1519 = vmul.f32 %v1517, 1.442695
        %v1520 = vpow.pop %v1519
        %v1521 = vmul.f32 %v1518, 1.442695
        %v1522 = vpow.pop %v1521
        %v1523 = vsel %vm1510, %v1520, 0.0
        %1524 = vadd.xlane.f32.xlu0 %v1523
        %v1525 = vpop.xlane.xlu0 %1524
        %v1526 = vsel %vm1510, %v1522, 0.0
        %1527 = vadd.xlane.f32.xlu0 %v1526
        %v1528 = vpop.xlane.xlu0 %1527
        %v1529 = vrcp.pop %v1525
        %v1530 = vrcp.pop %v1528
        %v1531 = vmul.f32 %v1520, %v1529
        %v1532 = vmul.f32 %v1522, %v1530
        %v1533 = vpack.c.bf16 %v1531, %v1531
        %v1534 = vpack.c.bf16 %v1532, %v1532
        %v1536 = vsel %vm1510, %v1533, 0
        %vm1538 = vcmask 1043456
        %v1540 = vsel %vm1538, %v1406, 0
        %1542 = vmatprep.subr.bf16.mxu0 0
        %1543 = vmatpush1.bf16.msra.mxu0 %v1540
        %1544 = vmatprep.subr.bf16.mxu0 0
        %1545 = vmatpush1.bf16.msra.mxu0 0
        %1546 = vmatprep.subr.bf16.mxu0 0
        %1547 = vmatpush1.bf16.msra.mxu0 0
        %1548 = vmatprep.subr.bf16.mxu0 0
        %1549 = vmatpush1.bf16.msra.mxu0 0
        %1550 = vmatprep.subr.bf16.mxu0 0
        %1551 = vmatpush1.bf16.msra.mxu0 0
        %1552 = vmatprep.subr.bf16.mxu0 0
        %1553 = vmatpush1.bf16.msra.mxu0 0
        %1554 = vmatprep.subr.bf16.mxu0 0
        %1555 = vmatpush1.bf16.msra.mxu0 0
        %1556 = vmatprep.subr.bf16.mxu0 0
        %1557 = vmatpush1.bf16.msra.mxu0 0
        %1558 = vmatprep.subr.bf16.mxu0 0
        %1559 = vmatpush1.bf16.msra.mxu0 0
        %1560 = vmatprep.subr.bf16.mxu0 0
        %1561 = vmatpush1.bf16.msra.mxu0 0
        %1562 = vmatprep.subr.bf16.mxu0 0
        %1563 = vmatpush1.bf16.msra.mxu0 0
        %1564 = vmatprep.subr.bf16.mxu0 0
        %1565 = vmatpush1.bf16.msra.mxu0 0
        %1566 = vmatprep.subr.bf16.mxu0 0
        %1567 = vmatpush1.bf16.msra.mxu0 0
        %1568 = vmatprep.subr.bf16.mxu0 0
        %1569 = vmatpush1.bf16.msra.mxu0 0
        %1570 = vmatprep.subr.bf16.mxu0 0
        %1571 = vmatpush1.bf16.msra.mxu0 0
        %1572 = vmatprep.subr.bf16.mxu0 0
        %1573 = vmatpush1.bf16.msra.mxu0 0
        %1574 = vmatprep.mubr.bf16.mxu0 0
        %1575 = vmatmul.mubr.bf16.gmra.mrb[0].mxu0 %v1536
        %v1576 = vpop.f32.mrb[0].mxu0
        %v1577 = vadd.f32 0.0, %v1576
        %v1578 = vpop.f32.mrb[0].mxu0
        %v1579 = vpop.f32.mrb[0].mxu0
        %v1580 = vpop.f32.mrb[0].mxu0
        %1581 = vdwg.mxu0
        %v1583 = vsel %vm1510, %v1534, 0
        %v1586 = vsel %vm1538, %v1407, 0
        %1588 = vmatprep.subr.bf16.mxu0 0
        %1589 = vmatpush1.bf16.msra.mxu0 %v1586
        %1590 = vmatprep.subr.bf16.mxu0 0
        %1591 = vmatpush1.bf16.msra.mxu0 0
        %1592 = vmatprep.subr.bf16.mxu0 0
        %1593 = vmatpush1.bf16.msra.mxu0 0
        %1594 = vmatprep.subr.bf16.mxu0 0
        %1595 = vmatpush1.bf16.msra.mxu0 0
        %1596 = vmatprep.subr.bf16.mxu0 0
        %1597 = vmatpush1.bf16.msra.mxu0 0
        %1598 = vmatprep.subr.bf16.mxu0 0
        %1599 = vmatpush1.bf16.msra.mxu0 0
        %1600 = vmatprep.subr.bf16.mxu0 0
        %1601 = vmatpush1.bf16.msra.mxu0 0
        %1602 = vmatprep.subr.bf16.mxu0 0
        %1603 = vmatpush1.bf16.msra.mxu0 0
        %1604 = vmatprep.subr.bf16.mxu0 0
        %1605 = vmatpush1.bf16.msra.mxu0 0
        %1606 = vmatprep.subr.bf16.mxu0 0
        %1607 = vmatpush1.bf16.msra.mxu0 0
        %1608 = vmatprep.subr.bf16.mxu0 0
        %1609 = vmatpush1.bf16.msra.mxu0 0
        %1610 = vmatprep.subr.bf16.mxu0 0
        %1611 = vmatpush1.bf16.msra.mxu0 0
        %1612 = vmatprep.subr.bf16.mxu0 0
        %1613 = vmatpush1.bf16.msra.mxu0 0
        %1614 = vmatprep.subr.bf16.mxu0 0
        %1615 = vmatpush1.bf16.msra.mxu0 0
        %1616 = vmatprep.subr.bf16.mxu0 0
        %1617 = vmatpush1.bf16.msra.mxu0 0
        %1618 = vmatprep.subr.bf16.mxu0 0
        %1619 = vmatpush1.bf16.msra.mxu0 0
        %1620 = vmatprep.mubr.bf16.mxu0 0
        %1621 = vmatmul.mubr.bf16.gmra.mrb[0].mxu0 %v1583
        %v1622 = vpop.f32.mrb[0].mxu0
        %v1623 = vadd.f32 0.0, %v1622
        %v1624 = vpop.f32.mrb[0].mxu0
        %v1625 = vpop.f32.mrb[0].mxu0
        %v1626 = vpop.f32.mrb[0].mxu0
        %1627 = vdwg.mxu0
        %1628 = vst.msk [vmem:[#allocation3] sm:$0xff] %vm1413, %v1577
        %1629 = vst.msk [vmem:[#allocation3 + $0x8] sm:$0xff] %vm1413, %v1623
        %1631 = vrot.lane.b32.xlu0 %v1402, 96
        %v1632 = vpop.permute.xlu0 %1631
        %1634 = vrot.lane.b32.xlu0 %v1404, 96
        %v1635 = vpop.permute.xlu0 %1634
        %v1637 = vsel %vm1413, %v1632, 0
        %v1640 = vsel %vm1413, %v1635, 0
        %1642 = vmatprep.subr.bf16.mxu0 0
        %1643 = vmatpush1.bf16.xpose.msra.mxu0 %v1640
        %1644 = vmatprep.subr.bf16.mxu0 0
        %1645 = vmatpush1.bf16.xpose.msra.mxu0 0
        %1646 = vmatprep.subr.bf16.mxu0 0
        %1647 = vmatpush1.bf16.xpose.msra.mxu0 0
        %1648 = vmatprep.subr.bf16.mxu0 0
        %1649 = vmatpush1.bf16.xpose.msra.mxu0 0
        %1650 = vmatprep.subr.bf16.mxu0 0
        %1651 = vmatpush1.bf16.xpose.msra.mxu0 0
        %1652 = vmatprep.subr.bf16.mxu0 0
        %1653 = vmatpush1.bf16.xpose.msra.mxu0 0
        %1654 = vmatprep.subr.bf16.mxu0 0
        %1655 = vmatpush1.bf16.xpose.msra.mxu0 0
        %1656 = vmatprep.subr.bf16.mxu0 0
        %1657 = vmatpush1.bf16.xpose.msra.mxu0 0
        %1658 = vmatprep.subr.bf16.mxu0 0
        %1659 = vmatpush1.bf16.xpose.msra.mxu0 0
        %1660 = vmatprep.subr.bf16.mxu0 0
        %1661 = vmatpush1.bf16.xpose.msra.mxu0 0
        %1662 = vmatprep.subr.bf16.mxu0 0
        %1663 = vmatpush1.bf16.xpose.msra.mxu0 0
        %1664 = vmatprep.subr.bf16.mxu0 0
        %1665 = vmatpush1.bf16.xpose.msra.mxu0 0
        %1666 = vmatprep.subr.bf16.mxu0 0
        %1667 = vmatpush1.bf16.xpose.msra.mxu0 0
        %1668 = vmatprep.subr.bf16.mxu0 0
        %1669 = vmatpush1.bf16.xpose.msra.mxu0 0
        %1670 = vmatprep.subr.bf16.mxu0 0
        %1671 = vmatpush1.bf16.xpose.msra.mxu0 0
        %1672 = vmatprep.subr.bf16.mxu0 0
        %1673 = vmatpush1.bf16.xpose.msra.mxu0 0
        %1674 = vmatprep.mubr.bf16.mxu0 0
        %1675 = vmatmul.mubr.bf16.gmra.mrb[0].mxu0 %v1637
        %v1676 = vpop.f32.mrb[0].mxu0
        %v1677 = vadd.f32 0.0, %v1676
        %v1678 = vpop.f32.mrb[0].mxu0
        %v1679 = vpop.f32.mrb[0].mxu0
        %v1680 = vpop.f32.mrb[0].mxu0
        %1681 = vdwg.mxu0
        %1683 = vrot.lane.b32.xlu0 %v1403, 96
        %v1684 = vpop.permute.xlu0 %1683
        %1686 = vrot.lane.b32.xlu0 %v1405, 96
        %v1687 = vpop.permute.xlu0 %1686
        %v1689 = vsel %vm1413, %v1684, 0
        %v1692 = vsel %vm1413, %v1687, 0
        %1694 = vmatprep.subr.bf16.mxu0 0
        %1695 = vmatpush1.bf16.xpose.msra.mxu0 %v1692
        %1696 = vmatprep.subr.bf16.mxu0 0
        %1697 = vmatpush1.bf16.xpose.msra.mxu0 0
        %1698 = vmatprep.subr.bf16.mxu0 0
        %1699 = vmatpush1.bf16.xpose.msra.mxu0 0
        %1700 = vmatprep.subr.bf16.mxu0 0
        %1701 = vmatpush1.bf16.xpose.msra.mxu0 0
        %1702 = vmatprep.subr.bf16.mxu0 0
        %1703 = vmatpush1.bf16.xpose.msra.mxu0 0
        %1704 = vmatprep.subr.bf16.mxu0 0
        %1705 = vmatpush1.bf16.xpose.msra.mxu0 0
        %1706 = vmatprep.subr.bf16.mxu0 0
        %1707 = vmatpush1.bf16.xpose.msra.mxu0 0
        %1708 = vmatprep.subr.bf16.mxu0 0
        %1709 = vmatpush1.bf16.xpose.msra.mxu0 0
        %1710 = vmatprep.subr.bf16.mxu0 0
        %1711 = vmatpush1.bf16.xpose.msra.mxu0 0
        %1712 = vmatprep.subr.bf16.mxu0 0
        %1713 = vmatpush1.bf16.xpose.msra.mxu0 0
        %1714 = vmatprep.subr.bf16.mxu0 0
        %1715 = vmatpush1.bf16.xpose.msra.mxu0 0
        %1716 = vmatprep.subr.bf16.mxu0 0
        %1717 = vmatpush1.bf16.xpose.msra.mxu0 0
        %1718 = vmatprep.subr.bf16.mxu0 0
        %1719 = vmatpush1.bf16.xpose.msra.mxu0 0
        %1720 = vmatprep.subr.bf16.mxu0 0
        %1721 = vmatpush1.bf16.xpose.msra.mxu0 0
        %1722 = vmatprep.subr.bf16.mxu0 0
        %1723 = vmatpush1.bf16.xpose.msra.mxu0 0
        %1724 = vmatprep.subr.bf16.mxu0 0
        %1725 = vmatpush1.bf16.xpose.msra.mxu0 0
        %1726 = vmatprep.mubr.bf16.mxu0 0
        %1727 = vmatmul.mubr.bf16.gmra.mrb[0].mxu0 %v1689
        %v1728 = vpop.f32.mrb[0].mxu0
        %v1729 = vadd.f32 0.0, %v1728
        %v1730 = vpop.f32.mrb[0].mxu0
        %v1731 = vpop.f32.mrb[0].mxu0
        %v1732 = vpop.f32.mrb[0].mxu0
        %1733 = vdwg.mxu0
        %v1734 = vsel %vm1507, %v1677, -1e+09
        %v1735 = vsel %vm1507, %v1729, -1e+09
        %v1736 = vsel %vm1510, %v1734, -inf
        %1737 = vmax.xlane.f32.xlu0 %v1736
        %v1738 = vpop.xlane.xlu0 %1737
        %v1739 = vsel %vm1510, %v1735, -inf
        %1740 = vmax.xlane.f32.xlu0 %v1739
        %v1741 = vpop.xlane.xlu0 %1740
        %v1742 = vsub.f32 %v1734, %v1738
        %v1743 = vsub.f32 %v1735, %v1741
        %v1744 = vmul.f32 %v1742, 1.442695
        %v1745 = vpow.pop %v1744
        %v1746 = vmul.f32 %v1743, 1.442695
        %v1747 = vpow.pop %v1746
        %v1748 = vsel %vm1510, %v1745, 0.0
        %1749 = vadd.xlane.f32.xlu0 %v1748
        %v1750 = vpop.xlane.xlu0 %1749
        %v1751 = vsel %vm1510, %v1747, 0.0
        %1752 = vadd.xlane.f32.xlu0 %v1751
        %v1753 = vpop.xlane.xlu0 %1752
        %v1754 = vrcp.pop %v1750
        %v1755 = vrcp.pop %v1753
        %v1756 = vmul.f32 %v1745, %v1754
        %v1757 = vmul.f32 %v1747, %v1755
        %v1758 = vpack.c.bf16 %v1756, %v1756
        %v1759 = vpack.c.bf16 %v1757, %v1757
        %1761 = vrot.lane.b32.xlu0 %v1406, 96
        %v1762 = vpop.permute.xlu0 %1761
        %v1764 = vsel %vm1510, %v1758, 0
        %v1767 = vsel %vm1538, %v1762, 0
        %1769 = vmatprep.subr.bf16.mxu0 0
        %1770 = vmatpush1.bf16.msra.mxu0 %v1767
        %1771 = vmatprep.subr.bf16.mxu0 0
        %1772 = vmatpush1.bf16.msra.mxu0 0
        %1773 = vmatprep.subr.bf16.mxu0 0
        %1774 = vmatpush1.bf16.msra.mxu0 0
        %1775 = vmatprep.subr.bf16.mxu0 0
        %1776 = vmatpush1.bf16.msra.mxu0 0
        %1777 = vmatprep.subr.bf16.mxu0 0
        %1778 = vmatpush1.bf16.msra.mxu0 0
        %1779 = vmatprep.subr.bf16.mxu0 0
        %1780 = vmatpush1.bf16.msra.mxu0 0
        %1781 = vmatprep.subr.bf16.mxu0 0
        %1782 = vmatpush1.bf16.msra.mxu0 0
        %1783 = vmatprep.subr.bf16.mxu0 0
        %1784 = vmatpush1.bf16.msra.mxu0 0
        %1785 = vmatprep.subr.bf16.mxu0 0
        %1786 = vmatpush1.bf16.msra.mxu0 0
        %1787 = vmatprep.subr.bf16.mxu0 0
        %1788 = vmatpush1.bf16.msra.mxu0 0
        %1789 = vmatprep.subr.bf16.mxu0 0
        %1790 = vmatpush1.bf16.msra.mxu0 0
        %1791 = vmatprep.subr.bf16.mxu0 0
        %1792 = vmatpush1.bf16.msra.mxu0 0
        %1793 = vmatprep.subr.bf16.mxu0 0
        %1794 = vmatpush1.bf16.msra.mxu0 0
        %1795 = vmatprep.subr.bf16.mxu0 0
        %1796 = vmatpush1.bf16.msra.mxu0 0
        %1797 = vmatprep.subr.bf16.mxu0 0
        %1798 = vmatpush1.bf16.msra.mxu0 0
        %1799 = vmatprep.subr.bf16.mxu0 0
        %1800 = vmatpush1.bf16.msra.mxu0 0
        %1801 = vmatprep.mubr.bf16.mxu0 0
        %1802 = vmatmul.mubr.bf16.gmra.mrb[0].mxu0 %v1764
        %v1803 = vpop.f32.mrb[0].mxu0
        %v1804 = vadd.f32 0.0, %v1803
        %v1805 = vpop.f32.mrb[0].mxu0
        %v1806 = vpop.f32.mrb[0].mxu0
        %v1807 = vpop.f32.mrb[0].mxu0
        %1808 = vdwg.mxu0
        %1810 = vrot.lane.b32.xlu0 %v1407, 96
        %v1811 = vpop.permute.xlu0 %1810
        %v1813 = vsel %vm1510, %v1759, 0
        %v1816 = vsel %vm1538, %v1811, 0
        %1818 = vmatprep.subr.bf16.mxu0 0
        %1819 = vmatpush1.bf16.msra.mxu0 %v1816
        %1820 = vmatprep.subr.bf16.mxu0 0
        %1821 = vmatpush1.bf16.msra.mxu0 0
        %1822 = vmatprep.subr.bf16.mxu0 0
        %1823 = vmatpush1.bf16.msra.mxu0 0
        %1824 = vmatprep.subr.bf16.mxu0 0
        %1825 = vmatpush1.bf16.msra.mxu0 0
        %1826 = vmatprep.subr.bf16.mxu0 0
        %1827 = vmatpush1.bf16.msra.mxu0 0
        %1828 = vmatprep.subr.bf16.mxu0 0
        %1829 = vmatpush1.bf16.msra.mxu0 0
        %1830 = vmatprep.subr.bf16.mxu0 0
        %1831 = vmatpush1.bf16.msra.mxu0 0
        %1832 = vmatprep.subr.bf16.mxu0 0
        %1833 = vmatpush1.bf16.msra.mxu0 0
        %1834 = vmatprep.subr.bf16.mxu0 0
        %1835 = vmatpush1.bf16.msra.mxu0 0
        %1836 = vmatprep.subr.bf16.mxu0 0
        %1837 = vmatpush1.bf16.msra.mxu0 0
        %1838 = vmatprep.subr.bf16.mxu0 0
        %1839 = vmatpush1.bf16.msra.mxu0 0
        %1840 = vmatprep.subr.bf16.mxu0 0
        %1841 = vmatpush1.bf16.msra.mxu0 0
        %1842 = vmatprep.subr.bf16.mxu0 0
        %1843 = vmatpush1.bf16.msra.mxu0 0
        %1844 = vmatprep.subr.bf16.mxu0 0
        %1845 = vmatpush1.bf16.msra.mxu0 0
        %1846 = vmatprep.subr.bf16.mxu0 0
        %1847 = vmatpush1.bf16.msra.mxu0 0
        %1848 = vmatprep.subr.bf16.mxu0 0
        %1849 = vmatpush1.bf16.msra.mxu0 0
        %1850 = vmatprep.mubr.bf16.mxu0 0
        %1851 = vmatmul.mubr.bf16.gmra.mrb[0].mxu0 %v1813
        %v1852 = vpop.f32.mrb[0].mxu0
        %v1853 = vadd.f32 0.0, %v1852
        %v1854 = vpop.f32.mrb[0].mxu0
        %v1855 = vpop.f32.mrb[0].mxu0
        %v1856 = vpop.f32.mrb[0].mxu0
        %1857 = vdwg.mxu0
        %1860 = vrot.lane.b32.xlu0 %v1804, 32
        %v1861 = vpop.permute.xlu0 %1860
        %1862 = vrot.lane.b32.xlu0 %v1853, 32
        %v1863 = vpop.permute.xlu0 %1862
        %vm1866 = vcmask 523520
        %1867 = vst.msk [vmem:[#allocation3] sm:$0xff] %vm1866, %v1861
        %1868 = vst.msk [vmem:[#allocation3 + $0x8] sm:$0xff] %vm1866, %v1863
        %1869 = vrot.lane.b32.xlu0 %v1402, 64
        %v1870 = vpop.permute.xlu0 %1869
        %1871 = vrot.lane.b32.xlu0 %v1404, 64
        %v1872 = vpop.permute.xlu0 %1871
        %v1874 = vsel %vm1413, %v1870, 0
        %v1877 = vsel %vm1413, %v1872, 0
        %1879 = vmatprep.subr.bf16.mxu0 0
        %1880 = vmatpush1.bf16.xpose.msra.mxu0 %v1877
        %1881 = vmatprep.subr.bf16.mxu0 0
        %1882 = vmatpush1.bf16.xpose.msra.mxu0 0
        %1883 = vmatprep.subr.bf16.mxu0 0
        %1884 = vmatpush1.bf16.xpose.msra.mxu0 0
        %1885 = vmatprep.subr.bf16.mxu0 0
        %1886 = vmatpush1.bf16.xpose.msra.mxu0 0
        %1887 = vmatprep.subr.bf16.mxu0 0
        %1888 = vmatpush1.bf16.xpose.msra.mxu0 0
        %1889 = vmatprep.subr.bf16.mxu0 0
        %1890 = vmatpush1.bf16.xpose.msra.mxu0 0
        %1891 = vmatprep.subr.bf16.mxu0 0
        %1892 = vmatpush1.bf16.xpose.msra.mxu0 0
        %1893 = vmatprep.subr.bf16.mxu0 0
        %1894 = vmatpush1.bf16.xpose.msra.mxu0 0
        %1895 = vmatprep.subr.bf16.mxu0 0
        %1896 = vmatpush1.bf16.xpose.msra.mxu0 0
        %1897 = vmatprep.subr.bf16.mxu0 0
        %1898 = vmatpush1.bf16.xpose.msra.mxu0 0
        %1899 = vmatprep.subr.bf16.mxu0 0
        %1900 = vmatpush1.bf16.xpose.msra.mxu0 0
        %1901 = vmatprep.subr.bf16.mxu0 0
        %1902 = vmatpush1.bf16.xpose.msra.mxu0 0
        %1903 = vmatprep.subr.bf16.mxu0 0
        %1904 = vmatpush1.bf16.xpose.msra.mxu0 0
        %1905 = vmatprep.subr.bf16.mxu0 0
        %1906 = vmatpush1.bf16.xpose.msra.mxu0 0
        %1907 = vmatprep.subr.bf16.mxu0 0
        %1908 = vmatpush1.bf16.xpose.msra.mxu0 0
        %1909 = vmatprep.subr.bf16.mxu0 0
        %1910 = vmatpush1.bf16.xpose.msra.mxu0 0
        %1911 = vmatprep.mubr.bf16.mxu0 0
        %1912 = vmatmul.mubr.bf16.gmra.mrb[0].mxu0 %v1874
        %v1913 = vpop.f32.mrb[0].mxu0
        %v1914 = vadd.f32 0.0, %v1913
        %v1915 = vpop.f32.mrb[0].mxu0
        %v1916 = vpop.f32.mrb[0].mxu0
        %v1917 = vpop.f32.mrb[0].mxu0
        %1918 = vdwg.mxu0
        %1919 = vrot.lane.b32.xlu0 %v1403, 64
        %v1920 = vpop.permute.xlu0 %1919
        %1921 = vrot.lane.b32.xlu0 %v1405, 64
        %v1922 = vpop.permute.xlu0 %1921
        %v1924 = vsel %vm1413, %v1920, 0
        %v1927 = vsel %vm1413, %v1922, 0
        %1929 = vmatprep.subr.bf16.mxu0 0
        %1930 = vmatpush1.bf16.xpose.msra.mxu0 %v1927
        %1931 = vmatprep.subr.bf16.mxu0 0
        %1932 = vmatpush1.bf16.xpose.msra.mxu0 0
        %1933 = vmatprep.subr.bf16.mxu0 0
        %1934 = vmatpush1.bf16.xpose.msra.mxu0 0
        %1935 = vmatprep.subr.bf16.mxu0 0
        %1936 = vmatpush1.bf16.xpose.msra.mxu0 0
        %1937 = vmatprep.subr.bf16.mxu0 0
        %1938 = vmatpush1.bf16.xpose.msra.mxu0 0
        %1939 = vmatprep.subr.bf16.mxu0 0
        %1940 = vmatpush1.bf16.xpose.msra.mxu0 0
        %1941 = vmatprep.subr.bf16.mxu0 0
        %1942 = vmatpush1.bf16.xpose.msra.mxu0 0
        %1943 = vmatprep.subr.bf16.mxu0 0
        %1944 = vmatpush1.bf16.xpose.msra.mxu0 0
        %1945 = vmatprep.subr.bf16.mxu0 0
        %1946 = vmatpush1.bf16.xpose.msra.mxu0 0
        %1947 = vmatprep.subr.bf16.mxu0 0
        %1948 = vmatpush1.bf16.xpose.msra.mxu0 0
        %1949 = vmatprep.subr.bf16.mxu0 0
        %1950 = vmatpush1.bf16.xpose.msra.mxu0 0
        %1951 = vmatprep.subr.bf16.mxu0 0
        %1952 = vmatpush1.bf16.xpose.msra.mxu0 0
        %1953 = vmatprep.subr.bf16.mxu0 0
        %1954 = vmatpush1.bf16.xpose.msra.mxu0 0
        %1955 = vmatprep.subr.bf16.mxu0 0
        %1956 = vmatpush1.bf16.xpose.msra.mxu0 0
        %1957 = vmatprep.subr.bf16.mxu0 0
        %1958 = vmatpush1.bf16.xpose.msra.mxu0 0
        %1959 = vmatprep.subr.bf16.mxu0 0
        %1960 = vmatpush1.bf16.xpose.msra.mxu0 0
        %1961 = vmatprep.mubr.bf16.mxu0 0
        %1962 = vmatmul.mubr.bf16.gmra.mrb[0].mxu0 %v1924
        %v1963 = vpop.f32.mrb[0].mxu0
        %v1964 = vadd.f32 0.0, %v1963
        %v1965 = vpop.f32.mrb[0].mxu0
        %v1966 = vpop.f32.mrb[0].mxu0
        %v1967 = vpop.f32.mrb[0].mxu0
        %1968 = vdwg.mxu0
        %v1969 = vsel %vm1507, %v1914, -1e+09
        %v1970 = vsel %vm1507, %v1964, -1e+09
        %v1971 = vsel %vm1510, %v1969, -inf
        %1972 = vmax.xlane.f32.xlu0 %v1971
        %v1973 = vpop.xlane.xlu0 %1972
        %v1974 = vsel %vm1510, %v1970, -inf
        %1975 = vmax.xlane.f32.xlu0 %v1974
        %v1976 = vpop.xlane.xlu0 %1975
        %v1977 = vsub.f32 %v1969, %v1973
        %v1978 = vsub.f32 %v1970, %v1976
        %v1979 = vmul.f32 %v1977, 1.442695
        %v1980 = vpow.pop %v1979
        %v1981 = vmul.f32 %v1978, 1.442695
        %v1982 = vpow.pop %v1981
        %v1983 = vsel %vm1510, %v1980, 0.0
        %1984 = vadd.xlane.f32.xlu0 %v1983
        %v1985 = vpop.xlane.xlu0 %1984
        %v1986 = vsel %vm1510, %v1982, 0.0
        %1987 = vadd.xlane.f32.xlu0 %v1986
        %v1988 = vpop.xlane.xlu0 %1987
        %v1989 = vrcp.pop %v1985
        %v1990 = vrcp.pop %v1988
        %v1991 = vmul.f32 %v1980, %v1989
        %v1992 = vmul.f32 %v1982, %v1990
        %v1993 = vpack.c.bf16 %v1991, %v1991
        %v1994 = vpack.c.bf16 %v1992, %v1992
        %1995 = vrot.lane.b32.xlu0 %v1406, 64
        %v1996 = vpop.permute.xlu0 %1995
        %v1998 = vsel %vm1510, %v1993, 0
        %v2001 = vsel %vm1538, %v1996, 0
        %2003 = vmatprep.subr.bf16.mxu0 0
        %2004 = vmatpush1.bf16.msra.mxu0 %v2001
        %2005 = vmatprep.subr.bf16.mxu0 0
        %2006 = vmatpush1.bf16.msra.mxu0 0
        %2007 = vmatprep.subr.bf16.mxu0 0
        %2008 = vmatpush1.bf16.msra.mxu0 0
        %2009 = vmatprep.subr.bf16.mxu0 0
        %2010 = vmatpush1.bf16.msra.mxu0 0
        %2011 = vmatprep.subr.bf16.mxu0 0
        %2012 = vmatpush1.bf16.msra.mxu0 0
        %2013 = vmatprep.subr.bf16.mxu0 0
        %2014 = vmatpush1.bf16.msra.mxu0 0
        %2015 = vmatprep.subr.bf16.mxu0 0
        %2016 = vmatpush1.bf16.msra.mxu0 0
        %2017 = vmatprep.subr.bf16.mxu0 0
        %2018 = vmatpush1.bf16.msra.mxu0 0
        %2019 = vmatprep.subr.bf16.mxu0 0
        %2020 = vmatpush1.bf16.msra.mxu0 0
        %2021 = vmatprep.subr.bf16.mxu0 0
        %2022 = vmatpush1.bf16.msra.mxu0 0
        %2023 = vmatprep.subr.bf16.mxu0 0
        %2024 = vmatpush1.bf16.msra.mxu0 0
        %2025 = vmatprep.subr.bf16.mxu0 0
        %2026 = vmatpush1.bf16.msra.mxu0 0
        %2027 = vmatprep.subr.bf16.mxu0 0
        %2028 = vmatpush1.bf16.msra.mxu0 0
        %2029 = vmatprep.subr.bf16.mxu0 0
        %2030 = vmatpush1.bf16.msra.mxu0 0
        %2031 = vmatprep.subr.bf16.mxu0 0
        %2032 = vmatpush1.bf16.msra.mxu0 0
        %2033 = vmatprep.subr.bf16.mxu0 0
        %2034 = vmatpush1.bf16.msra.mxu0 0
        %2035 = vmatprep.mubr.bf16.mxu0 0
        %2036 = vmatmul.mubr.bf16.gmra.mrb[0].mxu0 %v1998
        %v2037 = vpop.f32.mrb[0].mxu0
        %v2038 = vadd.f32 0.0, %v2037
        %v2039 = vpop.f32.mrb[0].mxu0
        %v2040 = vpop.f32.mrb[0].mxu0
        %v2041 = vpop.f32.mrb[0].mxu0
        %2042 = vdwg.mxu0
        %2043 = vrot.lane.b32.xlu0 %v1407, 64
        %v2044 = vpop.permute.xlu0 %2043
        %v2046 = vsel %vm1510, %v1994, 0
        %v2049 = vsel %vm1538, %v2044, 0
        %2051 = vmatprep.subr.bf16.mxu0 0
        %2052 = vmatpush1.bf16.msra.mxu0 %v2049
        %2053 = vmatprep.subr.bf16.mxu0 0
        %2054 = vmatpush1.bf16.msra.mxu0 0
        %2055 = vmatprep.subr.bf16.mxu0 0
        %2056 = vmatpush1.bf16.msra.mxu0 0
        %2057 = vmatprep.subr.bf16.mxu0 0
        %2058 = vmatpush1.bf16.msra.mxu0 0
        %2059 = vmatprep.subr.bf16.mxu0 0
        %2060 = vmatpush1.bf16.msra.mxu0 0
        %2061 = vmatprep.subr.bf16.mxu0 0
        %2062 = vmatpush1.bf16.msra.mxu0 0
        %2063 = vmatprep.subr.bf16.mxu0 0
        %2064 = vmatpush1.bf16.msra.mxu0 0
        %2065 = vmatprep.subr.bf16.mxu0 0
        %2066 = vmatpush1.bf16.msra.mxu0 0
        %2067 = vmatprep.subr.bf16.mxu0 0
        %2068 = vmatpush1.bf16.msra.mxu0 0
        %2069 = vmatprep.subr.bf16.mxu0 0
        %2070 = vmatpush1.bf16.msra.mxu0 0
        %2071 = vmatprep.subr.bf16.mxu0 0
        %2072 = vmatpush1.bf16.msra.mxu0 0
        %2073 = vmatprep.subr.bf16.mxu0 0
        %2074 = vmatpush1.bf16.msra.mxu0 0
        %2075 = vmatprep.subr.bf16.mxu0 0
        %2076 = vmatpush1.bf16.msra.mxu0 0
        %2077 = vmatprep.subr.bf16.mxu0 0
        %2078 = vmatpush1.bf16.msra.mxu0 0
        %2079 = vmatprep.subr.bf16.mxu0 0
        %2080 = vmatpush1.bf16.msra.mxu0 0
        %2081 = vmatprep.subr.bf16.mxu0 0
        %2082 = vmatpush1.bf16.msra.mxu0 0
        %2083 = vmatprep.mubr.bf16.mxu0 0
        %2084 = vmatmul.mubr.bf16.gmra.mrb[0].mxu0 %v2046
        %v2085 = vpop.f32.mrb[0].mxu0
        %v2086 = vadd.f32 0.0, %v2085
        %v2087 = vpop.f32.mrb[0].mxu0
        %v2088 = vpop.f32.mrb[0].mxu0
        %v2089 = vpop.f32.mrb[0].mxu0
        %2090 = vdwg.mxu0
        %2093 = vrot.lane.b32.xlu0 %v2038, 64
        %v2094 = vpop.permute.xlu0 %2093
        %2095 = vrot.lane.b32.xlu0 %v2086, 64
        %v2096 = vpop.permute.xlu0 %2095
        %vm2099 = vcmask 785920
        %2100 = vst.msk [vmem:[#allocation3] sm:$0xff] %vm2099, %v2094
        %2101 = vst.msk [vmem:[#allocation3 + $0x8] sm:$0xff] %vm2099, %v2096
        %2102 = vrot.lane.b32.xlu0 %v1402, 32
        %v2103 = vpop.permute.xlu0 %2102
        %2104 = vrot.lane.b32.xlu0 %v1404, 32
        %v2105 = vpop.permute.xlu0 %2104
        %v2107 = vsel %vm1413, %v2103, 0
        %v2110 = vsel %vm1413, %v2105, 0
        %2112 = vmatprep.subr.bf16.mxu0 0
        %2113 = vmatpush1.bf16.xpose.msra.mxu0 %v2110
        %2114 = vmatprep.subr.bf16.mxu0 0
        %2115 = vmatpush1.bf16.xpose.msra.mxu0 0
        %2116 = vmatprep.subr.bf16.mxu0 0
        %2117 = vmatpush1.bf16.xpose.msra.mxu0 0
        %2118 = vmatprep.subr.bf16.mxu0 0
        %2119 = vmatpush1.bf16.xpose.msra.mxu0 0
        %2120 = vmatprep.subr.bf16.mxu0 0
        %2121 = vmatpush1.bf16.xpose.msra.mxu0 0
        %2122 = vmatprep.subr.bf16.mxu0 0
        %2123 = vmatpush1.bf16.xpose.msra.mxu0 0
        %2124 = vmatprep.subr.bf16.mxu0 0
        %2125 = vmatpush1.bf16.xpose.msra.mxu0 0
        %2126 = vmatprep.subr.bf16.mxu0 0
        %2127 = vmatpush1.bf16.xpose.msra.mxu0 0
        %2128 = vmatprep.subr.bf16.mxu0 0
        %2129 = vmatpush1.bf16.xpose.msra.mxu0 0
        %2130 = vmatprep.subr.bf16.mxu0 0
        %2131 = vmatpush1.bf16.xpose.msra.mxu0 0
        %2132 = vmatprep.subr.bf16.mxu0 0
        %2133 = vmatpush1.bf16.xpose.msra.mxu0 0
        %2134 = vmatprep.subr.bf16.mxu0 0
        %2135 = vmatpush1.bf16.xpose.msra.mxu0 0
        %2136 = vmatprep.subr.bf16.mxu0 0
        %2137 = vmatpush1.bf16.xpose.msra.mxu0 0
        %2138 = vmatprep.subr.bf16.mxu0 0
        %2139 = vmatpush1.bf16.xpose.msra.mxu0 0
        %2140 = vmatprep.subr.bf16.mxu0 0
        %2141 = vmatpush1.bf16.xpose.msra.mxu0 0
        %2142 = vmatprep.subr.bf16.mxu0 0
        %2143 = vmatpush1.bf16.xpose.msra.mxu0 0
        %2144 = vmatprep.mubr.bf16.mxu0 0
        %2145 = vmatmul.mubr.bf16.gmra.mrb[0].mxu0 %v2107
        %v2146 = vpop.f32.mrb[0].mxu0
        %v2147 = vadd.f32 0.0, %v2146
        %v2148 = vpop.f32.mrb[0].mxu0
        %v2149 = vpop.f32.mrb[0].mxu0
        %v2150 = vpop.f32.mrb[0].mxu0
        %2151 = vdwg.mxu0
        %2152 = vrot.lane.b32.xlu0 %v1403, 32
        %v2153 = vpop.permute.xlu0 %2152
        %2154 = vrot.lane.b32.xlu0 %v1405, 32
        %v2155 = vpop.permute.xlu0 %2154
        %v2157 = vsel %vm1413, %v2153, 0
        %v2160 = vsel %vm1413, %v2155, 0
        %2162 = vmatprep.subr.bf16.mxu0 0
        %2163 = vmatpush1.bf16.xpose.msra.mxu0 %v2160
        %2164 = vmatprep.subr.bf16.mxu0 0
        %2165 = vmatpush1.bf16.xpose.msra.mxu0 0
        %2166 = vmatprep.subr.bf16.mxu0 0
        %2167 = vmatpush1.bf16.xpose.msra.mxu0 0
        %2168 = vmatprep.subr.bf16.mxu0 0
        %2169 = vmatpush1.bf16.xpose.msra.mxu0 0
        %2170 = vmatprep.subr.bf16.mxu0 0
        %2171 = vmatpush1.bf16.xpose.msra.mxu0 0
        %2172 = vmatprep.subr.bf16.mxu0 0
        %2173 = vmatpush1.bf16.xpose.msra.mxu0 0
        %2174 = vmatprep.subr.bf16.mxu0 0
        %2175 = vmatpush1.bf16.xpose.msra.mxu0 0
        %2176 = vmatprep.subr.bf16.mxu0 0
        %2177 = vmatpush1.bf16.xpose.msra.mxu0 0
        %2178 = vmatprep.subr.bf16.mxu0 0
        %2179 = vmatpush1.bf16.xpose.msra.mxu0 0
        %2180 = vmatprep.subr.bf16.mxu0 0
        %2181 = vmatpush1.bf16.xpose.msra.mxu0 0
        %2182 = vmatprep.subr.bf16.mxu0 0
        %2183 = vmatpush1.bf16.xpose.msra.mxu0 0
        %2184 = vmatprep.subr.bf16.mxu0 0
        %2185 = vmatpush1.bf16.xpose.msra.mxu0 0
        %2186 = vmatprep.subr.bf16.mxu0 0
        %2187 = vmatpush1.bf16.xpose.msra.mxu0 0
        %2188 = vmatprep.subr.bf16.mxu0 0
        %2189 = vmatpush1.bf16.xpose.msra.mxu0 0
        %2190 = vmatprep.subr.bf16.mxu0 0
        %2191 = vmatpush1.bf16.xpose.msra.mxu0 0
        %2192 = vmatprep.subr.bf16.mxu0 0
        %2193 = vmatpush1.bf16.xpose.msra.mxu0 0
        %2194 = vmatprep.mubr.bf16.mxu0 0
        %2195 = vmatmul.mubr.bf16.gmra.mrb[0].mxu0 %v2157
        %v2196 = vpop.f32.mrb[0].mxu0
        %v2197 = vadd.f32 0.0, %v2196
        %v2198 = vpop.f32.mrb[0].mxu0
        %v2199 = vpop.f32.mrb[0].mxu0
        %v2200 = vpop.f32.mrb[0].mxu0
        %2201 = vdwg.mxu0
        %v2202 = vsel %vm1507, %v2147, -1e+09
        %v2203 = vsel %vm1507, %v2197, -1e+09
        %v2204 = vsel %vm1510, %v2202, -inf
        %2205 = vmax.xlane.f32.xlu0 %v2204
        %v2206 = vpop.xlane.xlu0 %2205
        %v2207 = vsel %vm1510, %v2203, -inf
        %2208 = vmax.xlane.f32.xlu0 %v2207
        %v2209 = vpop.xlane.xlu0 %2208
        %v2210 = vsub.f32 %v2202, %v2206
        %v2211 = vsub.f32 %v2203, %v2209
        %v2212 = vmul.f32 %v2210, 1.442695
        %v2213 = vpow.pop %v2212
        %v2214 = vmul.f32 %v2211, 1.442695
        %v2215 = vpow.pop %v2214
        %v2216 = vsel %vm1510, %v2213, 0.0
        %2217 = vadd.xlane.f32.xlu0 %v2216
        %v2218 = vpop.xlane.xlu0 %2217
        %v2219 = vsel %vm1510, %v2215, 0.0
        %2220 = vadd.xlane.f32.xlu0 %v2219
        %v2221 = vpop.xlane.xlu0 %2220
        %v2222 = vrcp.pop %v2218
        %v2223 = vrcp.pop %v2221
        %v2224 = vmul.f32 %v2213, %v2222
        %v2225 = vmul.f32 %v2215, %v2223
        %v2226 = vpack.c.bf16 %v2224, %v2224
        %v2227 = vpack.c.bf16 %v2225, %v2225
        %2228 = vrot.lane.b32.xlu0 %v1406, 32
        %v2229 = vpop.permute.xlu0 %2228
        %v2231 = vsel %vm1510, %v2226, 0
        %v2234 = vsel %vm1538, %v2229, 0
        %2236 = vmatprep.subr.bf16.mxu0 0
        %2237 = vmatpush1.bf16.msra.mxu0 %v2234
        %2238 = vmatprep.subr.bf16.mxu0 0
        %2239 = vmatpush1.bf16.msra.mxu0 0
        %2240 = vmatprep.subr.bf16.mxu0 0
        %2241 = vmatpush1.bf16.msra.mxu0 0
        %2242 = vmatprep.subr.bf16.mxu0 0
        %2243 = vmatpush1.bf16.msra.mxu0 0
        %2244 = vmatprep.subr.bf16.mxu0 0
        %2245 = vmatpush1.bf16.msra.mxu0 0
        %2246 = vmatprep.subr.bf16.mxu0 0
        %2247 = vmatpush1.bf16.msra.mxu0 0
        %2248 = vmatprep.subr.bf16.mxu0 0
        %2249 = vmatpush1.bf16.msra.mxu0 0
        %2250 = vmatprep.subr.bf16.mxu0 0
        %2251 = vmatpush1.bf16.msra.mxu0 0
        %2252 = vmatprep.subr.bf16.mxu0 0
        %2253 = vmatpush1.bf16.msra.mxu0 0
        %2254 = vmatprep.subr.bf16.mxu0 0
        %2255 = vmatpush1.bf16.msra.mxu0 0
        %2256 = vmatprep.subr.bf16.mxu0 0
        %2257 = vmatpush1.bf16.msra.mxu0 0
        %2258 = vmatprep.subr.bf16.mxu0 0
        %2259 = vmatpush1.bf16.msra.mxu0 0
        %2260 = vmatprep.subr.bf16.mxu0 0
        %2261 = vmatpush1.bf16.msra.mxu0 0
        %2262 = vmatprep.subr.bf16.mxu0 0
        %2263 = vmatpush1.bf16.msra.mxu0 0
        %2264 = vmatprep.subr.bf16.mxu0 0
        %2265 = vmatpush1.bf16.msra.mxu0 0
        %2266 = vmatprep.subr.bf16.mxu0 0
        %2267 = vmatpush1.bf16.msra.mxu0 0
        %2268 = vmatprep.mubr.bf16.mxu0 0
        %2269 = vmatmul.mubr.bf16.gmra.mrb[0].mxu0 %v2231
        %v2270 = vpop.f32.mrb[0].mxu0
        %v2271 = vadd.f32 0.0, %v2270
        %v2272 = vpop.f32.mrb[0].mxu0
        %v2273 = vpop.f32.mrb[0].mxu0
        %v2274 = vpop.f32.mrb[0].mxu0
        %2275 = vdwg.mxu0
        %2276 = vrot.lane.b32.xlu0 %v1407, 32
        %v2277 = vpop.permute.xlu0 %2276
        %v2279 = vsel %vm1510, %v2227, 0
        %v2282 = vsel %vm1538, %v2277, 0
        %2284 = vmatprep.subr.bf16.mxu0 0
        %2285 = vmatpush1.bf16.msra.mxu0 %v2282
        %2286 = vmatprep.subr.bf16.mxu0 0
        %2287 = vmatpush1.bf16.msra.mxu0 0
        %2288 = vmatprep.subr.bf16.mxu0 0
        %2289 = vmatpush1.bf16.msra.mxu0 0
        %2290 = vmatprep.subr.bf16.mxu0 0
        %2291 = vmatpush1.bf16.msra.mxu0 0
        %2292 = vmatprep.subr.bf16.mxu0 0
        %2293 = vmatpush1.bf16.msra.mxu0 0
        %2294 = vmatprep.subr.bf16.mxu0 0
        %2295 = vmatpush1.bf16.msra.mxu0 0
        %2296 = vmatprep.subr.bf16.mxu0 0
        %2297 = vmatpush1.bf16.msra.mxu0 0
        %2298 = vmatprep.subr.bf16.mxu0 0
        %2299 = vmatpush1.bf16.msra.mxu0 0
        %2300 = vmatprep.subr.bf16.mxu0 0
        %2301 = vmatpush1.bf16.msra.mxu0 0
        %2302 = vmatprep.subr.bf16.mxu0 0
        %2303 = vmatpush1.bf16.msra.mxu0 0
        %2304 = vmatprep.subr.bf16.mxu0 0
        %2305 = vmatpush1.bf16.msra.mxu0 0
        %2306 = vmatprep.subr.bf16.mxu0 0
        %2307 = vmatpush1.bf16.msra.mxu0 0
        %2308 = vmatprep.subr.bf16.mxu0 0
        %2309 = vmatpush1.bf16.msra.mxu0 0
        %2310 = vmatprep.subr.bf16.mxu0 0
        %2311 = vmatpush1.bf16.msra.mxu0 0
        %2312 = vmatprep.subr.bf16.mxu0 0
        %2313 = vmatpush1.bf16.msra.mxu0 0
        %2314 = vmatprep.subr.bf16.mxu0 0
        %2315 = vmatpush1.bf16.msra.mxu0 0
        %2316 = vmatprep.mubr.bf16.mxu0 0
        %2317 = vmatmul.mubr.bf16.gmra.mrb[0].mxu0 %v2279
        %v2318 = vpop.f32.mrb[0].mxu0
        %v2319 = vadd.f32 0.0, %v2318
        %v2320 = vpop.f32.mrb[0].mxu0
        %v2321 = vpop.f32.mrb[0].mxu0
        %v2322 = vpop.f32.mrb[0].mxu0
        %2323 = vdwg.mxu0
        %2326 = vrot.lane.b32.xlu0 %v2271, 96
        %v2327 = vpop.permute.xlu0 %2326
        %2328 = vrot.lane.b32.xlu0 %v2319, 96
        %v2329 = vpop.permute.xlu0 %2328
        %vm2332 = vcmask 1048320
        %2333 = vst.msk [vmem:[#allocation3] sm:$0xff] %vm2332, %v2327
        %2334 = vst.msk [vmem:[#allocation3 + $0x8] sm:$0xff] %vm2332, %v2329
        %v2335 = vld [vmem:[#allocation3] sm:$0xff]
        %v2336 = vld [vmem:[#allocation3 + $0x8] sm:$0xff]
        %v2337 = vpack.c.bf16 %v2336, %v2335
        %v2338 = vld [vmem:[%s808] sm:$0xf]
        %v2339 = vld [vmem:[%s808 + $0x4] sm:$0xf]
        %v2340 = vld [vmem:[%s808 + $0x8] sm:$0xf]
        %v2341 = vld [vmem:[%s808 + $0xc] sm:$0xf]
        %v2342 = vld [vmem:[%s808 + $0x10] sm:$0xf]
        %v2343 = vld [vmem:[%s808 + $0x14] sm:$0xf]
        %v2344 = vld [vmem:[%s808 + $0x18] sm:$0xf]
        %v2345 = vld [vmem:[%s808 + $0x1c] sm:$0xf]
        %v2346 = vld [vmem:[%s808 + $0x20] sm:$0xf]
        %v2347 = vld [vmem:[%s808 + $0x24] sm:$0xf]
        %v2348 = vld [vmem:[%s808 + $0x28] sm:$0xf]
        %v2349 = vld [vmem:[%s808 + $0x2c] sm:$0xf]
        %v2350 = vld [vmem:[%s808 + $0x30] sm:$0xf]
        %v2351 = vld [vmem:[%s808 + $0x34] sm:$0xf]
        %v2352 = vld [vmem:[%s808 + $0x38] sm:$0xf]
        %v2353 = vld [vmem:[%s808 + $0x3c] sm:$0xf]
        %v2354 = vld [vmem:[%s816] sm:$0x1]
        %v2356 = vlaneseq
        %v2357 = vshrl.u32 %v2356, 7
        %v2358 = vsub.s32 0, %v2357
        %v2359 = vrot.slane %v2354, %v2358
        %v2377 = vunpack.c.l.b16 %v2338
        %v2378 = vunpack.c.l.b16 %v2339
        %v2379 = vunpack.c.l.b16 %v2340
        %v2380 = vunpack.c.l.b16 %v2341
        %v2381 = vunpack.c.l.b16 %v2342
        %v2382 = vunpack.c.l.b16 %v2343
        %v2383 = vunpack.c.l.b16 %v2344
        %v2384 = vunpack.c.l.b16 %v2345
        %v2385 = vunpack.c.l.b16 %v2346
        %v2386 = vunpack.c.l.b16 %v2347
        %v2387 = vunpack.c.l.b16 %v2348
        %v2388 = vunpack.c.l.b16 %v2349
        %v2389 = vunpack.c.l.b16 %v2350
        %v2390 = vunpack.c.l.b16 %v2351
        %v2391 = vunpack.c.l.b16 %v2352
        %v2392 = vunpack.c.l.b16 %v2353
        %v2393 = vpack.c.b16 %v2378, %v2377
        %v2394 = vpack.c.b16 %v2380, %v2379
        %v2395 = vpack.c.b16 %v2382, %v2381
        %v2396 = vpack.c.b16 %v2384, %v2383
        %v2397 = vpack.c.b16 %v2386, %v2385
        %v2398 = vpack.c.b16 %v2388, %v2387
        %v2399 = vpack.c.b16 %v2390, %v2389
        %v2400 = vpack.c.b16 %v2392, %v2391
        %2409 = vmatprep.subr.bf16.mxu0 0
        %2410 = vmatpush1.bf16.msra.mxu0 %v2393
        %2411 = vmatprep.subr.bf16.mxu0 0
        %2412 = vmatpush1.bf16.msra.mxu0 %v2394
        %2413 = vmatprep.subr.bf16.mxu0 0
        %2414 = vmatpush1.bf16.msra.mxu0 %v2395
        %2415 = vmatprep.subr.bf16.mxu0 0
        %2416 = vmatpush1.bf16.msra.mxu0 %v2396
        %2417 = vmatprep.subr.bf16.mxu0 0
        %2418 = vmatpush1.bf16.msra.mxu0 %v2397
        %2419 = vmatprep.subr.bf16.mxu0 0
        %2420 = vmatpush1.bf16.msra.mxu0 %v2398
        %2421 = vmatprep.subr.bf16.mxu0 0
        %2422 = vmatpush1.bf16.msra.mxu0 %v2399
        %2423 = vmatprep.subr.bf16.mxu0 0
        %2424 = vmatpush1.bf16.msra.mxu0 %v2400
        %2425 = vmatprep.subr.bf16.mxu0 0
        %2426 = vmatpush1.bf16.msra.mxu0 0
        %2427 = vmatprep.subr.bf16.mxu0 0
        %2428 = vmatpush1.bf16.msra.mxu0 0
        %2429 = vmatprep.subr.bf16.mxu0 0
        %2430 = vmatpush1.bf16.msra.mxu0 0
        %2431 = vmatprep.subr.bf16.mxu0 0
        %2432 = vmatpush1.bf16.msra.mxu0 0
        %2433 = vmatprep.subr.bf16.mxu0 0
        %2434 = vmatpush1.bf16.msra.mxu0 0
        %2435 = vmatprep.subr.bf16.mxu0 0
        %2436 = vmatpush1.bf16.msra.mxu0 0
        %2437 = vmatprep.subr.bf16.mxu0 0
        %2438 = vmatpush1.bf16.msra.mxu0 0
        %2439 = vmatprep.subr.bf16.mxu0 0
        %2440 = vmatpush1.bf16.msra.mxu0 0
        %2441 = vmatprep.mubr.bf16.mxu0 0
        %2442 = vmatmul.mubr.bf16.gmra.mrb[0].mxu0 %v2337
        %v2443 = vpop.f32.mrb[0].mxu0
        %v2444 = vadd.f32 %v2359, %v2443
        %v2445 = vpop.f32.mrb[0].mxu0
        %v2446 = vpop.f32.mrb[0].mxu0
        %v2447 = vadd.f32 %v2359, %v2446
        %v2448 = vpop.f32.mrb[0].mxu0
        %2449 = vdwg.mxu0
        %v2450 = vadd.f32 %v1020, %v2444
        %v2451 = vadd.f32 %v1021, %v2447
        %v2452 = vld [vmem:[%s1006] sm:$0x1]
        %v2453 = vld [vmem:[%s1009] sm:$0x1]
        %2454 = vadd.xlane.f32.xlu0 %v2450
        %v2455 = vpop.xlane.xlu0 %2454
        %2456 = vadd.xlane.f32.xlu0 %v2451
        %v2457 = vpop.xlane.xlu0 %2456
        %v2458 = vmul.f32 %v2455, %v1028
        %v2459 = vmul.f32 %v2457, %v1028
        %v2460 = vsub.f32 %v2450, %v2458
        %v2461 = vsub.f32 %v2451, %v2459
        %v2462 = vmul.f32 %v2460, %v2460
        %v2463 = vmul.f32 %v2461, %v2461
        %2464 = vadd.xlane.f32.xlu0 %v2462
        %v2465 = vpop.xlane.xlu0 %2464
        %2466 = vadd.xlane.f32.xlu0 %v2463
        %v2467 = vpop.xlane.xlu0 %2466
        %v2468 = vmul.f32 %v2465, %v1028
        %v2469 = vmul.f32 %v2467, %v1028
        %v2470 = vadd.f32 %v2468, 1e-05
        %v2471 = vadd.f32 %v2469, 1e-05
        %v2472 = vrsqrt.pop %v2470
        %v2473 = vrsqrt.pop %v2471
        %v2474 = vmul.f32 %v2460, %v2472
        %v2475 = vmul.f32 %v2461, %v2473
        %v2477 = vlaneseq
        %v2478 = vshrl.u32 %v2477, 7
        %v2479 = vsub.s32 0, %v2478
        %v2480 = vrot.slane %v2452, %v2479
        %v2482 = vmul.f32 %v2474, %v2480
        %v2483 = vmul.f32 %v2475, %v2480
        %v2485 = vlaneseq
        %v2486 = vshrl.u32 %v2485, 7
        %v2487 = vsub.s32 0, %v2486
        %v2488 = vrot.slane %v2453, %v2487
        %v2490 = vadd.f32 %v2482, %v2488
        %v2491 = vadd.f32 %v2483, %v2488
        %v2492 = vpack.c.bf16 %v2491, %v2490
        %v2493 = vld [vmem:[%s825] sm:$0xff]
        %v2494 = vld [vmem:[%s825 + $0x8] sm:$0xff]
        %v2495 = vld [vmem:[%s825 + $0x10] sm:$0xff]
        %v2496 = vld [vmem:[%s825 + $0x18] sm:$0xff]
        %v2497 = vld [vmem:[%s825 + $0x20] sm:$0xff]
        %v2498 = vld [vmem:[%s825 + $0x28] sm:$0xff]
        %v2499 = vld [vmem:[%s825 + $0x30] sm:$0xff]
        %v2500 = vld [vmem:[%s825 + $0x38] sm:$0xff]
        %v2501 = vld [vmem:[%s825 + $0x40] sm:$0xff]
        %v2502 = vld [vmem:[%s825 + $0x48] sm:$0xff]
        %v2503 = vld [vmem:[%s825 + $0x50] sm:$0xff]
        %v2504 = vld [vmem:[%s825 + $0x58] sm:$0xff]
        %v2505 = vld [vmem:[%s825 + $0x60] sm:$0xff]
        %v2506 = vld [vmem:[%s825 + $0x68] sm:$0xff]
        %v2507 = vld [vmem:[%s825 + $0x70] sm:$0xff]
        %v2508 = vld [vmem:[%s825 + $0x78] sm:$0xff]
        %v2509 = vld [vmem:[%s825 + $0x80] sm:$0xff]
        %v2510 = vld [vmem:[%s825 + $0x88] sm:$0xff]
        %v2511 = vld [vmem:[%s825 + $0x90] sm:$0xff]
        %v2512 = vld [vmem:[%s825 + $0x98] sm:$0xff]
        %v2513 = vld [vmem:[%s825 + $0xa0] sm:$0xff]
        %v2514 = vld [vmem:[%s825 + $0xa8] sm:$0xff]
        %v2515 = vld [vmem:[%s825 + $0xb0] sm:$0xff]
        %v2516 = vld [vmem:[%s825 + $0xb8] sm:$0xff]
        %v2517 = vld [vmem:[%s825 + $0xc0] sm:$0xff]
        %v2518 = vld [vmem:[%s825 + $0xc8] sm:$0xff]
        %v2519 = vld [vmem:[%s825 + $0xd0] sm:$0xff]
        %v2520 = vld [vmem:[%s825 + $0xd8] sm:$0xff]
        %v2521 = vld [vmem:[%s825 + $0xe0] sm:$0xff]
        %v2522 = vld [vmem:[%s825 + $0xe8] sm:$0xff]
        %v2523 = vld [vmem:[%s825 + $0xf0] sm:$0xff]
        %v2524 = vld [vmem:[%s825 + $0xf8] sm:$0xff]
        %v2525 = vld [vmem:[%s834] sm:$0xf]
        %v2527 = vlaneseq
        %v2528 = vshrl.u32 %v2527, 7
        %v2529 = vsub.s32 0, %v2528
        %v2530 = vrot.slane %v2525, %v2529
        %v2531 = vlaneseq
        %v2532 = vshrl.u32 %v2531, 7
        %v2533 = vsub.s32 1, %v2532
        %v2534 = vrot.slane %v2525, %v2533
        %v2535 = vlaneseq
        %v2536 = vshrl.u32 %v2535, 7
        %v2537 = vsub.s32 2, %v2536
        %v2538 = vrot.slane %v2525, %v2537
        %v2539 = vlaneseq
        %v2540 = vshrl.u32 %v2539, 7
        %v2541 = vsub.s32 3, %v2540
        %v2542 = vrot.slane %v2525, %v2541
        %v2579 = vunpack.c.l.b16 %v2493
        %v2580 = vunpack.c.h.b16 %v2493
        %v2581 = vunpack.c.l.b16 %v2494
        %v2582 = vunpack.c.h.b16 %v2494
        %v2583 = vunpack.c.l.b16 %v2495
        %v2584 = vunpack.c.h.b16 %v2495
        %v2585 = vunpack.c.l.b16 %v2496
        %v2586 = vunpack.c.h.b16 %v2496
        %v2587 = vunpack.c.l.b16 %v2497
        %v2588 = vunpack.c.h.b16 %v2497
        %v2589 = vunpack.c.l.b16 %v2498
        %v2590 = vunpack.c.h.b16 %v2498
        %v2591 = vunpack.c.l.b16 %v2499
        %v2592 = vunpack.c.h.b16 %v2499
        %v2593 = vunpack.c.l.b16 %v2500
        %v2594 = vunpack.c.h.b16 %v2500
        %v2595 = vunpack.c.l.b16 %v2501
        %v2596 = vunpack.c.h.b16 %v2501
        %v2597 = vunpack.c.l.b16 %v2502
        %v2598 = vunpack.c.h.b16 %v2502
        %v2599 = vunpack.c.l.b16 %v2503
        %v2600 = vunpack.c.h.b16 %v2503
        %v2601 = vunpack.c.l.b16 %v2504
        %v2602 = vunpack.c.h.b16 %v2504
        %v2603 = vunpack.c.l.b16 %v2505
        %v2604 = vunpack.c.h.b16 %v2505
        %v2605 = vunpack.c.l.b16 %v2506
        %v2606 = vunpack.c.h.b16 %v2506
        %v2607 = vunpack.c.l.b16 %v2507
        %v2608 = vunpack.c.h.b16 %v2507
        %v2609 = vunpack.c.l.b16 %v2508
        %v2610 = vunpack.c.h.b16 %v2508
        %v2611 = vunpack.c.l.b16 %v2509
        %v2612 = vunpack.c.h.b16 %v2509
        %v2613 = vunpack.c.l.b16 %v2510
        %v2614 = vunpack.c.h.b16 %v2510
        %v2615 = vunpack.c.l.b16 %v2511
        %v2616 = vunpack.c.h.b16 %v2511
        %v2617 = vunpack.c.l.b16 %v2512
        %v2618 = vunpack.c.h.b16 %v2512
        %v2619 = vunpack.c.l.b16 %v2513
        %v2620 = vunpack.c.h.b16 %v2513
        %v2621 = vunpack.c.l.b16 %v2514
        %v2622 = vunpack.c.h.b16 %v2514
        %v2623 = vunpack.c.l.b16 %v2515
        %v2624 = vunpack.c.h.b16 %v2515
        %v2625 = vunpack.c.l.b16 %v2516
        %v2626 = vunpack.c.h.b16 %v2516
        %v2627 = vunpack.c.l.b16 %v2517
        %v2628 = vunpack.c.h.b16 %v2517
        %v2629 = vunpack.c.l.b16 %v2518
        %v2630 = vunpack.c.h.b16 %v2518
        %v2631 = vunpack.c.l.b16 %v2519
        %v2632 = vunpack.c.h.b16 %v2519
        %v2633 = vunpack.c.l.b16 %v2520
        %v2634 = vunpack.c.h.b16 %v2520
        %v2635 = vunpack.c.l.b16 %v2521
        %v2636 = vunpack.c.h.b16 %v2521
        %v2637 = vunpack.c.l.b16 %v2522
        %v2638 = vunpack.c.h.b16 %v2522
        %v2639 = vunpack.c.l.b16 %v2523
        %v2640 = vunpack.c.h.b16 %v2523
        %v2641 = vunpack.c.l.b16 %v2524
        %v2642 = vunpack.c.h.b16 %v2524
        %v2643 = vpack.c.b16 %v2583, %v2579
        %v2644 = vpack.c.b16 %v2584, %v2580
        %v2645 = vpack.c.b16 %v2585, %v2581
        %v2646 = vpack.c.b16 %v2586, %v2582
        %v2647 = vpack.c.b16 %v2591, %v2587
        %v2648 = vpack.c.b16 %v2592, %v2588
        %v2649 = vpack.c.b16 %v2593, %v2589
        %v2650 = vpack.c.b16 %v2594, %v2590
        %v2651 = vpack.c.b16 %v2599, %v2595
        %v2652 = vpack.c.b16 %v2600, %v2596
        %v2653 = vpack.c.b16 %v2601, %v2597
        %v2654 = vpack.c.b16 %v2602, %v2598
        %v2655 = vpack.c.b16 %v2607, %v2603
        %v2656 = vpack.c.b16 %v2608, %v2604
        %v2657 = vpack.c.b16 %v2609, %v2605
        %v2658 = vpack.c.b16 %v2610, %v2606
        %v2659 = vpack.c.b16 %v2615, %v2611
        %v2660 = vpack.c.b16 %v2616, %v2612
        %v2661 = vpack.c.b16 %v2617, %v2613
        %v2662 = vpack.c.b16 %v2618, %v2614
        %v2663 = vpack.c.b16 %v2623, %v2619
        %v2664 = vpack.c.b16 %v2624, %v2620
        %v2665 = vpack.c.b16 %v2625, %v2621
        %v2666 = vpack.c.b16 %v2626, %v2622
        %v2667 = vpack.c.b16 %v2631, %v2627
        %v2668 = vpack.c.b16 %v2632, %v2628
        %v2669 = vpack.c.b16 %v2633, %v2629
        %v2670 = vpack.c.b16 %v2634, %v2630
        %v2671 = vpack.c.b16 %v2639, %v2635
        %v2672 = vpack.c.b16 %v2640, %v2636
        %v2673 = vpack.c.b16 %v2641, %v2637
        %v2674 = vpack.c.b16 %v2642, %v2638
        %2707 = vmatprep.subr.bf16.mxu0 %v2644
        %2708 = vmatpush1.bf16.msra.mxu0 %v2643
        %2709 = vmatprep.subr.bf16.mxu0 %v2648
        %2710 = vmatpush1.bf16.msra.mxu0 %v2647
        %2711 = vmatprep.subr.bf16.mxu0 %v2652
        %2712 = vmatpush1.bf16.msra.mxu0 %v2651
        %2713 = vmatprep.subr.bf16.mxu0 %v2656
        %2714 = vmatpush1.bf16.msra.mxu0 %v2655
        %2715 = vmatprep.subr.bf16.mxu0 %v2660
        %2716 = vmatpush1.bf16.msra.mxu0 %v2659
        %2717 = vmatprep.subr.bf16.mxu0 %v2664
        %2718 = vmatpush1.bf16.msra.mxu0 %v2663
        %2719 = vmatprep.subr.bf16.mxu0 %v2668
        %2720 = vmatpush1.bf16.msra.mxu0 %v2667
        %2721 = vmatprep.subr.bf16.mxu0 %v2672
        %2722 = vmatpush1.bf16.msra.mxu0 %v2671
        %2723 = vmatprep.subr.bf16.mxu0 0
        %2724 = vmatpush1.bf16.msra.mxu0 0
        %2725 = vmatprep.subr.bf16.mxu0 0
        %2726 = vmatpush1.bf16.msra.mxu0 0
        %2727 = vmatprep.subr.bf16.mxu0 0
        %2728 = vmatpush1.bf16.msra.mxu0 0
        %2729 = vmatprep.subr.bf16.mxu0 0
        %2730 = vmatpush1.bf16.msra.mxu0 0
        %2731 = vmatprep.subr.bf16.mxu0 0
        %2732 = vmatpush1.bf16.msra.mxu0 0
        %2733 = vmatprep.subr.bf16.mxu0 0
        %2734 = vmatpush1.bf16.msra.mxu0 0
        %2735 = vmatprep.subr.bf16.mxu0 0
        %2736 = vmatpush1.bf16.msra.mxu0 0
        %2737 = vmatprep.subr.bf16.mxu0 0
        %2738 = vmatpush1.bf16.msra.mxu0 0
        %2739 = vmatprep.mubr.bf16.mxu0 0
        %2740 = vmatmul.mubr.bf16.gmra.mrb[0].mxu0 %v2492
        %v2741 = vpop.f32.mrb[0].mxu0
        %v2742 = vadd.f32 %v2530, %v2741
        %v2743 = vpop.f32.mrb[0].mxu0
        %v2744 = vadd.f32 %v2534, %v2743
        %v2745 = vpop.f32.mrb[0].mxu0
        %v2746 = vadd.f32 %v2530, %v2745
        %v2747 = vpop.f32.mrb[0].mxu0
        %v2748 = vadd.f32 %v2534, %v2747
        %2749 = vdwg.mxu0
        %2750 = vmatprep.subr.bf16.mxu0 %v2646
        %2751 = vmatpush1.bf16.msra.mxu0 %v2645
        %2752 = vmatprep.subr.bf16.mxu0 %v2650
        %2753 = vmatpush1.bf16.msra.mxu0 %v2649
        %2754 = vmatprep.subr.bf16.mxu0 %v2654
        %2755 = vmatpush1.bf16.msra.mxu0 %v2653
        %2756 = vmatprep.subr.bf16.mxu0 %v2658
        %2757 = vmatpush1.bf16.msra.mxu0 %v2657
        %2758 = vmatprep.subr.bf16.mxu0 %v2662
        %2759 = vmatpush1.bf16.msra.mxu0 %v2661
        %2760 = vmatprep.subr.bf16.mxu0 %v2666
        %2761 = vmatpush1.bf16.msra.mxu0 %v2665
        %2762 = vmatprep.subr.bf16.mxu0 %v2670
        %2763 = vmatpush1.bf16.msra.mxu0 %v2669
        %2764 = vmatprep.subr.bf16.mxu0 %v2674
        %2765 = vmatpush1.bf16.msra.mxu0 %v2673
        %2766 = vmatprep.subr.bf16.mxu0 0
        %2767 = vmatpush1.bf16.msra.mxu0 0
        %2768 = vmatprep.subr.bf16.mxu0 0
        %2769 = vmatpush1.bf16.msra.mxu0 0
        %2770 = vmatprep.subr.bf16.mxu0 0
        %2771 = vmatpush1.bf16.msra.mxu0 0
        %2772 = vmatprep.subr.bf16.mxu0 0
        %2773 = vmatpush1.bf16.msra.mxu0 0
        %2774 = vmatprep.subr.bf16.mxu0 0
        %2775 = vmatpush1.bf16.msra.mxu0 0
        %2776 = vmatprep.subr.bf16.mxu0 0
        %2777 = vmatpush1.bf16.msra.mxu0 0
        %2778 = vmatprep.subr.bf16.mxu0 0
        %2779 = vmatpush1.bf16.msra.mxu0 0
        %2780 = vmatprep.subr.bf16.mxu0 0
        %2781 = vmatpush1.bf16.msra.mxu0 0
        %2782 = vmatprep.mubr.bf16.mxu0 0
        %2783 = vmatmul.mubr.bf16.gmra.mrb[0].mxu0 %v2492
        %v2784 = vpop.f32.mrb[0].mxu0
        %v2785 = vadd.f32 %v2538, %v2784
        %v2786 = vpop.f32.mrb[0].mxu0
        %v2787 = vadd.f32 %v2542, %v2786
        %v2788 = vpop.f32.mrb[0].mxu0
        %v2789 = vadd.f32 %v2538, %v2788
        %v2790 = vpop.f32.mrb[0].mxu0
        %v2791 = vadd.f32 %v2542, %v2790
        %2792 = vdwg.mxu0
        %v2793 = vmul.f32 %v2742, 1.702
        %v2794 = vmul.f32 %v2744, 1.702
        %v2795 = vmul.f32 %v2785, 1.702
        %v2796 = vmul.f32 %v2787, 1.702
        %v2797 = vmul.f32 %v2746, 1.702
        %v2798 = vmul.f32 %v2748, 1.702
        %v2799 = vmul.f32 %v2789, 1.702
        %v2800 = vmul.f32 %v2791, 1.702
        %v2801 = vxor.u32 %v2793, 2147483648
        %v2802 = vxor.u32 %v2794, 2147483648
        %v2803 = vxor.u32 %v2795, 2147483648
        %v2804 = vxor.u32 %v2796, 2147483648
        %v2805 = vxor.u32 %v2797, 2147483648
        %v2806 = vxor.u32 %v2798, 2147483648
        %v2807 = vxor.u32 %v2799, 2147483648
        %v2808 = vxor.u32 %v2800, 2147483648
        %v2809 = vmul.f32 %v2801, 1.442695
        %v2810 = vpow.pop %v2809
        %v2811 = vmul.f32 %v2802, 1.442695
        %v2812 = vpow.pop %v2811
        %v2813 = vmul.f32 %v2803, 1.442695
        %v2814 = vpow.pop %v2813
        %v2815 = vmul.f32 %v2804, 1.442695
        %v2816 = vpow.pop %v2815
        %v2817 = vmul.f32 %v2805, 1.442695
        %v2818 = vpow.pop %v2817
        %v2819 = vmul.f32 %v2806, 1.442695
        %v2820 = vpow.pop %v2819
        %v2821 = vmul.f32 %v2807, 1.442695
        %v2822 = vpow.pop %v2821
        %v2823 = vmul.f32 %v2808, 1.442695
        %v2824 = vpow.pop %v2823
        %v2825 = vadd.f32 %v2810, 1.0
        %v2826 = vadd.f32 %v2812, 1.0
        %v2827 = vadd.f32 %v2814, 1.0
        %v2828 = vadd.f32 %v2816, 1.0
        %v2829 = vadd.f32 %v2818, 1.0
        %v2830 = vadd.f32 %v2820, 1.0
        %v2831 = vadd.f32 %v2822, 1.0
        %v2832 = vadd.f32 %v2824, 1.0
        %v2833 = vrcp.pop %v2825
        %v2834 = vmul.f32 1.0, %v2833
        %v2835 = vrcp.pop %v2826
        %v2836 = vmul.f32 1.0, %v2835
        %v2837 = vrcp.pop %v2827
        %v2838 = vmul.f32 1.0, %v2837
        %v2839 = vrcp.pop %v2828
        %v2840 = vmul.f32 1.0, %v2839
        %v2841 = vrcp.pop %v2829
        %v2842 = vmul.f32 1.0, %v2841
        %v2843 = vrcp.pop %v2830
        %v2844 = vmul.f32 1.0, %v2843
        %v2845 = vrcp.pop %v2831
        %v2846 = vmul.f32 1.0, %v2845
        %v2847 = vrcp.pop %v2832
        %v2848 = vmul.f32 1.0, %v2847
        %v2849 = vmul.f32 %v2742, %v2834
        %v2850 = vmul.f32 %v2744, %v2836
        %v2851 = vmul.f32 %v2785, %v2838
        %v2852 = vmul.f32 %v2787, %v2840
        %v2853 = vmul.f32 %v2746, %v2842
        %v2854 = vmul.f32 %v2748, %v2844
        %v2855 = vmul.f32 %v2789, %v2846
        %v2856 = vmul.f32 %v2791, %v2848
        %v2857 = vpack.c.bf16 %v2853, %v2849
        %v2858 = vpack.c.bf16 %v2854, %v2850
        %v2859 = vpack.c.bf16 %v2855, %v2851
        %v2860 = vpack.c.bf16 %v2856, %v2852
        %v2861 = vld [vmem:[%s843] sm:$0xf]
        %v2862 = vld [vmem:[%s843 + $0x4] sm:$0xf]
        %v2863 = vld [vmem:[%s843 + $0x8] sm:$0xf]
        %v2864 = vld [vmem:[%s843 + $0xc] sm:$0xf]
        %v2865 = vld [vmem:[%s843 + $0x10] sm:$0xf]
        %v2866 = vld [vmem:[%s843 + $0x14] sm:$0xf]
        %v2867 = vld [vmem:[%s843 + $0x18] sm:$0xf]
        %v2868 = vld [vmem:[%s843 + $0x1c] sm:$0xf]
        %v2869 = vld [vmem:[%s843 + $0x20] sm:$0xf]
        %v2870 = vld [vmem:[%s843 + $0x24] sm:$0xf]
        %v2871 = vld [vmem:[%s843 + $0x28] sm:$0xf]
        %v2872 = vld [vmem:[%s843 + $0x2c] sm:$0xf]
        %v2873 = vld [vmem:[%s843 + $0x30] sm:$0xf]
        %v2874 = vld [vmem:[%s843 + $0x34] sm:$0xf]
        %v2875 = vld [vmem:[%s843 + $0x38] sm:$0xf]
        %v2876 = vld [vmem:[%s843 + $0x3c] sm:$0xf]
        %v2877 = vld [vmem:[%s843 + $0x40] sm:$0xf]
        %v2878 = vld [vmem:[%s843 + $0x44] sm:$0xf]
        %v2879 = vld [vmem:[%s843 + $0x48] sm:$0xf]
        %v2880 = vld [vmem:[%s843 + $0x4c] sm:$0xf]
        %v2881 = vld [vmem:[%s843 + $0x50] sm:$0xf]
        %v2882 = vld [vmem:[%s843 + $0x54] sm:$0xf]
        %v2883 = vld [vmem:[%s843 + $0x58] sm:$0xf]
        %v2884 = vld [vmem:[%s843 + $0x5c] sm:$0xf]
        %v2885 = vld [vmem:[%s843 + $0x60] sm:$0xf]
        %v2886 = vld [vmem:[%s843 + $0x64] sm:$0xf]
        %v2887 = vld [vmem:[%s843 + $0x68] sm:$0xf]
        %v2888 = vld [vmem:[%s843 + $0x6c] sm:$0xf]
        %v2889 = vld [vmem:[%s843 + $0x70] sm:$0xf]
        %v2890 = vld [vmem:[%s843 + $0x74] sm:$0xf]
        %v2891 = vld [vmem:[%s843 + $0x78] sm:$0xf]
        %v2892 = vld [vmem:[%s843 + $0x7c] sm:$0xf]
        %v2893 = vld [vmem:[%s843 + $0x80] sm:$0xf]
        %v2894 = vld [vmem:[%s843 + $0x84] sm:$0xf]
        %v2895 = vld [vmem:[%s843 + $0x88] sm:$0xf]
        %v2896 = vld [vmem:[%s843 + $0x8c] sm:$0xf]
        %v2897 = vld [vmem:[%s843 + $0x90] sm:$0xf]
        %v2898 = vld [vmem:[%s843 + $0x94] sm:$0xf]
        %v2899 = vld [vmem:[%s843 + $0x98] sm:$0xf]
        %v2900 = vld [vmem:[%s843 + $0x9c] sm:$0xf]
        %v2901 = vld [vmem:[%s843 + $0xa0] sm:$0xf]
        %v2902 = vld [vmem:[%s843 + $0xa4] sm:$0xf]
        %v2903 = vld [vmem:[%s843 + $0xa8] sm:$0xf]
        %v2904 = vld [vmem:[%s843 + $0xac] sm:$0xf]
        %v2905 = vld [vmem:[%s843 + $0xb0] sm:$0xf]
        %v2906 = vld [vmem:[%s843 + $0xb4] sm:$0xf]
        %v2907 = vld [vmem:[%s843 + $0xb8] sm:$0xf]
        %v2908 = vld [vmem:[%s843 + $0xbc] sm:$0xf]
        %v2909 = vld [vmem:[%s843 + $0xc0] sm:$0xf]
        %v2910 = vld [vmem:[%s843 + $0xc4] sm:$0xf]
        %v2911 = vld [vmem:[%s843 + $0xc8] sm:$0xf]
        %v2912 = vld [vmem:[%s843 + $0xcc] sm:$0xf]
        %v2913 = vld [vmem:[%s843 + $0xd0] sm:$0xf]
        %v2914 = vld [vmem:[%s843 + $0xd4] sm:$0xf]
        %v2915 = vld [vmem:[%s843 + $0xd8] sm:$0xf]
        %v2916 = vld [vmem:[%s843 + $0xdc] sm:$0xf]
        %v2917 = vld [vmem:[%s843 + $0xe0] sm:$0xf]
        %v2918 = vld [vmem:[%s843 + $0xe4] sm:$0xf]
        %v2919 = vld [vmem:[%s843 + $0xe8] sm:$0xf]
        %v2920 = vld [vmem:[%s843 + $0xec] sm:$0xf]
        %v2921 = vld [vmem:[%s843 + $0xf0] sm:$0xf]
        %v2922 = vld [vmem:[%s843 + $0xf4] sm:$0xf]
        %v2923 = vld [vmem:[%s843 + $0xf8] sm:$0xf]
        %v2924 = vld [vmem:[%s843 + $0xfc] sm:$0xf]
        %v2925 = vld [vmem:[%s851] sm:$0x1]
        %v2927 = vlaneseq
        %v2928 = vshrl.u32 %v2927, 7
        %v2929 = vsub.s32 0, %v2928
        %v2930 = vrot.slane %v2925, %v2929
        %v2996 = vunpack.c.l.b16 %v2861
        %v2997 = vunpack.c.l.b16 %v2862
        %v2998 = vunpack.c.l.b16 %v2863
        %v2999 = vunpack.c.l.b16 %v2864
        %v3000 = vunpack.c.l.b16 %v2865
        %v3001 = vunpack.c.l.b16 %v2866
        %v3002 = vunpack.c.l.b16 %v2867
        %v3003 = vunpack.c.l.b16 %v2868
        %v3004 = vunpack.c.l.b16 %v2869
        %v3005 = vunpack.c.l.b16 %v2870
        %v3006 = vunpack.c.l.b16 %v2871
        %v3007 = vunpack.c.l.b16 %v2872
        %v3008 = vunpack.c.l.b16 %v2873
        %v3009 = vunpack.c.l.b16 %v2874
        %v3010 = vunpack.c.l.b16 %v2875
        %v3011 = vunpack.c.l.b16 %v2876
        %v3012 = vunpack.c.l.b16 %v2877
        %v3013 = vunpack.c.l.b16 %v2878
        %v3014 = vunpack.c.l.b16 %v2879
        %v3015 = vunpack.c.l.b16 %v2880
        %v3016 = vunpack.c.l.b16 %v2881
        %v3017 = vunpack.c.l.b16 %v2882
        %v3018 = vunpack.c.l.b16 %v2883
        %v3019 = vunpack.c.l.b16 %v2884
        %v3020 = vunpack.c.l.b16 %v2885
        %v3021 = vunpack.c.l.b16 %v2886
        %v3022 = vunpack.c.l.b16 %v2887
        %v3023 = vunpack.c.l.b16 %v2888
        %v3024 = vunpack.c.l.b16 %v2889
        %v3025 = vunpack.c.l.b16 %v2890
        %v3026 = vunpack.c.l.b16 %v2891
        %v3027 = vunpack.c.l.b16 %v2892
        %v3028 = vunpack.c.l.b16 %v2893
        %v3029 = vunpack.c.l.b16 %v2894
        %v3030 = vunpack.c.l.b16 %v2895
        %v3031 = vunpack.c.l.b16 %v2896
        %v3032 = vunpack.c.l.b16 %v2897
        %v3033 = vunpack.c.l.b16 %v2898
        %v3034 = vunpack.c.l.b16 %v2899
        %v3035 = vunpack.c.l.b16 %v2900
        %v3036 = vunpack.c.l.b16 %v2901
        %v3037 = vunpack.c.l.b16 %v2902
        %v3038 = vunpack.c.l.b16 %v2903
        %v3039 = vunpack.c.l.b16 %v2904
        %v3040 = vunpack.c.l.b16 %v2905
        %v3041 = vunpack.c.l.b16 %v2906
        %v3042 = vunpack.c.l.b16 %v2907
        %v3043 = vunpack.c.l.b16 %v2908
        %v3044 = vunpack.c.l.b16 %v2909
        %v3045 = vunpack.c.l.b16 %v2910
        %v3046 = vunpack.c.l.b16 %v2911
        %v3047 = vunpack.c.l.b16 %v2912
        %v3048 = vunpack.c.l.b16 %v2913
        %v3049 = vunpack.c.l.b16 %v2914
        %v3050 = vunpack.c.l.b16 %v2915
        %v3051 = vunpack.c.l.b16 %v2916
        %v3052 = vunpack.c.l.b16 %v2917
        %v3053 = vunpack.c.l.b16 %v2918
        %v3054 = vunpack.c.l.b16 %v2919
        %v3055 = vunpack.c.l.b16 %v2920
        %v3056 = vunpack.c.l.b16 %v2921
        %v3057 = vunpack.c.l.b16 %v2922
        %v3058 = vunpack.c.l.b16 %v2923
        %v3059 = vunpack.c.l.b16 %v2924
        %v3060 = vpack.c.b16 %v2997, %v2996
        %v3061 = vpack.c.b16 %v2999, %v2998
        %v3062 = vpack.c.b16 %v3001, %v3000
        %v3063 = vpack.c.b16 %v3003, %v3002
        %v3064 = vpack.c.b16 %v3005, %v3004
        %v3065 = vpack.c.b16 %v3007, %v3006
        %v3066 = vpack.c.b16 %v3009, %v3008
        %v3067 = vpack.c.b16 %v3011, %v3010
        %v3068 = vpack.c.b16 %v3013, %v3012
        %v3069 = vpack.c.b16 %v3015, %v3014
        %v3070 = vpack.c.b16 %v3017, %v3016
        %v3071 = vpack.c.b16 %v3019, %v3018
        %v3072 = vpack.c.b16 %v3021, %v3020
        %v3073 = vpack.c.b16 %v3023, %v3022
        %v3074 = vpack.c.b16 %v3025, %v3024
        %v3075 = vpack.c.b16 %v3027, %v3026
        %v3076 = vpack.c.b16 %v3029, %v3028
        %v3077 = vpack.c.b16 %v3031, %v3030
        %v3078 = vpack.c.b16 %v3033, %v3032
        %v3079 = vpack.c.b16 %v3035, %v3034
        %v3080 = vpack.c.b16 %v3037, %v3036
        %v3081 = vpack.c.b16 %v3039, %v3038
        %v3082 = vpack.c.b16 %v3041, %v3040
        %v3083 = vpack.c.b16 %v3043, %v3042
        %v3084 = vpack.c.b16 %v3045, %v3044
        %v3085 = vpack.c.b16 %v3047, %v3046
        %v3086 = vpack.c.b16 %v3049, %v3048
        %v3087 = vpack.c.b16 %v3051, %v3050
        %v3088 = vpack.c.b16 %v3053, %v3052
        %v3089 = vpack.c.b16 %v3055, %v3054
        %v3090 = vpack.c.b16 %v3057, %v3056
        %v3091 = vpack.c.b16 %v3059, %v3058
        %3124 = vmatprep.subr.bf16.mxu0 0
        %3125 = vmatpush1.bf16.msra.mxu0 %v3060
        %3126 = vmatprep.subr.bf16.mxu0 0
        %3127 = vmatpush1.bf16.msra.mxu0 %v3061
        %3128 = vmatprep.subr.bf16.mxu0 0
        %3129 = vmatpush1.bf16.msra.mxu0 %v3062
        %3130 = vmatprep.subr.bf16.mxu0 0
        %3131 = vmatpush1.bf16.msra.mxu0 %v3063
        %3132 = vmatprep.subr.bf16.mxu0 0
        %3133 = vmatpush1.bf16.msra.mxu0 %v3064
        %3134 = vmatprep.subr.bf16.mxu0 0
        %3135 = vmatpush1.bf16.msra.mxu0 %v3065
        %3136 = vmatprep.subr.bf16.mxu0 0
        %3137 = vmatpush1.bf16.msra.mxu0 %v3066
        %3138 = vmatprep.subr.bf16.mxu0 0
        %3139 = vmatpush1.bf16.msra.mxu0 %v3067
        %3140 = vmatprep.subr.bf16.mxu0 0
        %3141 = vmatpush1.bf16.msra.mxu0 %v3068
        %3142 = vmatprep.subr.bf16.mxu0 0
        %3143 = vmatpush1.bf16.msra.mxu0 %v3069
        %3144 = vmatprep.subr.bf16.mxu0 0
        %3145 = vmatpush1.bf16.msra.mxu0 %v3070
        %3146 = vmatprep.subr.bf16.mxu0 0
        %3147 = vmatpush1.bf16.msra.mxu0 %v3071
        %3148 = vmatprep.subr.bf16.mxu0 0
        %3149 = vmatpush1.bf16.msra.mxu0 %v3072
        %3150 = vmatprep.subr.bf16.mxu0 0
        %3151 = vmatpush1.bf16.msra.mxu0 %v3073
        %3152 = vmatprep.subr.bf16.mxu0 0
        %3153 = vmatpush1.bf16.msra.mxu0 %v3074
        %3154 = vmatprep.subr.bf16.mxu0 0
        %3155 = vmatpush1.bf16.msra.mxu0 %v3075
        %3156 = vmatprep.mubr.bf16.mxu0 %v2858
        %3157 = vmatmul.mubr.bf16.gmra.mrb[0].mxu0 %v2857
        %v3158 = vpop.f32.mrb[0].mxu0
        %v3159 = vadd.f32 %v2930, %v3158
        %v3160 = vpop.f32.mrb[0].mxu0
        %v3161 = vpop.f32.mrb[0].mxu0
        %v3162 = vadd.f32 %v2930, %v3161
        %v3163 = vpop.f32.mrb[0].mxu0
        %3164 = vdwg.mxu0
        %3165 = vmatprep.subr.bf16.mxu0 0
        %3166 = vmatpush1.bf16.msra.mxu0 %v3076
        %3167 = vmatprep.subr.bf16.mxu0 0
        %3168 = vmatpush1.bf16.msra.mxu0 %v3077
        %3169 = vmatprep.subr.bf16.mxu0 0
        %3170 = vmatpush1.bf16.msra.mxu0 %v3078
        %3171 = vmatprep.subr.bf16.mxu0 0
        %3172 = vmatpush1.bf16.msra.mxu0 %v3079
        %3173 = vmatprep.subr.bf16.mxu0 0
        %3174 = vmatpush1.bf16.msra.mxu0 %v3080
        %3175 = vmatprep.subr.bf16.mxu0 0
        %3176 = vmatpush1.bf16.msra.mxu0 %v3081
        %3177 = vmatprep.subr.bf16.mxu0 0
        %3178 = vmatpush1.bf16.msra.mxu0 %v3082
        %3179 = vmatprep.subr.bf16.mxu0 0
        %3180 = vmatpush1.bf16.msra.mxu0 %v3083
        %3181 = vmatprep.subr.bf16.mxu0 0
        %3182 = vmatpush1.bf16.msra.mxu0 %v3084
        %3183 = vmatprep.subr.bf16.mxu0 0
        %3184 = vmatpush1.bf16.msra.mxu0 %v3085
        %3185 = vmatprep.subr.bf16.mxu0 0
        %3186 = vmatpush1.bf16.msra.mxu0 %v3086
        %3187 = vmatprep.subr.bf16.mxu0 0
        %3188 = vmatpush1.bf16.msra.mxu0 %v3087
        %3189 = vmatprep.subr.bf16.mxu0 0
        %3190 = vmatpush1.bf16.msra.mxu0 %v3088
        %3191 = vmatprep.subr.bf16.mxu0 0
        %3192 = vmatpush1.bf16.msra.mxu0 %v3089
        %3193 = vmatprep.subr.bf16.mxu0 0
        %3194 = vmatpush1.bf16.msra.mxu0 %v3090
        %3195 = vmatprep.subr.bf16.mxu0 0
        %3196 = vmatpush1.bf16.msra.mxu0 %v3091
        %3197 = vmatprep.mubr.bf16.mxu0 %v2860
        %3198 = vmatmul.mubr.bf16.gmra.mrb[0].mxu0 %v2859
        %v3199 = vpop.f32.mrb[0].mxu0
        %v3200 = vadd.f32 %v3159, %v3199
        %v3201 = vpop.f32.mrb[0].mxu0
        %v3202 = vpop.f32.mrb[0].mxu0
        %v3203 = vadd.f32 %v3162, %v3202
        %v3204 = vpop.f32.mrb[0].mxu0
        %3205 = vdwg.mxu0
        %v3206 = vadd.f32 %v2450, %v3200
        %v3207 = vadd.f32 %v2451, %v3203
        %3208 = vst [vmem:[#allocation2] sm:$0xff] %v3206
        %3209 = vst [vmem:[#allocation2 + $0x8] sm:$0xff] %v3207
        %p3210 = scmp.eq.s32.totalorder %s50, 1
        // Predicated region
        $region129: #{pubmed_clip_embed.1} parent=95 // pred_check
          %p3211 = pneg %p3210
        $region130: #{pubmed_clip_embed.1} parent=95 // pred_check_branch
          %3213 = sbr.rel (%p3211) target = $region132
        $region131: #{pubmed_clip_embed.1} parent=95 // pred_region
          %v3214 = vld [vmem:[%s17] sm:$0x1]
          %v3215 = vld [vmem:[%s18] sm:$0x1]
          %3216 = vadd.xlane.f32.xlu0 %v3206
          %v3217 = vpop.xlane.xlu0 %3216
          %3218 = vadd.xlane.f32.xlu0 %v3207
          %v3219 = vpop.xlane.xlu0 %3218
          %v3220 = vmul.f32 %v3217, %v1028
          %v3221 = vmul.f32 %v3219, %v1028
          %v3222 = vsub.f32 %v3206, %v3220
          %v3223 = vsub.f32 %v3207, %v3221
          %v3224 = vmul.f32 %v3222, %v3222
          %v3225 = vmul.f32 %v3223, %v3223
          %3226 = vadd.xlane.f32.xlu0 %v3224
          %v3227 = vpop.xlane.xlu0 %3226
          %3228 = vadd.xlane.f32.xlu0 %v3225
          %v3229 = vpop.xlane.xlu0 %3228
          %v3230 = vmul.f32 %v3227, %v1028
          %v3231 = vmul.f32 %v3229, %v1028
          %v3232 = vadd.f32 %v3230, 1e-05
          %v3233 = vadd.f32 %v3231, 1e-05
          %v3234 = vrsqrt.pop %v3232
          %v3235 = vrsqrt.pop %v3233
          %v3236 = vmul.f32 %v3222, %v3234
          %v3237 = vmul.f32 %v3223, %v3235
          %v3239 = vlaneseq
          %v3240 = vshrl.u32 %v3239, 7
          %v3241 = vsub.s32 0, %v3240
          %v3242 = vrot.slane %v3214, %v3241
          %v3244 = vmul.f32 %v3236, %v3242
          %v3245 = vmul.f32 %v3237, %v3242
          %v3247 = vlaneseq
          %v3248 = vshrl.u32 %v3247, 7
          %v3249 = vsub.s32 0, %v3248
          %v3250 = vrot.slane %v3215, %v3249
          %v3252 = vadd.f32 %v3244, %v3250
          %v3253 = vadd.f32 %v3245, %v3250
          %3254 = vst [vmem:[%s970] sm:$0xff] %v3252
          %3255 = vst [vmem:[%s970 + $0x8] sm:$0xff] %v3253
        $region132: #{pubmed_clip_embed.1} parent=95 // pred_fallthru
          _
        %s3256 = sand.u32 %s549, 1
        %s3257 = scalar_lea.sflag [#allocation6], %s3256
        %s3258 = sand.u32 %s549, 1
        %s3259 = smul.addr %s3258, 16
        %s3260 = scalar_lea.vmem [#allocation16], %s3259
        // Predicated region
        $region133: #{pubmed_clip_embed.1} parent=95 // pred_check
          %p3261 = pneg %p559
        $region134: #{pubmed_clip_embed.1} parent=95 // pred_check_branch
          %3263 = sbr.rel (%p3261) target = $region136
        $region135: #{pubmed_clip_embed.1} parent=95 // pred_region
          %s3264 = smul.u32 2, %s49
          %s3266 = ssub.s32 256, 256
          %3267 = vsyncadd %s3257, %s3266
          %s3268 = smul.addr %s3264, 128
          %s3269 = scalar_lea.hbm %s19, %s3268
          %s3270 = sshll.u32 %s3260, 4
          %s3271 = int_to_ptr.vmem [resolvable:$true] %s3270
          %3276 = dma.vmem_to_hbm [thread:$0]  %s3271, 256, %s3269, %s3257, 128, 128, 8
        $region136: #{pubmed_clip_embed.1} parent=95 // pred_fallthru
          _
      $region96: #{pubmed_clip_embed.1} parent=5 // pred_fallthru
        _
      %p3277 = scmp.le.s32.totalorder 2, %s40
      // Predicated region
      $region137: #{pubmed_clip_embed.1} parent=5 // pred_check
        %p3278 = pneg %p3277
      $region138: #{pubmed_clip_embed.1} parent=5 // pred_check_branch
        %3280 = sbr.rel (%p3278) target = $region140
      $region139: #{pubmed_clip_embed.1} parent=5 // pred_region
        %s3281 = ssub.s32 %s40, 2
        // Predicated region
        $region141: #{pubmed_clip_embed.1} parent=139 // pred_check
          %p3282 = pneg %p565
        $region142: #{pubmed_clip_embed.1} parent=139 // pred_check_branch
          %3284 = sbr.rel (%p3282) target = $region144
        $region143: #{pubmed_clip_embed.1} parent=139 // pred_region
          %s3285 = sand.u32 %s550, 1
          %s3286 = scalar_lea.sflag [#allocation6], %s3285
          %s3287 = sand.u32 %s550, 1
          %s3288 = smul.addr %s3287, 16
          %s3289 = scalar_lea.vmem [#allocation16], %s3288
          %3290 = dma.done %s3286, 256
        $region144: #{pubmed_clip_embed.1} parent=139 // pred_fallthru
          _
      $region140: #{pubmed_clip_embed.1} parent=5 // pred_fallthru
        _
    $region6: #{pubmed_clip_embed.1} parent=1 // loop_footer
      %s44 = sadd.s32 1, %s40
    $region7: #{pubmed_clip_embed.1} parent=1 // loop_footer_branch
      %39 = sbr.rel target = $region3
    $region8: #{pubmed_clip_embed.1} parent=1 // loop_exit
      _
    %3291 = vsyncpa [#allocation5], 1
    %s3292 = scalar_lea.sflag [#allocation5], 1
    %3293 = vsyncpa %s3292, 1
    %3294 = vsyncpa [#allocation8], 1
    %s3295 = scalar_lea.sflag [#allocation8], 1
    %3296 = vsyncpa %s3295, 1
    %3297 = vsyncpa [#allocation11], 1
    %s3298 = scalar_lea.sflag [#allocation11], 1
    %3299 = vsyncpa %s3298, 1
    %3300 = vsyncpa [#allocation14], 1
    %s3301 = scalar_lea.sflag [#allocation14], 1
    %3302 = vsyncpa %s3301, 1
    %3303 = vsyncpa [#allocation6], 1
    %s3304 = scalar_lea.sflag [#allocation6], 1
    %3305 = vsyncpa %s3304, 1

</llo_original>
